<compile_context>
chip_gen: v6e
topology: v6e:2x2x1
jax: 0.10.0
libtpu: 0.0.40
codegen_flags: <defaults>
</compile_context>

<pallas_src>
import functools

import jax
import jax.numpy as jnp
from jax.experimental import pallas as pl
from jax.experimental.pallas import tpu as pltpu


# ------------------------- tiled projection (matmul) kernel -------------------------

def _pick_tile(dim, preferred, align):
    """Largest multiple of `align` <= preferred that divides dim; else the full dim."""
    if dim <= preferred:
        return dim
    t = (preferred // align) * align
    while t >= align:
        if dim % t == 0:
            return t
        t -= align
    # TODO(synk): pad + masked tail tiles for dims with no aligned divisor (keeps VMEM bounded).
    return dim


def _matmul_kernel(x_ref, w_ref, o_ref, acc_ref):
    @pl.when(pl.program_id(2) == 0)
    def _():
        acc_ref[...] = jnp.zeros_like(acc_ref)

    x = x_ref[...]
    if x_ref.dtype != jnp.bfloat16:          # static (trace-time) check; normally a no-op
        x = x.astype(jnp.bfloat16)
    acc_ref[...] += jnp.dot(x, w_ref[...], preferred_element_type=jnp.float32)

    @pl.when(pl.program_id(2) == pl.num_programs(2) - 1)
    def _():
        o_ref[...] = acc_ref[...].astype(o_ref.dtype)


def linear(x2d, wt, *, out_dtype=None, tm=256, tn=512, tk=512):
    """y = x2d @ wt.   x2d: (M, K) (ideally bf16);  wt: (K, N) bf16 (pre-transposed weight)."""
    M, K = x2d.shape
    K2, N = wt.shape
    assert K == K2
    out_dtype = x2d.dtype if out_dtype is None else out_dtype
    bm = _pick_tile(M, tm, 8)
    bn = _pick_tile(N, tn, 128)
    bk = _pick_tile(K, tk, 128)
    return pl.pallas_call(
        _matmul_kernel,
        out_shape=jax.ShapeDtypeStruct((M, N), out_dtype),
        grid_spec=pltpu.PrefetchScalarGridSpec(
            num_scalar_prefetch=0,
            grid=(M // bm, N // bn, K // bk),
            in_specs=[pl.BlockSpec((bm, bk), lambda i, j, k: (i, k)),
                      pl.BlockSpec((bk, bn), lambda i, j, k: (k, j))],
            out_specs=pl.BlockSpec((bm, bn), lambda i, j, k: (i, j)),
            scratch_shapes=[pltpu.VMEM((bm, bn), jnp.float32)]),
        compiler_params=pltpu.CompilerParams(
            dimension_semantics=("parallel", "parallel", "arbitrary"),
            vmem_limit_bytes=48 * 1024 * 1024),
    )(x2d, wt)


# ------------------------- fused RoPE + flash attention kernel ------------------------

def _flash_attn_kernel(q_ref, k_ref, v_ref, cos_q_ref, sin_q_ref, cos_k_ref, sin_k_ref,
                       *rest, half, has_mask):
    if has_mask:
        mask_ref, o_ref, q_sc, m_sc, l_sc, acc_sc = rest
    else:
        o_ref, q_sc, m_sc, l_sc, acc_sc = rest

    ki = pl.program_id(3)

    @pl.when(ki == 0)
    def _():
        # RoPE on the q tile (rotate-half form; channels were pre-permuted to [evens|odds]
        # in Wq at init, so the roll runs on the XLU).  Cached in scratch for all KV steps.
        q = q_ref[...].astype(jnp.float32)
        q = q * cos_q_ref[...] + pltpu.roll(q, shift=half, axis=1) * sin_q_ref[...]
        q_sc[...] = q.astype(jnp.bfloat16)
        m_sc[...] = jnp.full_like(m_sc, -jnp.inf)
        l_sc[...] = jnp.zeros_like(l_sc)
        acc_sc[...] = jnp.zeros_like(acc_sc)

    # RoPE on the current KV tile (f32 elementwise, hidden under the MXU score dot).
    k = k_ref[...].astype(jnp.float32)
    k = k * cos_k_ref[...] + pltpu.roll(k, shift=half, axis=1) * sin_k_ref[...]

    # Scores: single full-head-dim MXU dot (scaling already folded into Wq at init).
    s = jax.lax.dot_general(
        q_sc[...], k.astype(jnp.bfloat16),
        (((1,), (1,)), ((), ())),
        preferred_element_type=jnp.float32)
    if has_mask:
        s = s + mask_ref[...]          # additive mask, broadcast over size-1 dims

    # online softmax (f32, matches F.softmax(..., dtype=torch.float32))
    m_prev = m_sc[...]
    m_new = jnp.maximum(m_prev, jnp.max(s, axis=-1, keepdims=True))
    alpha = jnp.exp(m_prev - m_new)
    p = jnp.exp(s - m_new)
    l_sc[...] = alpha * l_sc[...] + jnp.sum(p, axis=-1, keepdims=True)
    acc_sc[...] = alpha * acc_sc[...] + jnp.dot(
        p.astype(jnp.bfloat16), v_ref[...].astype(jnp.bfloat16),
        preferred_element_type=jnp.float32)
    m_sc[...] = m_new

    @pl.when(ki == pl.num_programs(3) - 1)
    def _():
        # normalize the PV accumulator (tq*D elems) instead of the probabilities (tq*tkv)
        o_ref[...] = (acc_sc[...] * pl.reciprocal(l_sc[...], approx=True)).astype(o_ref.dtype)


# ------------------------- one-time weight preparation ("init") ----------------------

def _interleaved_to_halves(w, n_head):
    """Permute output channels of an (E, E) projection weight so the interleaved rotary
    pairs (0,1),(2,3),... become [evens | odds] within each head."""
    E = w.shape[0]
    D = E // n_head
    idx = jnp.arange(E).reshape(n_head, D // 2, 2)
    perm = jnp.concatenate([idx[..., 0], idx[..., 1]], axis=-1).reshape(E)
    return w[perm]


def prepare_params(wq, wk, wv, wo, n_head):
    """Fuse QKV, permute rotary channels, fold the score scaling into Wq, transpose once,
    cast to bf16.  NOTE: the channel permutation must NOT be applied to Wv / Wo."""
    E = wq.shape[0]
    D = E // n_head
    scaling = D ** (-0.5)
    wq_p = _interleaved_to_halves(wq, n_head) * scaling
    wk_p = _interleaved_to_halves(wk, n_head)
    wqkv_t = jnp.concatenate([wq_p, wk_p, wv], axis=0).T.astype(jnp.bfloat16)  # (E, 3E)
    wo_t = wo.T.astype(jnp.bfloat16)                                           # (E, E)
    return wqkv_t, wo_t


# ------------------------- forward pass -----------------------------------------------

def multi_head_attention(x, cos, sin, wqkv_t, wo_t, n_head, attention_mask=None):
    """x: (B, S, E) f32; cos/sin: (S, D/2) = real/imag of freqs_cis."""
    B, S, E = x.shape
    H = n_head
    D = E // H

    # fused Q/K/V projection: one kernel launch, bf16 activations, bf16 qkv in HBM
    x_bf = x.astype(jnp.bfloat16)
    qkv = linear(x_bf.reshape(B * S, E), wqkv_t, out_dtype=jnp.bfloat16).reshape(B, S, 3 * E)

    # full-width rotary tables for the [evens | odds] channel layout (tiny; cache in practice)
    cos_f = jnp.concatenate([cos, cos], axis=-1).astype(jnp.float32)    # (S, D)
    sin_f = jnp.concatenate([-sin, sin], axis=-1).astype(jnp.float32)   # (S, D)

    # flash tiling: q-tile multiple of 8 (256 fills the v6e/v7x MXU), kv-tile multiple of 128
    tq = _pick_tile(S, 256, 8)
    tkv = _pick_tile(S, 512, 128)
    nq, nkv = S // tq, S // tkv

    in_specs = [
        pl.BlockSpec((None, tq, D), lambda b, h, qi, ki: (b, qi, h)),            # q
        pl.BlockSpec((None, tkv, D), lambda b, h, qi, ki: (b, ki, H + h)),       # k
        pl.BlockSpec((None, tkv, D), lambda b, h, qi, ki: (b, ki, 2 * H + h)),   # v
        pl.BlockSpec((tq, D), lambda b, h, qi, ki: (qi, 0)),                     # cos (q rows)
        pl.BlockSpec((tq, D), lambda b, h, qi, ki: (qi, 0)),                     # sin (q rows)
        pl.BlockSpec((tkv, D), lambda b, h, qi, ki: (ki, 0)),                    # cos (k rows)
        pl.BlockSpec((tkv, D), lambda b, h, qi, ki: (ki, 0)),                    # sin (k rows)
    ]
    inputs = [qkv, qkv, qkv, cos_f, sin_f, cos_f, sin_f]

    has_mask = attention_mask is not None
    if has_mask:
        # keep the mask in its original broadcastable shape (no (B,H,S,S) materialization);
        # trace-time specialization of the index_map handles size-1 (broadcast) dims.
        m = attention_mask.astype(jnp.float32)
        m = m.reshape((1,) * (4 - m.ndim) + tuple(m.shape))
        mb, mh, mq, mk = m.shape
        bq = 1 if mq == 1 else tq
        bk = 1 if mk == 1 else tkv

        def mask_map(b, h, qi, ki):
            return (b if mb != 1 else 0,
                    h if mh != 1 else 0,
                    qi if mq != 1 else 0,
                    ki if mk != 1 else 0)

        in_specs.append(pl.BlockSpec((None, None, bq, bk), mask_map))
        inputs.append(m)

    # attention output written directly into lane-dense (B, S, E): no transposes touch HBM
    ctx = pl.pallas_call(
        functools.partial(_flash_attn_kernel, half=D // 2, has_mask=has_mask),
        grid=(B, H, nq, nkv),
        in_specs=in_specs,
        out_specs=pl.BlockSpec((None, tq, D), lambda b, h, qi, ki: (b, qi, h)),
        out_shape=jax.ShapeDtypeStruct((B, S, E), jnp.bfloat16),
        scratch_shapes=[
            pltpu.VMEM((tq, D), jnp.bfloat16),   # rotated q (cached across KV steps)
            pltpu.VMEM((tq, 1), jnp.float32),    # running max
            pltpu.VMEM((tq, 1), jnp.float32),    # running denom
            pltpu.VMEM((tq, D), jnp.float32),    # output accumulator
        ],
        compiler_params=pltpu.CompilerParams(
            dimension_semantics=("parallel", "parallel", "parallel", "arbitrary"),
            vmem_limit_bytes=48 * 1024 * 1024),
    )(*inputs)

    out = linear(ctx.reshape(B * S, E), wo_t, out_dtype=jnp.float32)
    return out.reshape(B, S, E)


# ------------------------- pure-JAX reference (f32, HIGHEST precision) ----------------

def reference_mha(x, cos, sin, wq, wk, wv, wo, n_head, attention_mask=None):
    hp = jax.lax.Precision.HIGHEST
    B, S, E = x.shape
    D = E // n_head
    q = jnp.einsum("bse,oe->bso", x, wq, precision=hp).reshape(B, S, n_head, D)
    k = jnp.einsum("bse,oe->bso", x, wk, precision=hp).reshape(B, S, n_head, D)
    v = jnp.einsum("bse,oe->bso", x, wv, precision=hp).reshape(B, S, n_head, D)
    freqs = cos + 1j * sin  # (S, D/2)

    def rope(t):
        tc = t.reshape(B, S, n_head, D // 2, 2)
        tcx = tc[..., 0] + 1j * tc[..., 1]
        out = tcx * freqs[None, :, None, :]
        return jnp.stack([out.real, out.imag], axis=-1).reshape(B, S, n_head, D)

    q, k = rope(q), rope(k)
    q, k, v = (t.transpose(0, 2, 1, 3) for t in (q, k, v))
    scores = jnp.einsum("bhqd,bhkd->bhqk", q, k, precision=hp) * (D ** -0.5)
    if attention_mask is not None:
        scores = scores + attention_mask
    attn = jax.nn.softmax(scores.astype(jnp.float32), axis=-1).astype(q.dtype)
    out = jnp.einsum("bhqk,bhkd->bhqd", attn, v, precision=hp)
    out = out.transpose(0, 2, 1, 3).reshape(B, S, E)
    return jnp.einsum("bse,oe->bso", out, wo, precision=hp)


# ------------------------- main --------------------------------------------------------

if __name__ == "__main__":
    # small config: n_embd=512, n_head=4 -> head_dim=128 (lane-aligned); batch=2, seq=16
    B, S, E, H = 2, 16, 512, 4
    D = E // H

    key = jax.random.PRNGKey(0)
    kx, kq, kk, kv, ko = jax.random.split(key, 5)
    x = jax.random.normal(kx, (B, S, E), dtype=jnp.float32)
    wq = 0.02 * jax.random.normal(kq, (E, E), dtype=jnp.float32)
    wk = 0.02 * jax.random.normal(kk, (E, E), dtype=jnp.float32)
    wv = 0.02 * jax.random.normal(kv, (E, E), dtype=jnp.float32)
    wo = 0.02 * jax.random.normal(ko, (E, E), dtype=jnp.float32)

    # rotary tables (LLaMA-style freqs_cis = cos + i*sin), shape (S, D/2)
    theta = 10000.0
    inv_freq = 1.0 / (theta ** (jnp.arange(0, D, 2, dtype=jnp.float32) / D))
    angles = jnp.outer(jnp.arange(S, dtype=jnp.float32), inv_freq)
    cos, sin = jnp.cos(angles), jnp.sin(angles)

    wqkv_t, wo_t = prepare_params(wq, wk, wv, wo, H)   # one-time "init" weight prep
    mha = jax.jit(multi_head_attention, static_argnames=("n_head",))

    # additive causal mask in torch's broadcastable (1, 1, S, S) convention
    causal = jnp.where(jnp.tril(jnp.ones((S, S), dtype=bool)),
                       0.0, -1e9).astype(jnp.float32)[None, None]

    for mask in (None, causal):
        out = jax.block_until_ready(
            mha(x, cos, sin, wqkv_t, wo_t, n_head=H, attention_mask=mask))
        ref = jax.block_until_ready(
            reference_mha(x, cos, sin, wq, wk, wv, wo, H, attention_mask=mask))
        assert out.shape == (B, S, E), out.shape
        max_err = float(jnp.max(jnp.abs(out - ref)))
        assert jnp.allclose(out, ref, atol=1e-2, rtol=2e-2), f"max abs err = {max_err}"

    print("KERNEL_OK")
</pallas_src>

<mosaic_0001>
module attributes {stable_mosaic.version = 11 : i64} {
  func.func @_matmul_kernel(%arg0: i32, %arg1: i32, %arg2: i32, %arg3: memref<32x512xbf16, #tpu.memory_space<vmem>>, %arg4: memref<512x512xbf16, #tpu.memory_space<vmem>>, %arg5: memref<32x512xbf16, #tpu.memory_space<vmem>>, %arg6: memref<32x512xf32, #tpu.memory_space<vmem>>) attributes {dimension_semantics = [#tpu.dimension_semantics<parallel>, #tpu.dimension_semantics<parallel>, #tpu.dimension_semantics<arbitrary>], iteration_bounds = array<i64: 1, 3, 1>, scalar_prefetch = 0 : i64, scratch_operands = 1 : i64, tpu.core_type = #tpu.core_type<tc>, window_params = [{transform_indices = @transform_0, window_bounds = array<i64: 32, 512>}, {transform_indices = @transform_1, window_bounds = array<i64: 512, 512>}, {transform_indices = @transform_2, window_bounds = array<i64: 32, 512>}]} {
    %c0_i32 = arith.constant 0 : i32
    %0 = arith.cmpi eq, %arg2, %c0_i32 : i32
    %1 = arith.extui %0 : i1 to i32
    %c0_i32_0 = arith.constant 0 : i32
    %2 = arith.cmpi ne, %1, %c0_i32_0 : i32
    scf.if %2 {
      %cst_10 = arith.constant 0.000000e+00 : f32
      %12 = vector.broadcast %cst_10 : f32 to vector<32x512xf32>
      %c0_11 = arith.constant 0 : index
      %c0_12 = arith.constant 0 : index
      %13 = vector.load %arg6[%c0_11, %c0_12] : memref<32x512xf32, #tpu.memory_space<vmem>>, vector<32x512xf32>
      tpu.vector_store %arg6[%c0_11, %c0_12], %12 {strides = array<i32>} : memref<32x512xf32, #tpu.memory_space<vmem>>, vector<32x512xf32>,
    } else {
    }
    %c0 = arith.constant 0 : index
    %c0_1 = arith.constant 0 : index
    %3 = vector.load %arg3[%c0, %c0_1] : memref<32x512xbf16, #tpu.memory_space<vmem>>, vector<32x512xbf16>
    %c0_2 = arith.constant 0 : index
    %c0_3 = arith.constant 0 : index
    %4 = vector.load %arg6[%c0_2, %c0_3] : memref<32x512xf32, #tpu.memory_space<vmem>>, vector<32x512xf32>
    %c0_4 = arith.constant 0 : index
    %c0_5 = arith.constant 0 : index
    %5 = vector.load %arg4[%c0_4, %c0_5] : memref<512x512xbf16, #tpu.memory_space<vmem>>, vector<512x512xbf16>
    %cst = arith.constant dense<0.000000e+00> : vector<32x512xf32>
    %6 = tpu.matmul %3, %5, %cst {dimension_numbers = #tpu.dot_dimension_numbers<[1], [0], [0], [1], [0, 0, 1, 1], [], []>} : vector<32x512xbf16>, vector<512x512xbf16>, vector<32x512xf32> -> vector<32x512xf32>
    %7 = arith.addf %4, %6 : vector<32x512xf32>
    %c0_6 = arith.constant 0 : index
    %c0_7 = arith.constant 0 : index
    %8 = vector.load %arg6[%c0_6, %c0_7] : memref<32x512xf32, #tpu.memory_space<vmem>>, vector<32x512xf32>
    tpu.vector_store %arg6[%c0_6, %c0_7], %7 {strides = array<i32>} : memref<32x512xf32, #tpu.memory_space<vmem>>, vector<32x512xf32>,
    %c0_i32_8 = arith.constant 0 : i32
    %9 = arith.cmpi eq, %arg2, %c0_i32_8 : i32
    %10 = arith.extui %9 : i1 to i32
    %c0_i32_9 = arith.constant 0 : i32
    %11 = arith.cmpi ne, %10, %c0_i32_9 : i32
    scf.if %11 {
      %c0_10 = arith.constant 0 : index
      %c0_11 = arith.constant 0 : index
      %12 = vector.load %arg6[%c0_10, %c0_11] : memref<32x512xf32, #tpu.memory_space<vmem>>, vector<32x512xf32>
      %13 = arith.truncf %12 : vector<32x512xf32> to vector<32x512xbf16>
      %c0_12 = arith.constant 0 : index
      %c0_13 = arith.constant 0 : index
      %14 = vector.load %arg5[%c0_12, %c0_13] : memref<32x512xbf16, #tpu.memory_space<vmem>>, vector<32x512xbf16>
      tpu.vector_store %arg5[%c0_12, %c0_13], %13 {strides = array<i32>} : memref<32x512xbf16, #tpu.memory_space<vmem>>, vector<32x512xbf16>,
    } else {
    }
    return
  }
  func.func @transform_0(%arg0: i32, %arg1: i32, %arg2: i32) -> (i32, i32) {
    %c0_i32 = arith.constant 0 : i32
    return %arg0, %arg2 : i32, i32
  }
  func.func @transform_1(%arg0: i32, %arg1: i32, %arg2: i32) -> (i32, i32) {
    %c0_i32 = arith.constant 0 : i32
    return %arg2, %arg1 : i32, i32
  }
  func.func @transform_2(%arg0: i32, %arg1: i32, %arg2: i32) -> (i32, i32) {
    %c0_i32 = arith.constant 0 : i32
    return %arg0, %arg1 : i32, i32
  }
}

module attributes {stable_mosaic.version = 11 : i64} {
  func.func @_flash_attn_kernel(%arg0: i32, %arg1: i32, %arg2: i32, %arg3: i32, %arg4: memref<1x16x128xbf16, #tpu.memory_space<vmem>>, %arg5: memref<1x16x128xbf16, #tpu.memory_space<vmem>>, %arg6: memref<1x16x128xbf16, #tpu.memory_space<vmem>>, %arg7: memref<16x128xf32, #tpu.memory_space<vmem>>, %arg8: memref<16x128xf32, #tpu.memory_space<vmem>>, %arg9: memref<16x128xf32, #tpu.memory_space<vmem>>, %arg10: memref<16x128xf32, #tpu.memory_space<vmem>>, %arg11: memref<1x16x128xbf16, #tpu.memory_space<vmem>>, %arg12: memref<16x128xbf16, #tpu.memory_space<vmem>>, %arg13: memref<16x1xf32, #tpu.memory_space<vmem>>, %arg14: memref<16x1xf32, #tpu.memory_space<vmem>>, %arg15: memref<16x128xf32, #tpu.memory_space<vmem>>) attributes {dimension_semantics = [#tpu.dimension_semantics<parallel>, #tpu.dimension_semantics<parallel>, #tpu.dimension_semantics<parallel>, #tpu.dimension_semantics<arbitrary>], iteration_bounds = array<i64: 2, 4, 1, 1>, scalar_prefetch = 0 : i64, scratch_operands = 4 : i64, tpu.core_type = #tpu.core_type<tc>, window_params = [{transform_indices = @transform_0, window_bounds = array<i64: 1, 16, 128>}, {transform_indices = @transform_1, window_bounds = array<i64: 1, 16, 128>}, {transform_indices = @transform_2, window_bounds = array<i64: 1, 16, 128>}, {transform_indices = @transform_3, window_bounds = array<i64: 16, 128>}, {transform_indices = @transform_4, window_bounds = array<i64: 16, 128>}, {transform_indices = @transform_5, window_bounds = array<i64: 16, 128>}, {transform_indices = @transform_6, window_bounds = array<i64: 16, 128>}, {transform_indices = @transform_7, window_bounds = array<i64: 1, 16, 128>}]} {
    %c0_i32 = arith.constant 0 : i32
    %0 = arith.cmpi eq, %arg3, %c0_i32 : i32
    %1 = arith.extui %0 : i1 to i32
    %c0_i32_0 = arith.constant 0 : i32
    %2 = arith.cmpi ne, %1, %c0_i32_0 : i32
    scf.if %2 {
      %c0_29 = arith.constant 0 : index
      %c0_30 = arith.constant 0 : index
      %c0_31 = arith.constant 0 : index
      %43 = vector.load %arg4[%c0_29, %c0_30, %c0_31] : memref<1x16x128xbf16, #tpu.memory_space<vmem>>, vector<1x16x128xbf16>
      %44 = vector.shape_cast %43 : vector<1x16x128xbf16> to vector<16x128xbf16>
      %45 = arith.extf %44 : vector<16x128xbf16> to vector<16x128xf32>
      %c0_32 = arith.constant 0 : index
      %c0_33 = arith.constant 0 : index
      %46 = vector.load %arg7[%c0_32, %c0_33] : memref<16x128xf32, #tpu.memory_space<vmem>>, vector<16x128xf32>
      %47 = arith.mulf %45, %46 : vector<16x128xf32>
      %c64_i32_34 = arith.constant 64 : i32
      %48 = tpu.dynamic_rotate %45 by %c64_i32_34 dim 1 : vector<16x128xf32>, i32 -> vector<16x128xf32>
      %c0_35 = arith.constant 0 : index
      %c0_36 = arith.constant 0 : index
      %49 = vector.load %arg8[%c0_35, %c0_36] : memref<16x128xf32, #tpu.memory_space<vmem>>, vector<16x128xf32>
      %50 = arith.mulf %48, %49 : vector<16x128xf32>
      %51 = arith.addf %47, %50 : vector<16x128xf32>
      %52 = arith.truncf %51 : vector<16x128xf32> to vector<16x128xbf16>
      %c0_37 = arith.constant 0 : index
      %c0_38 = arith.constant 0 : index
      %53 = vector.load %arg12[%c0_37, %c0_38] : memref<16x128xbf16, #tpu.memory_space<vmem>>, vector<16x128xbf16>
      tpu.vector_store %arg12[%c0_37, %c0_38], %52 {strides = array<i32>} : memref<16x128xbf16, #tpu.memory_space<vmem>>, vector<16x128xbf16>,
      %cst_39 = arith.constant 0xFF800000 : f32
      %54 = vector.broadcast %cst_39 : f32 to vector<16x1xf32>
      %c0_40 = arith.constant 0 : index
      %c0_41 = arith.constant 0 : index
      %55 = vector.load %arg13[%c0_40, %c0_41] : memref<16x1xf32, #tpu.memory_space<vmem>>, vector<16x1xf32>
      tpu.vector_store %arg13[%c0_40, %c0_41], %54 {strides = array<i32>} : memref<16x1xf32, #tpu.memory_space<vmem>>, vector<16x1xf32>,
      %cst_42 = arith.constant 0.000000e+00 : f32
      %56 = vector.broadcast %cst_42 : f32 to vector<16x1xf32>
      %c0_43 = arith.constant 0 : index
      %c0_44 = arith.constant 0 : index
      %57 = vector.load %arg14[%c0_43, %c0_44] : memref<16x1xf32, #tpu.memory_space<vmem>>, vector<16x1xf32>
      tpu.vector_store %arg14[%c0_43, %c0_44], %56 {strides = array<i32>} : memref<16x1xf32, #tpu.memory_space<vmem>>, vector<16x1xf32>,
      %cst_45 = arith.constant 0.000000e+00 : f32
      %58 = vector.broadcast %cst_45 : f32 to vector<16x128xf32>
      %c0_46 = arith.constant 0 : index
      %c0_47 = arith.constant 0 : index
      %59 = vector.load %arg15[%c0_46, %c0_47] : memref<16x128xf32, #tpu.memory_space<vmem>>, vector<16x128xf32>
      tpu.vector_store %arg15[%c0_46, %c0_47], %58 {strides = array<i32>} : memref<16x128xf32, #tpu.memory_space<vmem>>, vector<16x128xf32>,
    } else {
    }
    %c0 = arith.constant 0 : index
    %c0_1 = arith.constant 0 : index
    %c0_2 = arith.constant 0 : index
    %3 = vector.load %arg5[%c0, %c0_1, %c0_2] : memref<1x16x128xbf16, #tpu.memory_space<vmem>>, vector<1x16x128xbf16>
    %4 = vector.shape_cast %3 : vector<1x16x128xbf16> to vector<16x128xbf16>
    %5 = arith.extf %4 : vector<16x128xbf16> to vector<16x128xf32>
    %c0_3 = arith.constant 0 : index
    %c0_4 = arith.constant 0 : index
    %6 = vector.load %arg9[%c0_3, %c0_4] : memref<16x128xf32, #tpu.memory_space<vmem>>, vector<16x128xf32>
    %7 = arith.mulf %5, %6 : vector<16x128xf32>
    %c64_i32 = arith.constant 64 : i32
    %8 = tpu.dynamic_rotate %5 by %c64_i32 dim 1 : vector<16x128xf32>, i32 -> vector<16x128xf32>
    %c0_5 = arith.constant 0 : index
    %c0_6 = arith.constant 0 : index
    %9 = vector.load %arg10[%c0_5, %c0_6] : memref<16x128xf32, #tpu.memory_space<vmem>>, vector<16x128xf32>
    %10 = arith.mulf %8, %9 : vector<16x128xf32>
    %11 = arith.addf %7, %10 : vector<16x128xf32>
    %c0_7 = arith.constant 0 : index
    %c0_8 = arith.constant 0 : index
    %12 = vector.load %arg12[%c0_7, %c0_8] : memref<16x128xbf16, #tpu.memory_space<vmem>>, vector<16x128xbf16>
    %13 = arith.truncf %11 : vector<16x128xf32> to vector<16x128xbf16>
    %cst = arith.constant dense<0.000000e+00> : vector<16x16xf32>
    %14 = tpu.matmul %12, %13, %cst {dimension_numbers = #tpu.dot_dimension_numbers<[1], [1], [0], [0], [0, 0, 1, 0], [], []>} : vector<16x128xbf16>, vector<16x128xbf16>, vector<16x16xf32> -> vector<16x16xf32>
    %c0_9 = arith.constant 0 : index
    %c0_10 = arith.constant 0 : index
    %15 = vector.load %arg13[%c0_9, %c0_10] : memref<16x1xf32, #tpu.memory_space<vmem>>, vector<16x1xf32>
    %cst_11 = arith.constant dense<0xFF800000> : vector<16xf32>
    %16 = vector.multi_reduction <maximumf>, %14, %cst_11 [1] : vector<16x16xf32> to vector<16xf32>
    %17 = vector.shape_cast %16 : vector<16xf32> to vector<16x1xf32>
    %18 = arith.maximumf %15, %17 : vector<16x1xf32>
    %19 = arith.subf %15, %18 : vector<16x1xf32>
    %20 = math.exp %19 : vector<16x1xf32>
    %21 = vector.broadcast %18 : vector<16x1xf32> to vector<16x16xf32>
    %22 = arith.subf %14, %21 : vector<16x16xf32>
    %23 = math.exp %22 : vector<16x16xf32>
    %c0_12 = arith.constant 0 : index
    %c0_13 = arith.constant 0 : index
    %24 = vector.load %arg14[%c0_12, %c0_13] : memref<16x1xf32, #tpu.memory_space<vmem>>, vector<16x1xf32>
    %25 = arith.mulf %20, %24 : vector<16x1xf32>
    %cst_14 = arith.constant dense<0.000000e+00> : vector<16xf32>
    %26 = vector.multi_reduction <add>, %23, %cst_14 [1] : vector<16x16xf32> to vector<16xf32>
    %27 = vector.shape_cast %26 : vector<16xf32> to vector<16x1xf32>
    %28 = arith.addf %25, %27 : vector<16x1xf32>
    %c0_15 = arith.constant 0 : index
    %c0_16 = arith.constant 0 : index
    %29 = vector.load %arg14[%c0_15, %c0_16] : memref<16x1xf32, #tpu.memory_space<vmem>>, vector<16x1xf32>
    tpu.vector_store %arg14[%c0_15, %c0_16], %28 {strides = array<i32>} : memref<16x1xf32, #tpu.memory_space<vmem>>, vector<16x1xf32>,
    %c0_17 = arith.constant 0 : index
    %c0_18 = arith.constant 0 : index
    %30 = vector.load %arg15[%c0_17, %c0_18] : memref<16x128xf32, #tpu.memory_space<vmem>>, vector<16x128xf32>
    %31 = vector.broadcast %20 : vector<16x1xf32> to vector<16x128xf32>
    %32 = arith.mulf %31, %30 : vector<16x128xf32>
    %33 = arith.truncf %23 : vector<16x16xf32> to vector<16x16xbf16>
    %c0_19 = arith.constant 0 : index
    %c0_20 = arith.constant 0 : index
    %c0_21 = arith.constant 0 : index
    %34 = vector.load %arg6[%c0_19, %c0_20, %c0_21] : memref<1x16x128xbf16, #tpu.memory_space<vmem>>, vector<1x16x128xbf16>
    %35 = vector.shape_cast %34 : vector<1x16x128xbf16> to vector<16x128xbf16>
    %cst_22 = arith.constant dense<0.000000e+00> : vector<16x128xf32>
    %36 = tpu.matmul %33, %35, %cst_22 {dimension_numbers = #tpu.dot_dimension_numbers<[1], [0], [0], [1], [0, 0, 1, 1], [], []>} : vector<16x16xbf16>, vector<16x128xbf16>, vector<16x128xf32> -> vector<16x128xf32>
    %37 = arith.addf %32, %36 : vector<16x128xf32>
    %c0_23 = arith.constant 0 : index
    %c0_24 = arith.constant 0 : index
    %38 = vector.load %arg15[%c0_23, %c0_24] : memref<16x128xf32, #tpu.memory_space<vmem>>, vector<16x128xf32>
    tpu.vector_store %arg15[%c0_23, %c0_24], %37 {strides = array<i32>} : memref<16x128xf32, #tpu.memory_space<vmem>>, vector<16x128xf32>,
    %c0_25 = arith.constant 0 : index
    %c0_26 = arith.constant 0 : index
    %39 = vector.load %arg13[%c0_25, %c0_26] : memref<16x1xf32, #tpu.memory_space<vmem>>, vector<16x1xf32>
    tpu.vector_store %arg13[%c0_25, %c0_26], %18 {strides = array<i32>} : memref<16x1xf32, #tpu.memory_space<vmem>>, vector<16x1xf32>,
    %c0_i32_27 = arith.constant 0 : i32
    %40 = arith.cmpi eq, %arg3, %c0_i32_27 : i32
    %41 = arith.extui %40 : i1 to i32
    %c0_i32_28 = arith.constant 0 : i32
    %42 = arith.cmpi ne, %41, %c0_i32_28 : i32
    scf.if %42 {
      %c0_29 = arith.constant 0 : index
      %c0_30 = arith.constant 0 : index
      %43 = vector.load %arg15[%c0_29, %c0_30] : memref<16x128xf32, #tpu.memory_space<vmem>>, vector<16x128xf32>
      %c0_31 = arith.constant 0 : index
      %c0_32 = arith.constant 0 : index
      %44 = vector.load %arg14[%c0_31, %c0_32] : memref<16x1xf32, #tpu.memory_space<vmem>>, vector<16x1xf32>
      %45 = tpu.reciprocal %44 {approx = true} : vector<16x1xf32> -> vector<16x1xf32>
      %46 = vector.broadcast %45 : vector<16x1xf32> to vector<16x128xf32>
      %47 = arith.mulf %43, %46 : vector<16x128xf32>
      %48 = arith.truncf %47 : vector<16x128xf32> to vector<16x128xbf16>
      %c0_33 = arith.constant 0 : index
      %c0_34 = arith.constant 0 : index
      %c0_35 = arith.constant 0 : index
      %49 = vector.load %arg11[%c0_33, %c0_34, %c0_35] : memref<1x16x128xbf16, #tpu.memory_space<vmem>>, vector<1x16x128xbf16>
      %50 = vector.shape_cast %49 : vector<1x16x128xbf16> to vector<16x128xbf16>
      %51 = vector.shape_cast %48 : vector<16x128xbf16> to vector<1x16x128xbf16>
      tpu.vector_store %arg11[%c0_33, %c0_34, %c0_35], %51 {strides = array<i32>} : memref<1x16x128xbf16, #tpu.memory_space<vmem>>, vector<1x16x128xbf16>,
    } else {
    }
    return
  }
  func.func @transform_0(%arg0: i32, %arg1: i32, %arg2: i32, %arg3: i32) -> (i32, i32, i32) {
    %c0_i32 = arith.constant 0 : i32
    return %arg0, %arg2, %arg1 : i32, i32, i32
  }
  func.func @transform_1(%arg0: i32, %arg1: i32, %arg2: i32, %arg3: i32) -> (i32, i32, i32) {
    %c4_i32 = arith.constant 4 : i32
    %0 = arith.addi %c4_i32, %arg1 : i32
    %c0_i32 = arith.constant 0 : i32
    return %arg0, %arg3, %0 : i32, i32, i32
  }
  func.func @transform_2(%arg0: i32, %arg1: i32, %arg2: i32, %arg3: i32) -> (i32, i32, i32) {
    %c8_i32 = arith.constant 8 : i32
    %0 = arith.addi %c8_i32, %arg1 : i32
    %c0_i32 = arith.constant 0 : i32
    return %arg0, %arg3, %0 : i32, i32, i32
  }
  func.func @transform_3(%arg0: i32, %arg1: i32, %arg2: i32, %arg3: i32) -> (i32, i32) {
    %c0_i32 = arith.constant 0 : i32
    %c0_i32_0 = arith.constant 0 : i32
    return %arg2, %c0_i32 : i32, i32
  }
  func.func @transform_4(%arg0: i32, %arg1: i32, %arg2: i32, %arg3: i32) -> (i32, i32) {
    %c0_i32 = arith.constant 0 : i32
    %c0_i32_0 = arith.constant 0 : i32
    return %arg2, %c0_i32 : i32, i32
  }
  func.func @transform_5(%arg0: i32, %arg1: i32, %arg2: i32, %arg3: i32) -> (i32, i32) {
    %c0_i32 = arith.constant 0 : i32
    %c0_i32_0 = arith.constant 0 : i32
    return %arg3, %c0_i32 : i32, i32
  }
  func.func @transform_6(%arg0: i32, %arg1: i32, %arg2: i32, %arg3: i32) -> (i32, i32) {
    %c0_i32 = arith.constant 0 : i32
    %c0_i32_0 = arith.constant 0 : i32
    return %arg3, %c0_i32 : i32, i32
  }
  func.func @transform_7(%arg0: i32, %arg1: i32, %arg2: i32, %arg3: i32) -> (i32, i32, i32) {
    %c0_i32 = arith.constant 0 : i32
    return %arg0, %arg2, %arg1 : i32, i32, i32
  }
}

module attributes {stable_mosaic.version = 11 : i64} {
  func.func @_matmul_kernel(%arg0: i32, %arg1: i32, %arg2: i32, %arg3: memref<32x512xbf16, #tpu.memory_space<vmem>>, %arg4: memref<512x512xbf16, #tpu.memory_space<vmem>>, %arg5: memref<32x512xf32, #tpu.memory_space<vmem>>, %arg6: memref<32x512xf32, #tpu.memory_space<vmem>>) attributes {dimension_semantics = [#tpu.dimension_semantics<parallel>, #tpu.dimension_semantics<parallel>, #tpu.dimension_semantics<arbitrary>], iteration_bounds = array<i64: 1, 1, 1>, scalar_prefetch = 0 : i64, scratch_operands = 1 : i64, tpu.core_type = #tpu.core_type<tc>, window_params = [{transform_indices = @transform_0, window_bounds = array<i64: 32, 512>}, {transform_indices = @transform_1, window_bounds = array<i64: 512, 512>}, {transform_indices = @transform_2, window_bounds = array<i64: 32, 512>}]} {
    %c0_i32 = arith.constant 0 : i32
    %0 = arith.cmpi eq, %arg2, %c0_i32 : i32
    %1 = arith.extui %0 : i1 to i32
    %c0_i32_0 = arith.constant 0 : i32
    %2 = arith.cmpi ne, %1, %c0_i32_0 : i32
    scf.if %2 {
      %cst_10 = arith.constant 0.000000e+00 : f32
      %12 = vector.broadcast %cst_10 : f32 to vector<32x512xf32>
      %c0_11 = arith.constant 0 : index
      %c0_12 = arith.constant 0 : index
      %13 = vector.load %arg6[%c0_11, %c0_12] : memref<32x512xf32, #tpu.memory_space<vmem>>, vector<32x512xf32>
      tpu.vector_store %arg6[%c0_11, %c0_12], %12 {strides = array<i32>} : memref<32x512xf32, #tpu.memory_space<vmem>>, vector<32x512xf32>,
    } else {
    }
    %c0 = arith.constant 0 : index
    %c0_1 = arith.constant 0 : index
    %3 = vector.load %arg3[%c0, %c0_1] : memref<32x512xbf16, #tpu.memory_space<vmem>>, vector<32x512xbf16>
    %c0_2 = arith.constant 0 : index
    %c0_3 = arith.constant 0 : index
    %4 = vector.load %arg6[%c0_2, %c0_3] : memref<32x512xf32, #tpu.memory_space<vmem>>, vector<32x512xf32>
    %c0_4 = arith.constant 0 : index
    %c0_5 = arith.constant 0 : index
    %5 = vector.load %arg4[%c0_4, %c0_5] : memref<512x512xbf16, #tpu.memory_space<vmem>>, vector<512x512xbf16>
    %cst = arith.constant dense<0.000000e+00> : vector<32x512xf32>
    %6 = tpu.matmul %3, %5, %cst {dimension_numbers = #tpu.dot_dimension_numbers<[1], [0], [0], [1], [0, 0, 1, 1], [], []>} : vector<32x512xbf16>, vector<512x512xbf16>, vector<32x512xf32> -> vector<32x512xf32>
    %7 = arith.addf %4, %6 : vector<32x512xf32>
    %c0_6 = arith.constant 0 : index
    %c0_7 = arith.constant 0 : index
    %8 = vector.load %arg6[%c0_6, %c0_7] : memref<32x512xf32, #tpu.memory_space<vmem>>, vector<32x512xf32>
    tpu.vector_store %arg6[%c0_6, %c0_7], %7 {strides = array<i32>} : memref<32x512xf32, #tpu.memory_space<vmem>>, vector<32x512xf32>,
    %c0_i32_8 = arith.constant 0 : i32
    %9 = arith.cmpi eq, %arg2, %c0_i32_8 : i32
    %10 = arith.extui %9 : i1 to i32
    %c0_i32_9 = arith.constant 0 : i32
    %11 = arith.cmpi ne, %10, %c0_i32_9 : i32
    scf.if %11 {
      %c0_10 = arith.constant 0 : index
      %c0_11 = arith.constant 0 : index
      %12 = vector.load %arg6[%c0_10, %c0_11] : memref<32x512xf32, #tpu.memory_space<vmem>>, vector<32x512xf32>
      %c0_12 = arith.constant 0 : index
      %c0_13 = arith.constant 0 : index
      %13 = vector.load %arg5[%c0_12, %c0_13] : memref<32x512xf32, #tpu.memory_space<vmem>>, vector<32x512xf32>
      tpu.vector_store %arg5[%c0_12, %c0_13], %12 {strides = array<i32>} : memref<32x512xf32, #tpu.memory_space<vmem>>, vector<32x512xf32>,
    } else {
    }
    return
  }
  func.func @transform_0(%arg0: i32, %arg1: i32, %arg2: i32) -> (i32, i32) {
    %c0_i32 = arith.constant 0 : i32
    return %arg0, %arg2 : i32, i32
  }
  func.func @transform_1(%arg0: i32, %arg1: i32, %arg2: i32) -> (i32, i32) {
    %c0_i32 = arith.constant 0 : i32
    return %arg2, %arg1 : i32, i32
  }
  func.func @transform_2(%arg0: i32, %arg1: i32, %arg2: i32) -> (i32, i32) {
    %c0_i32 = arith.constant 0 : i32
    return %arg0, %arg1 : i32, i32
  }
}

</mosaic_0001>

<llo_original>
// kernel: neg.1
$region0: #{neg.1}
  #allocation2 [shape = 's32[1]{0}', space=sflag, size = 0x4, scoped, tag = 'scoped memory for neg.1']
  %s0 = inlined_call_operand.hbm [shape: f32[16,64], index: 0, kind: input, shape index: {}]
  %s1 = inlined_call_operand.vmem [shape: f32[16,64], index: 1, kind: output, shape index: {}]
  $region1: #{neg.1} parent=0
    #allocation0 [shape = 'u8[8192]{0}', space=vmem, size = 0x2000, scoped, tag = 'operand span for operand 0']
    #allocation1 [shape = 's32[1]{0}', space=sflag, size = 0x4, scoped, tag = 'scoped memory for neg.1']
    %2 = vsyncpa [#allocation1], 0
    %s4 = ssub.s32 256, 256
    %5 = vsyncadd [#allocation1], %s4
    %s6 = sshll.u32 [#allocation0], 4
    %s7 = int_to_ptr.vmem [resolvable:$true] %s6
    %12 = dma.hbm_to_vmem [thread:$0]  %s0, 256, %s7, [#allocation1], 128, 128, 8
    %13 = dma.done [#allocation1], 256
    %v14 = vld [vmem:[#allocation0] sm:$0xff]
    %15 = xla_tuple %v14
    %16 = xla_tuple %15
    %v17 = vxor.u32 %v14, 2147483648
    %18 = xla_tuple %v17
    %19 = vst [vmem:[%s1] sm:$0xff] %v17
    %s20 = scalar_lea.vmem [#allocation0], 8
    %v21 = vld [vmem:[%s20] sm:$0xff]
    %22 = xla_tuple %v21
    %23 = xla_tuple %22
    %v24 = vxor.u32 %v21, 2147483648
    %25 = xla_tuple %v24
    %s26 = scalar_lea.vmem %s1, 8
    %27 = vst [vmem:[%s26] sm:$0xff] %v24
    %28 = vsyncpa [#allocation1], 1

// kernel: multi_head_attention.4
$region0: #{multi_head_attention.4}
  #allocation0 [shape = 'u32[]', space=smem, size = 0x4, offset = 0x4, fixed_abs, tag = 'smem constant byte address 0x4 - core index']
  #allocation1 [shape = 'u32[144,128]{1,0:T(1,128)}', space=vmem, size = 0x12000, scoped, tag = 'internal scratch']
  #allocation2 [shape = 'bf16[16,128]{1,0:T(8,128)(2,1)}', space=vmem, size = 0x1000, scoped, tag = 'scratch operand']
  #allocation3 [shape = 'f32[16,1]{1,0:T(8,128)}', space=vmem, size = 0x2000, scoped, tag = 'scratch operand']
  #allocation4 [shape = 'f32[16,1]{1,0:T(8,128)}', space=vmem, size = 0x2000, scoped, tag = 'scratch operand']
  #allocation5 [shape = 'f32[16,128]{1,0:T(8,128)}', space=vmem, size = 0x2000, scoped, tag = 'scratch operand']
  %s0 = inlined_call_operand.vmem [shape: bf16[2,16,1536], index: 0, kind: input, shape index: {}, may-alias: {0,1,2}]
  %s1 = inlined_call_operand.vmem [shape: bf16[2,16,1536], index: 1, kind: input, shape index: {}, may-alias: {0,1,2}]
  %s2 = inlined_call_operand.vmem [shape: bf16[2,16,1536], index: 2, kind: input, shape index: {}, may-alias: {0,1,2}]
  %s3 = inlined_call_operand.vmem [shape: f32[16,128], index: 3, kind: input, shape index: {}, may-alias: {3,5}]
  %s4 = inlined_call_operand.vmem [shape: f32[16,128], index: 4, kind: input, shape index: {}, may-alias: {4,6}]
  %s5 = inlined_call_operand.vmem [shape: f32[16,128], index: 5, kind: input, shape index: {}, may-alias: {3,5}]
  %s6 = inlined_call_operand.vmem [shape: f32[16,128], index: 6, kind: input, shape index: {}, may-alias: {4,6}]
  %s7 = inlined_call_operand.vmem [shape: bf16[2,16,512], index: 7, kind: output, shape index: {}]
  %s8 = sld [smem:[#allocation0]]
  $region229: #{multi_head_attention.4} parent=0
    _
  %s10 = ssub.s32 1, %s8
  %s11 = scalar_select 0, %s10, %s8
  $region1: #{multi_head_attention.4} parent=0
    #allocation6 [shape = 'u8[8192]{0}', space=vmem, size = 0x2000, scoped, tag = 'input window, operand 0']
    #allocation7 [shape = 'u8[8192]{0}', space=vmem, size = 0x2000, scoped, tag = 'input window, operand 1']
    #allocation8 [shape = 'u8[8192]{0}', space=vmem, size = 0x2000, scoped, tag = 'input window, operand 2']
    #allocation9 [shape = 'u8[8192]{0}', space=vmem, size = 0x2000, scoped, tag = 'output window, operand 0']
    loop: start=0, step=1, limit=10
    $region2: #{multi_head_attention.4} parent=1 // loop_pre_header
      _
    $region3: #{multi_head_attention.4} parent=1 // loop_header
      %s13 = sphi 0, %s17
      %p14 = scmp.ge.s32.totalorder %s13, 10
      %s20 = sphi 0, %s46
      %s21 = sphi 0, %s42
      %s22 = sphi 0, %s38
      %s23 = sphi 0, %s34
      %s24 = sphi 0, %s20
      %s25 = sphi 0, %s21
      %s26 = sphi 0, %s22
      %s27 = sphi 0, %s23
      %s28 = sphi 0, %s24
      %s29 = sphi 0, %s25
      %s30 = sphi 0, %s26
      %s31 = sphi 0, %s27
      %s53 = sphi 0, %s55
      %s56 = sphi 0, %s53
      %s57 = sphi 0, %s56
      %s73 = sphi 0, %s57
      %s85 = sphi 0, %s87
      %s88 = sphi 0, %s85
      %s89 = sphi 0, %s88
      %s105 = sphi 0, %s89
      %s117 = sphi 0, %s119
      %s120 = sphi 0, %s117
      %s121 = sphi 0, %s120
      %s137 = sphi 0, %s121
      %s143 = sphi 0, %s145
      %s146 = sphi 0, %s143
      %s147 = sphi 0, %s146
      %s163 = sphi 0, %s147
      %s169 = sphi 0, %s171
      %s172 = sphi 0, %s169
      %s173 = sphi 0, %s172
      %s189 = sphi 0, %s173
      %s195 = sphi 0, %s197
      %s198 = sphi 0, %s195
      %s199 = sphi 0, %s198
      %s215 = sphi 0, %s199
      %s221 = sphi 0, %s223
      %s224 = sphi 0, %s221
      %s225 = sphi 0, %s224
      %s241 = sphi 0, %s225
      %s251 = sphi 0, %s253
      %s254 = sphi 0, %s251
      %s255 = sphi 0, %s254
      %s271 = sphi 0, %s255
    $region4: #{multi_head_attention.4} parent=1 // loop_header_branch
      %16 = sbr.rel (%p14) target = $region8
    $region5: #{multi_head_attention.4} parent=1 // loop_body
      %s18 = ssub.s32 %s13, 1
      %s19 = ssub.s32 %s13, 2
      %s32 = sadd.s32 1, %s23
      %p33 = scmp.ge.s32.totalorder %s32, 1
      %s34 = scalar_select %p33, 0, %s32
      %s35 = sadd.s32 1, %s22
      %s36 = scalar_select %p33, %s35, %s22
      %p37 = scmp.ge.s32.totalorder %s36, 1
      %s38 = scalar_select %p37, 0, %s36
      %s39 = sadd.s32 1, %s21
      %s40 = scalar_select %p37, %s39, %s21
      %p41 = scmp.ge.s32.totalorder %s40, 4
      %s42 = scalar_select %p41, 0, %s40
      %s43 = sadd.s32 1, %s20
      %s44 = scalar_select %p41, %s43, %s20
      %p45 = scmp.ge.s32.totalorder %s44, 2
      %s46 = scalar_select %p45, 0, %s44
      %s47 = ssub.s32 %s20, %s46
      %s48 = ssub.s32 %s22, %s38
      %s49 = sor.u32 %s47, %s48
      %s50 = ssub.s32 %s21, %s42
      %s51 = sor.u32 %s49, %s50
      %p52 = scmp.eq.s32.totalorder %s51, 0
      %s54 = sadd.s32 %s53, 1
      %s55 = scalar_select %p52, %s53, %s54
      %p58 = pneg %p52
      %p59 = scmp.eq.s32.totalorder %s13, 7
      %p60 = por %p58, %p59
      %p61 = scmp.ne.s32.totalorder %s53, %s56
      %p62 = scmp.eq.s32.totalorder %s13, 0
      %p63 = por %p61, %p62
      %p64 = scmp.ne.s32.totalorder %s53, %s56
      %p65 = scmp.eq.s32.totalorder %s18, 7
      %p66 = por %p64, %p65
      %p67 = scmp.ne.s32.totalorder %s56, %s57
      %p68 = scmp.eq.s32.totalorder %s18, 0
      %p69 = por %p67, %p68
      %p70 = scmp.ne.s32.totalorder %s56, %s57
      %p71 = scmp.eq.s32.totalorder %s19, 7
      %p72 = por %p70, %p71
      %p74 = scmp.ne.s32.totalorder %s57, %s73
      %p75 = scmp.eq.s32.totalorder %s19, 0
      %p76 = por %p74, %p75
      %s77 = sadd.s32 %s21, 4
      %s78 = sadd.s32 %s42, 4
      %s79 = ssub.s32 %s20, %s46
      %s80 = ssub.s32 %s23, %s34
      %s81 = sor.u32 %s79, %s80
      %s82 = ssub.s32 %s77, %s78
      %s83 = sor.u32 %s81, %s82
      %p84 = scmp.eq.s32.totalorder %s83, 0
      %s86 = sadd.s32 %s85, 1
      %s87 = scalar_select %p84, %s85, %s86
      %p90 = pneg %p84
      %p91 = scmp.eq.s32.totalorder %s13, 7
      %p92 = por %p90, %p91
      %p93 = scmp.ne.s32.totalorder %s85, %s88
      %p94 = scmp.eq.s32.totalorder %s13, 0
      %p95 = por %p93, %p94
      %p96 = scmp.ne.s32.totalorder %s85, %s88
      %p97 = scmp.eq.s32.totalorder %s18, 7
      %p98 = por %p96, %p97
      %p99 = scmp.ne.s32.totalorder %s88, %s89
      %p100 = scmp.eq.s32.totalorder %s18, 0
      %p101 = por %p99, %p100
      %p102 = scmp.ne.s32.totalorder %s88, %s89
      %p103 = scmp.eq.s32.totalorder %s19, 7
      %p104 = por %p102, %p103
      %p106 = scmp.ne.s32.totalorder %s89, %s105
      %p107 = scmp.eq.s32.totalorder %s19, 0
      %p108 = por %p106, %p107
      %s109 = sadd.s32 %s21, 8
      %s110 = sadd.s32 %s42, 8
      %s111 = ssub.s32 %s20, %s46
      %s112 = ssub.s32 %s23, %s34
      %s113 = sor.u32 %s111, %s112
      %s114 = ssub.s32 %s109, %s110
      %s115 = sor.u32 %s113, %s114
      %p116 = scmp.eq.s32.totalorder %s115, 0
      %s118 = sadd.s32 %s117, 1
      %s119 = scalar_select %p116, %s117, %s118
      %p122 = pneg %p116
      %p123 = scmp.eq.s32.totalorder %s13, 7
      %p124 = por %p122, %p123
      %p125 = scmp.ne.s32.totalorder %s117, %s120
      %p126 = scmp.eq.s32.totalorder %s13, 0
      %p127 = por %p125, %p126
      %p128 = scmp.ne.s32.totalorder %s117, %s120
      %p129 = scmp.eq.s32.totalorder %s18, 7
      %p130 = por %p128, %p129
      %p131 = scmp.ne.s32.totalorder %s120, %s121
      %p132 = scmp.eq.s32.totalorder %s18, 0
      %p133 = por %p131, %p132
      %p134 = scmp.ne.s32.totalorder %s120, %s121
      %p135 = scmp.eq.s32.totalorder %s19, 7
      %p136 = por %p134, %p135
      %p138 = scmp.ne.s32.totalorder %s121, %s137
      %p139 = scmp.eq.s32.totalorder %s19, 0
      %p140 = por %p138, %p139
      %s141 = ssub.s32 %s22, %s38
      %p142 = scmp.eq.s32.totalorder %s141, 0
      %s144 = sadd.s32 %s143, 1
      %s145 = scalar_select %p142, %s143, %s144
      %p148 = pneg %p142
      %p149 = scmp.eq.s32.totalorder %s13, 7
      %p150 = por %p148, %p149
      %p151 = scmp.ne.s32.totalorder %s143, %s146
      %p152 = scmp.eq.s32.totalorder %s13, 0
      %p153 = por %p151, %p152
      %p154 = scmp.ne.s32.totalorder %s143, %s146
      %p155 = scmp.eq.s32.totalorder %s18, 7
      %p156 = por %p154, %p155
      %p157 = scmp.ne.s32.totalorder %s146, %s147
      %p158 = scmp.eq.s32.totalorder %s18, 0
      %p159 = por %p157, %p158
      %p160 = scmp.ne.s32.totalorder %s146, %s147
      %p161 = scmp.eq.s32.totalorder %s19, 7
      %p162 = por %p160, %p161
      %p164 = scmp.ne.s32.totalorder %s147, %s163
      %p165 = scmp.eq.s32.totalorder %s19, 0
      %p166 = por %p164, %p165
      %s167 = ssub.s32 %s22, %s38
      %p168 = scmp.eq.s32.totalorder %s167, 0
      %s170 = sadd.s32 %s169, 1
      %s171 = scalar_select %p168, %s169, %s170
      %p174 = pneg %p168
      %p175 = scmp.eq.s32.totalorder %s13, 7
      %p176 = por %p174, %p175
      %p177 = scmp.ne.s32.totalorder %s169, %s172
      %p178 = scmp.eq.s32.totalorder %s13, 0
      %p179 = por %p177, %p178
      %p180 = scmp.ne.s32.totalorder %s169, %s172
      %p181 = scmp.eq.s32.totalorder %s18, 7
      %p182 = por %p180, %p181
      %p183 = scmp.ne.s32.totalorder %s172, %s173
      %p184 = scmp.eq.s32.totalorder %s18, 0
      %p185 = por %p183, %p184
      %p186 = scmp.ne.s32.totalorder %s172, %s173
      %p187 = scmp.eq.s32.totalorder %s19, 7
      %p188 = por %p186, %p187
      %p190 = scmp.ne.s32.totalorder %s173, %s189
      %p191 = scmp.eq.s32.totalorder %s19, 0
      %p192 = por %p190, %p191
      %s193 = ssub.s32 %s23, %s34
      %p194 = scmp.eq.s32.totalorder %s193, 0
      %s196 = sadd.s32 %s195, 1
      %s197 = scalar_select %p194, %s195, %s196
      %p200 = pneg %p194
      %p201 = scmp.eq.s32.totalorder %s13, 7
      %p202 = por %p200, %p201
      %p203 = scmp.ne.s32.totalorder %s195, %s198
      %p204 = scmp.eq.s32.totalorder %s13, 0
      %p205 = por %p203, %p204
      %p206 = scmp.ne.s32.totalorder %s195, %s198
      %p207 = scmp.eq.s32.totalorder %s18, 7
      %p208 = por %p206, %p207
      %p209 = scmp.ne.s32.totalorder %s198, %s199
      %p210 = scmp.eq.s32.totalorder %s18, 0
      %p211 = por %p209, %p210
      %p212 = scmp.ne.s32.totalorder %s198, %s199
      %p213 = scmp.eq.s32.totalorder %s19, 7
      %p214 = por %p212, %p213
      %p216 = scmp.ne.s32.totalorder %s199, %s215
      %p217 = scmp.eq.s32.totalorder %s19, 0
      %p218 = por %p216, %p217
      %s219 = ssub.s32 %s23, %s34
      %p220 = scmp.eq.s32.totalorder %s219, 0
      %s222 = sadd.s32 %s221, 1
      %s223 = scalar_select %p220, %s221, %s222
      %p226 = pneg %p220
      %p227 = scmp.eq.s32.totalorder %s13, 7
      %p228 = por %p226, %p227
      %p229 = scmp.ne.s32.totalorder %s221, %s224
      %p230 = scmp.eq.s32.totalorder %s13, 0
      %p231 = por %p229, %p230
      %p232 = scmp.ne.s32.totalorder %s221, %s224
      %p233 = scmp.eq.s32.totalorder %s18, 7
      %p234 = por %p232, %p233
      %p235 = scmp.ne.s32.totalorder %s224, %s225
      %p236 = scmp.eq.s32.totalorder %s18, 0
      %p237 = por %p235, %p236
      %p238 = scmp.ne.s32.totalorder %s224, %s225
      %p239 = scmp.eq.s32.totalorder %s19, 7
      %p240 = por %p238, %p239
      %p242 = scmp.ne.s32.totalorder %s225, %s241
      %p243 = scmp.eq.s32.totalorder %s19, 0
      %p244 = por %p242, %p243
      %s245 = ssub.s32 %s20, %s46
      %s246 = ssub.s32 %s22, %s38
      %s247 = sor.u32 %s245, %s246
      %s248 = ssub.s32 %s21, %s42
      %s249 = sor.u32 %s247, %s248
      %p250 = scmp.eq.s32.totalorder %s249, 0
      %s252 = sadd.s32 %s251, 1
      %s253 = scalar_select %p250, %s251, %s252
      %p256 = pneg %p250
      %p257 = scmp.eq.s32.totalorder %s13, 7
      %p258 = por %p256, %p257
      %p259 = scmp.ne.s32.totalorder %s251, %s254
      %p260 = scmp.eq.s32.totalorder %s13, 0
      %p261 = por %p259, %p260
      %p262 = scmp.ne.s32.totalorder %s251, %s254
      %p263 = scmp.eq.s32.totalorder %s18, 7
      %p264 = por %p262, %p263
      %p265 = scmp.ne.s32.totalorder %s254, %s255
      %p266 = scmp.eq.s32.totalorder %s18, 0
      %p267 = por %p265, %p266
      %p268 = scmp.ne.s32.totalorder %s254, %s255
      %p269 = scmp.eq.s32.totalorder %s19, 7
      %p270 = por %p268, %p269
      %p272 = scmp.ne.s32.totalorder %s255, %s271
      %p273 = scmp.eq.s32.totalorder %s19, 0
      %p274 = por %p272, %p273
      %p275 = scmp.le.s32.totalorder 1, %s13
      %p276 = scmp.lt.s32.totalorder %s13, 9
      %p277 = pnand %p275, %p276
      %p278 = pneg %p277
      // Predicated region
      $region9: #{multi_head_attention.4} parent=5 // pred_check
        _
      $region10: #{multi_head_attention.4} parent=5 // pred_check_branch
        %280 = sbr.rel (%p277) target = $region12
      $region11: #{multi_head_attention.4} parent=5 // pred_region
        %s281 = ssub.s32 %s13, 1
        // Predicated region
        $region13: #{multi_head_attention.4} parent=11 // pred_check
          %p282 = pneg %p159
        $region14: #{multi_head_attention.4} parent=11 // pred_check_branch
          %284 = sbr.rel (%p282) target = $region16
        $region15: #{multi_head_attention.4} parent=11 // pred_region
          %s285 = smul.u32 2, %s26
          %p286 = scmp.lt.s32.totalorder %s285, 1
          %s287 = scalar_select %p286, %s285, 1
          %s288 = smul.addr %s287, 8
          %s289 = scalar_lea.vmem %s3, %s288
          %s290 = smul.u32 2, %s26
        $region16: #{multi_head_attention.4} parent=11 // pred_fallthru
          _
        // Predicated region
        $region17: #{multi_head_attention.4} parent=11 // pred_check
          %p291 = pneg %p185
        $region18: #{multi_head_attention.4} parent=11 // pred_check_branch
          %293 = sbr.rel (%p291) target = $region20
        $region19: #{multi_head_attention.4} parent=11 // pred_region
          %s294 = smul.u32 2, %s26
          %p295 = scmp.lt.s32.totalorder %s294, 1
          %s296 = scalar_select %p295, %s294, 1
          %s297 = smul.addr %s296, 8
          %s298 = scalar_lea.vmem %s4, %s297
          %s299 = smul.u32 2, %s26
        $region20: #{multi_head_attention.4} parent=11 // pred_fallthru
          _
        // Predicated region
        $region21: #{multi_head_attention.4} parent=11 // pred_check
          %p300 = pneg %p211
        $region22: #{multi_head_attention.4} parent=11 // pred_check_branch
          %302 = sbr.rel (%p300) target = $region24
        $region23: #{multi_head_attention.4} parent=11 // pred_region
          %s303 = smul.u32 2, %s27
          %p304 = scmp.lt.s32.totalorder %s303, 1
          %s305 = scalar_select %p304, %s303, 1
          %s306 = smul.addr %s305, 8
          %s307 = scalar_lea.vmem %s5, %s306
          %s308 = smul.u32 2, %s27
        $region24: #{multi_head_attention.4} parent=11 // pred_fallthru
          _
        // Predicated region
        $region25: #{multi_head_attention.4} parent=11 // pred_check
          %p309 = pneg %p237
        $region26: #{multi_head_attention.4} parent=11 // pred_check_branch
          %311 = sbr.rel (%p309) target = $region28
        $region27: #{multi_head_attention.4} parent=11 // pred_region
          %s312 = smul.u32 2, %s27
          %p313 = scmp.lt.s32.totalorder %s312, 1
          %s314 = scalar_select %p313, %s312, 1
          %s315 = smul.addr %s314, 8
          %s316 = scalar_lea.vmem %s6, %s315
          %s317 = smul.u32 2, %s27
        $region28: #{multi_head_attention.4} parent=11 // pred_fallthru
          _
      $region12: #{multi_head_attention.4} parent=5 // pred_fallthru
        _
      %p318 = scmp.lt.s32.totalorder %s13, 8
      // Predicated region
      $region29: #{multi_head_attention.4} parent=5 // pred_check
        %p319 = pneg %p318
      $region30: #{multi_head_attention.4} parent=5 // pred_check_branch
        %321 = sbr.rel (%p319) target = $region32
      $region31: #{multi_head_attention.4} parent=5 // pred_region
        // Predicated region
        $region33: #{multi_head_attention.4} parent=31 // pred_check
          %p322 = pneg %p63
        $region34: #{multi_head_attention.4} parent=31 // pred_check_branch
          %324 = sbr.rel (%p322) target = $region36
        $region35: #{multi_head_attention.4} parent=31 // pred_region
          %s325 = sand.u32 %s53, 1
          %s326 = sand.u32 %s53, 1
          %s327 = smul.addr %s326, 8
          %s328 = scalar_lea.vmem [#allocation6], %s327
          %s329 = smul.u32 2, %s22
          %s330 = smul.addr %s329, 12
          %s331 = sadd.s32 %s21, %s330
          %s332 = smul.addr %s20, 24
          %s333 = sadd.s32 %s331, %s332
          %s334 = smul.addr %s333, 4
          %s335 = scalar_lea.vmem %s0, %s334
          // Predicated region
          $region37: #{multi_head_attention.4} parent=35 // pred_check
            _
          $region38: #{multi_head_attention.4} parent=35 // pred_check_branch
            %337 = sbr.rel (0) target = $region40
          $region39: #{multi_head_attention.4} parent=35 // pred_region
            // Predicated region
            $region41: #{multi_head_attention.4} parent=39 // pred_check
              _
            $region42: #{multi_head_attention.4} parent=39 // pred_check_branch
              %339 = sbr.rel target = $region44
            $region43: #{multi_head_attention.4} parent=39 // pred_region
              // Predicated region
              $region56: #{multi_head_attention.4} parent=43 // pred_check
                _
              $region57: #{multi_head_attention.4} parent=43 // pred_check_branch
                %357 = sbr.rel (0) target = $region59
              $region58: #{multi_head_attention.4} parent=43 // pred_region
                loop: start=0, step=1, limit=1
                $region60: #{multi_head_attention.4} parent=58 // loop_pre_header
                  _
                $region61: #{multi_head_attention.4} parent=58 // loop_header
                  %s359 = sphi 0, %s363
                  %p360 = scmp.ge.s32.totalorder %s359, 1
                  %s364 = sphi %s335, %s335
                  %s365 = sphi %s328, %s328
                $region62: #{multi_head_attention.4} parent=58 // loop_header_branch
                  %362 = sbr.rel (%p360) target = $region66
                $region63: #{multi_head_attention.4} parent=58 // loop_body
                  _
                $region64: #{multi_head_attention.4} parent=58 // loop_footer
                  %s363 = sadd.s32 1, %s359
                $region65: #{multi_head_attention.4} parent=58 // loop_footer_branch
                  %358 = sbr.rel target = $region61
                $region66: #{multi_head_attention.4} parent=58 // loop_exit
                  _
                %s367 = ssub.s32 16, 1
                loop: start=0, step=1, limit=1
                $region67: #{multi_head_attention.4} parent=58 // loop_pre_header
                  _
                $region68: #{multi_head_attention.4} parent=58 // loop_header
                  %s369 = sphi 0, %s373
                  %p370 = scmp.ge.s32.totalorder %s369, 1
                  %s374 = sphi %s335, %s335
                  %s375 = sphi %s328, %s328
                $region69: #{multi_head_attention.4} parent=58 // loop_header_branch
                  %372 = sbr.rel (%p370) target = $region73
                $region70: #{multi_head_attention.4} parent=58 // loop_body
                  %v376 = vld [vmem:[%s374] sm:%s367]
                  %377 = vst [vmem:[%s375] sm:%s367] %v376
                  %v378 = vld [vmem:[%s374 + $0x30] sm:%s367]
                  %379 = vst [vmem:[%s375 + $0x4] sm:%s367] %v378
                $region71: #{multi_head_attention.4} parent=58 // loop_footer
                  %s373 = sadd.s32 1, %s369
                $region72: #{multi_head_attention.4} parent=58 // loop_footer_branch
                  %368 = sbr.rel target = $region68
                $region73: #{multi_head_attention.4} parent=58 // loop_exit
                  _
              $region59: #{multi_head_attention.4} parent=43 // pred_fallthru
                _
            $region44: #{multi_head_attention.4} parent=39 // pred_fallthru
              _
            // Predicated region
            $region45: #{multi_head_attention.4} parent=39 // pred_check
              _
            $region46: #{multi_head_attention.4} parent=39 // pred_check_branch
              %341 = sbr.rel (0) target = $region48
            $region47: #{multi_head_attention.4} parent=39 // pred_region
              %s343 = ssub.s32 16, 1
              loop: start=0, step=1, limit=1
              $region49: #{multi_head_attention.4} parent=47 // loop_pre_header
                _
              $region50: #{multi_head_attention.4} parent=47 // loop_header
                %s345 = sphi 0, %s349
                %p346 = scmp.ge.s32.totalorder %s345, 1
                %s350 = sphi %s335, %s335
                %s351 = sphi %s328, %s328
              $region51: #{multi_head_attention.4} parent=47 // loop_header_branch
                %348 = sbr.rel (%p346) target = $region55
              $region52: #{multi_head_attention.4} parent=47 // loop_body
                %v352 = vld [vmem:[%s350] sm:%s343]
                %353 = vst [vmem:[%s351] sm:%s343] %v352
                %v354 = vld [vmem:[%s350 + $0x30] sm:%s343]
                %355 = vst [vmem:[%s351 + $0x4] sm:%s343] %v354
              $region53: #{multi_head_attention.4} parent=47 // loop_footer
                %s349 = sadd.s32 1, %s345
              $region54: #{multi_head_attention.4} parent=47 // loop_footer_branch
                %344 = sbr.rel target = $region50
              $region55: #{multi_head_attention.4} parent=47 // loop_exit
                _
            $region48: #{multi_head_attention.4} parent=39 // pred_fallthru
              _
          $region40: #{multi_head_attention.4} parent=35 // pred_fallthru
            _
          %380 = vnop
        $region36: #{multi_head_attention.4} parent=31 // pred_fallthru
          _
        // Predicated region
        $region74: #{multi_head_attention.4} parent=31 // pred_check
          %p381 = pneg %p95
        $region75: #{multi_head_attention.4} parent=31 // pred_check_branch
          %383 = sbr.rel (%p381) target = $region77
        $region76: #{multi_head_attention.4} parent=31 // pred_region
          %s384 = sand.u32 %s85, 1
          %s385 = sand.u32 %s85, 1
          %s386 = smul.addr %s385, 8
          %s387 = scalar_lea.vmem [#allocation7], %s386
          %s388 = sadd.s32 %s21, 4
          %s389 = smul.u32 2, %s23
          %s390 = smul.addr %s389, 12
          %s391 = sadd.s32 %s388, %s390
          %s392 = smul.addr %s20, 24
          %s393 = sadd.s32 %s391, %s392
          %s394 = smul.addr %s393, 4
          %s395 = scalar_lea.vmem %s1, %s394
          // Predicated region
          $region78: #{multi_head_attention.4} parent=76 // pred_check
            _
          $region79: #{multi_head_attention.4} parent=76 // pred_check_branch
            %397 = sbr.rel (0) target = $region81
          $region80: #{multi_head_attention.4} parent=76 // pred_region
            // Predicated region
            $region82: #{multi_head_attention.4} parent=80 // pred_check
              _
            $region83: #{multi_head_attention.4} parent=80 // pred_check_branch
              %399 = sbr.rel target = $region85
            $region84: #{multi_head_attention.4} parent=80 // pred_region
              // Predicated region
              $region97: #{multi_head_attention.4} parent=84 // pred_check
                _
              $region98: #{multi_head_attention.4} parent=84 // pred_check_branch
                %417 = sbr.rel (0) target = $region100
              $region99: #{multi_head_attention.4} parent=84 // pred_region
                loop: start=0, step=1, limit=1
                $region101: #{multi_head_attention.4} parent=99 // loop_pre_header
                  _
                $region102: #{multi_head_attention.4} parent=99 // loop_header
                  %s419 = sphi 0, %s423
                  %p420 = scmp.ge.s32.totalorder %s419, 1
                  %s424 = sphi %s395, %s395
                  %s425 = sphi %s387, %s387
                $region103: #{multi_head_attention.4} parent=99 // loop_header_branch
                  %422 = sbr.rel (%p420) target = $region107
                $region104: #{multi_head_attention.4} parent=99 // loop_body
                  _
                $region105: #{multi_head_attention.4} parent=99 // loop_footer
                  %s423 = sadd.s32 1, %s419
                $region106: #{multi_head_attention.4} parent=99 // loop_footer_branch
                  %418 = sbr.rel target = $region102
                $region107: #{multi_head_attention.4} parent=99 // loop_exit
                  _
                %s427 = ssub.s32 16, 1
                loop: start=0, step=1, limit=1
                $region108: #{multi_head_attention.4} parent=99 // loop_pre_header
                  _
                $region109: #{multi_head_attention.4} parent=99 // loop_header
                  %s429 = sphi 0, %s433
                  %p430 = scmp.ge.s32.totalorder %s429, 1
                  %s434 = sphi %s395, %s395
                  %s435 = sphi %s387, %s387
                $region110: #{multi_head_attention.4} parent=99 // loop_header_branch
                  %432 = sbr.rel (%p430) target = $region114
                $region111: #{multi_head_attention.4} parent=99 // loop_body
                  %v436 = vld [vmem:[%s434] sm:%s427]
                  %437 = vst [vmem:[%s435] sm:%s427] %v436
                  %v438 = vld [vmem:[%s434 + $0x30] sm:%s427]
                  %439 = vst [vmem:[%s435 + $0x4] sm:%s427] %v438
                $region112: #{multi_head_attention.4} parent=99 // loop_footer
                  %s433 = sadd.s32 1, %s429
                $region113: #{multi_head_attention.4} parent=99 // loop_footer_branch
                  %428 = sbr.rel target = $region109
                $region114: #{multi_head_attention.4} parent=99 // loop_exit
                  _
              $region100: #{multi_head_attention.4} parent=84 // pred_fallthru
                _
            $region85: #{multi_head_attention.4} parent=80 // pred_fallthru
              _
            // Predicated region
            $region86: #{multi_head_attention.4} parent=80 // pred_check
              _
            $region87: #{multi_head_attention.4} parent=80 // pred_check_branch
              %401 = sbr.rel (0) target = $region89
            $region88: #{multi_head_attention.4} parent=80 // pred_region
              %s403 = ssub.s32 16, 1
              loop: start=0, step=1, limit=1
              $region90: #{multi_head_attention.4} parent=88 // loop_pre_header
                _
              $region91: #{multi_head_attention.4} parent=88 // loop_header
                %s405 = sphi 0, %s409
                %p406 = scmp.ge.s32.totalorder %s405, 1
                %s410 = sphi %s395, %s395
                %s411 = sphi %s387, %s387
              $region92: #{multi_head_attention.4} parent=88 // loop_header_branch
                %408 = sbr.rel (%p406) target = $region96
              $region93: #{multi_head_attention.4} parent=88 // loop_body
                %v412 = vld [vmem:[%s410] sm:%s403]
                %413 = vst [vmem:[%s411] sm:%s403] %v412
                %v414 = vld [vmem:[%s410 + $0x30] sm:%s403]
                %415 = vst [vmem:[%s411 + $0x4] sm:%s403] %v414
              $region94: #{multi_head_attention.4} parent=88 // loop_footer
                %s409 = sadd.s32 1, %s405
              $region95: #{multi_head_attention.4} parent=88 // loop_footer_branch
                %404 = sbr.rel target = $region91
              $region96: #{multi_head_attention.4} parent=88 // loop_exit
                _
            $region89: #{multi_head_attention.4} parent=80 // pred_fallthru
              _
          $region81: #{multi_head_attention.4} parent=76 // pred_fallthru
            _
          %440 = vnop
        $region77: #{multi_head_attention.4} parent=31 // pred_fallthru
          _
        // Predicated region
        $region115: #{multi_head_attention.4} parent=31 // pred_check
          %p441 = pneg %p127
        $region116: #{multi_head_attention.4} parent=31 // pred_check_branch
          %443 = sbr.rel (%p441) target = $region118
        $region117: #{multi_head_attention.4} parent=31 // pred_region
          %s444 = sand.u32 %s117, 1
          %s445 = sand.u32 %s117, 1
          %s446 = smul.addr %s445, 8
          %s447 = scalar_lea.vmem [#allocation8], %s446
          %s448 = sadd.s32 %s21, 8
          %s449 = smul.u32 2, %s23
          %s450 = smul.addr %s449, 12
          %s451 = sadd.s32 %s448, %s450
          %s452 = smul.addr %s20, 24
          %s453 = sadd.s32 %s451, %s452
          %s454 = smul.addr %s453, 4
          %s455 = scalar_lea.vmem %s2, %s454
          // Predicated region
          $region119: #{multi_head_attention.4} parent=117 // pred_check
            _
          $region120: #{multi_head_attention.4} parent=117 // pred_check_branch
            %457 = sbr.rel (0) target = $region122
          $region121: #{multi_head_attention.4} parent=117 // pred_region
            // Predicated region
            $region123: #{multi_head_attention.4} parent=121 // pred_check
              _
            $region124: #{multi_head_attention.4} parent=121 // pred_check_branch
              %459 = sbr.rel target = $region126
            $region125: #{multi_head_attention.4} parent=121 // pred_region
              // Predicated region
              $region138: #{multi_head_attention.4} parent=125 // pred_check
                _
              $region139: #{multi_head_attention.4} parent=125 // pred_check_branch
                %477 = sbr.rel (0) target = $region141
              $region140: #{multi_head_attention.4} parent=125 // pred_region
                loop: start=0, step=1, limit=1
                $region142: #{multi_head_attention.4} parent=140 // loop_pre_header
                  _
                $region143: #{multi_head_attention.4} parent=140 // loop_header
                  %s479 = sphi 0, %s483
                  %p480 = scmp.ge.s32.totalorder %s479, 1
                  %s484 = sphi %s455, %s455
                  %s485 = sphi %s447, %s447
                $region144: #{multi_head_attention.4} parent=140 // loop_header_branch
                  %482 = sbr.rel (%p480) target = $region148
                $region145: #{multi_head_attention.4} parent=140 // loop_body
                  _
                $region146: #{multi_head_attention.4} parent=140 // loop_footer
                  %s483 = sadd.s32 1, %s479
                $region147: #{multi_head_attention.4} parent=140 // loop_footer_branch
                  %478 = sbr.rel target = $region143
                $region148: #{multi_head_attention.4} parent=140 // loop_exit
                  _
                %s487 = ssub.s32 16, 1
                loop: start=0, step=1, limit=1
                $region149: #{multi_head_attention.4} parent=140 // loop_pre_header
                  _
                $region150: #{multi_head_attention.4} parent=140 // loop_header
                  %s489 = sphi 0, %s493
                  %p490 = scmp.ge.s32.totalorder %s489, 1
                  %s494 = sphi %s455, %s455
                  %s495 = sphi %s447, %s447
                $region151: #{multi_head_attention.4} parent=140 // loop_header_branch
                  %492 = sbr.rel (%p490) target = $region155
                $region152: #{multi_head_attention.4} parent=140 // loop_body
                  %v496 = vld [vmem:[%s494] sm:%s487]
                  %497 = vst [vmem:[%s495] sm:%s487] %v496
                  %v498 = vld [vmem:[%s494 + $0x30] sm:%s487]
                  %499 = vst [vmem:[%s495 + $0x4] sm:%s487] %v498
                $region153: #{multi_head_attention.4} parent=140 // loop_footer
                  %s493 = sadd.s32 1, %s489
                $region154: #{multi_head_attention.4} parent=140 // loop_footer_branch
                  %488 = sbr.rel target = $region150
                $region155: #{multi_head_attention.4} parent=140 // loop_exit
                  _
              $region141: #{multi_head_attention.4} parent=125 // pred_fallthru
                _
            $region126: #{multi_head_attention.4} parent=121 // pred_fallthru
              _
            // Predicated region
            $region127: #{multi_head_attention.4} parent=121 // pred_check
              _
            $region128: #{multi_head_attention.4} parent=121 // pred_check_branch
              %461 = sbr.rel (0) target = $region130
            $region129: #{multi_head_attention.4} parent=121 // pred_region
              %s463 = ssub.s32 16, 1
              loop: start=0, step=1, limit=1
              $region131: #{multi_head_attention.4} parent=129 // loop_pre_header
                _
              $region132: #{multi_head_attention.4} parent=129 // loop_header
                %s465 = sphi 0, %s469
                %p466 = scmp.ge.s32.totalorder %s465, 1
                %s470 = sphi %s455, %s455
                %s471 = sphi %s447, %s447
              $region133: #{multi_head_attention.4} parent=129 // loop_header_branch
                %468 = sbr.rel (%p466) target = $region137
              $region134: #{multi_head_attention.4} parent=129 // loop_body
                %v472 = vld [vmem:[%s470] sm:%s463]
                %473 = vst [vmem:[%s471] sm:%s463] %v472
                %v474 = vld [vmem:[%s470 + $0x30] sm:%s463]
                %475 = vst [vmem:[%s471 + $0x4] sm:%s463] %v474
              $region135: #{multi_head_attention.4} parent=129 // loop_footer
                %s469 = sadd.s32 1, %s465
              $region136: #{multi_head_attention.4} parent=129 // loop_footer_branch
                %464 = sbr.rel target = $region132
              $region137: #{multi_head_attention.4} parent=129 // loop_exit
                _
            $region130: #{multi_head_attention.4} parent=121 // pred_fallthru
              _
          $region122: #{multi_head_attention.4} parent=117 // pred_fallthru
            _
          %500 = vnop
        $region118: #{multi_head_attention.4} parent=31 // pred_fallthru
          _
      $region32: #{multi_head_attention.4} parent=5 // pred_fallthru
        _
      %p501 = scmp.le.s32.totalorder 1, %s13
      %p502 = scmp.lt.s32.totalorder %s13, 9
      %p503 = pnand %p501, %p502
      %p504 = pneg %p503
      // Predicated region
      $region156: #{multi_head_attention.4} parent=5 // pred_check
        _
      $region157: #{multi_head_attention.4} parent=5 // pred_check_branch
        %506 = sbr.rel (%p503) target = $region159
      $region158: #{multi_head_attention.4} parent=5 // pred_region
        %s507 = ssub.s32 %s13, 1
        %s508 = sand.u32 %s56, 1
        %s509 = sand.u32 %s56, 1
        %s510 = smul.addr %s509, 8
        %s511 = scalar_lea.vmem [#allocation6], %s510
        // Predicated region
        $region160: #{multi_head_attention.4} parent=158 // pred_check
          %p512 = pneg %p69
        $region161: #{multi_head_attention.4} parent=158 // pred_check_branch
          %514 = sbr.rel (%p512) target = $region163
        $region162: #{multi_head_attention.4} parent=158 // pred_region
          _
        $region163: #{multi_head_attention.4} parent=158 // pred_fallthru
          _
        %s515 = sand.u32 %s88, 1
        %s516 = sand.u32 %s88, 1
        %s517 = smul.addr %s516, 8
        %s518 = scalar_lea.vmem [#allocation7], %s517
        // Predicated region
        $region164: #{multi_head_attention.4} parent=158 // pred_check
          %p519 = pneg %p101
        $region165: #{multi_head_attention.4} parent=158 // pred_check_branch
          %521 = sbr.rel (%p519) target = $region167
        $region166: #{multi_head_attention.4} parent=158 // pred_region
          _
        $region167: #{multi_head_attention.4} parent=158 // pred_fallthru
          _
        %s522 = sand.u32 %s120, 1
        %s523 = sand.u32 %s120, 1
        %s524 = smul.addr %s523, 8
        %s525 = scalar_lea.vmem [#allocation8], %s524
        // Predicated region
        $region168: #{multi_head_attention.4} parent=158 // pred_check
          %p526 = pneg %p133
        $region169: #{multi_head_attention.4} parent=158 // pred_check_branch
          %528 = sbr.rel (%p526) target = $region171
        $region170: #{multi_head_attention.4} parent=158 // pred_region
          _
        $region171: #{multi_head_attention.4} parent=158 // pred_fallthru
          _
        %s529 = sand.u32 %s56, 1
        %s530 = sand.u32 %s56, 1
        %s531 = smul.addr %s530, 8
        %s532 = scalar_lea.vmem [#allocation6], %s531
        %p533 = pneg %p69
        %p534 = pneg %p66
        %s535 = sand.u32 %s88, 1
        %s536 = sand.u32 %s88, 1
        %s537 = smul.addr %s536, 8
        %s538 = scalar_lea.vmem [#allocation7], %s537
        %p539 = pneg %p101
        %p540 = pneg %p98
        %s541 = sand.u32 %s120, 1
        %s542 = sand.u32 %s120, 1
        %s543 = smul.addr %s542, 8
        %s544 = scalar_lea.vmem [#allocation8], %s543
        %p545 = pneg %p133
        %p546 = pneg %p130
        %s547 = smul.u32 2, %s26
        %p548 = scmp.lt.s32.totalorder %s547, 1
        %s549 = scalar_select %p548, %s547, 1
        %s550 = smul.addr %s549, 8
        %s551 = scalar_lea.vmem %s3, %s550
        %p552 = pneg %p159
        %p553 = pneg %p156
        %s554 = smul.u32 2, %s26
        %p555 = scmp.lt.s32.totalorder %s554, 1
        %s556 = scalar_select %p555, %s554, 1
        %s557 = smul.addr %s556, 8
        %s558 = scalar_lea.vmem %s4, %s557
        %p559 = pneg %p185
        %p560 = pneg %p182
        %s561 = smul.u32 2, %s27
        %p562 = scmp.lt.s32.totalorder %s561, 1
        %s563 = scalar_select %p562, %s561, 1
        %s564 = smul.addr %s563, 8
        %s565 = scalar_lea.vmem %s5, %s564
        %p566 = pneg %p211
        %p567 = pneg %p208
        %s568 = smul.u32 2, %s27
        %p569 = scmp.lt.s32.totalorder %s568, 1
        %s570 = scalar_select %p569, %s568, 1
        %s571 = smul.addr %s570, 8
        %s572 = scalar_lea.vmem %s6, %s571
        %p573 = pneg %p237
        %p574 = pneg %p234
        %p575 = pneg %p267
        %p576 = pneg %p264
        %s577 = sand.u32 %s254, 1
        %s578 = sand.u32 %s254, 1
        %s579 = smul.addr %s578, 8
        %s580 = scalar_lea.vmem [#allocation9], %s579
        %s581 = smul.u32 2, %s26
        %s582 = sadd.s32 %s25, 4
        %s583 = smul.u32 2, %s27
        %s584 = sadd.s32 %s25, 8
        %s585 = smul.u32 2, %s27
        %s586 = smul.u32 2, %s26
        %p587 = scmp.lt.s32.totalorder %s586, 1
        %s588 = scalar_select %p587, %s586, 1
        %s589 = smul.addr %s588, 8
        %s590 = scalar_lea.vmem %s3, %s589
        %s591 = smul.u32 2, %s26
        %s592 = smul.u32 2, %s26
        %p593 = scmp.lt.s32.totalorder %s592, 1
        %s594 = scalar_select %p593, %s592, 1
        %s595 = smul.addr %s594, 8
        %s596 = scalar_lea.vmem %s4, %s595
        %s597 = smul.u32 2, %s26
        %s598 = smul.u32 2, %s27
        %p599 = scmp.lt.s32.totalorder %s598, 1
        %s600 = scalar_select %p599, %s598, 1
        %s601 = smul.addr %s600, 8
        %s602 = scalar_lea.vmem %s5, %s601
        %s603 = smul.u32 2, %s27
        %s604 = smul.u32 2, %s27
        %p605 = scmp.lt.s32.totalorder %s604, 1
        %s606 = scalar_select %p605, %s604, 1
        %s607 = smul.addr %s606, 8
        %s608 = scalar_lea.vmem %s6, %s607
        %s609 = smul.u32 2, %s27
        %s610 = smul.u32 2, %s26
        %p612 = scmp.eq.s32.totalorder %s27, 0
        // Predicated region
        $region172: #{multi_head_attention.4} parent=158 // pred_check
          %p613 = pneg %p612
        $region173: #{multi_head_attention.4} parent=158 // pred_check_branch
          %615 = sbr.rel (%p613) target = $region175
        $region174: #{multi_head_attention.4} parent=158 // pred_region
          %v616 = vld [vmem:[%s511] sm:$0xf]
          %v617 = vld [vmem:[%s511 + $0x4] sm:$0xf]
          %v618 = vunpack.c.l.bf16 %v616
          %v619 = vunpack.c.l.bf16 %v617
          %v620 = vld [vmem:[%s590] sm:$0xff]
          %v621 = vld [vmem:[%s590 + $0x8] sm:$0xff]
          %v622 = vmul.f32 %v618, %v620
          %v623 = vmul.f32 %v619, %v621
          %624 = vrot.lane.b32.xlu0 %v618, 64
          %v625 = vpop.permute.xlu0 %624
          %626 = vrot.lane.b32.xlu0 %v619, 64
          %v627 = vpop.permute.xlu0 %626
          %v628 = vld [vmem:[%s596] sm:$0xff]
          %v629 = vld [vmem:[%s596 + $0x8] sm:$0xff]
          %v630 = vmul.f32 %v625, %v628
          %v631 = vmul.f32 %v627, %v629
          %v632 = vadd.f32 %v622, %v630
          %v633 = vadd.f32 %v623, %v631
          %v634 = vpack.c.bf16 %v633, %v632
          %v636 = vunpack.c.l.b16 %v634
          %v637 = vunpack.c.h.b16 %v634
          %v638 = vpack.c.b16 %v636, %v636
          %v639 = vpack.c.b16 %v637, %v637
          %642 = vst [vmem:[#allocation2] sm:$0xf] %v638
          %643 = vst [vmem:[#allocation2 + $0x4] sm:$0xf] %v639
          %vm644 = vcmask 7168
          %645 = vst.msk [vmem:[#allocation3] sm:$0xff] %vm644, -inf
          %646 = vst.msk [vmem:[#allocation3 + $0x8] sm:$0xff] %vm644, -inf
          %647 = vst.msk [vmem:[#allocation4] sm:$0xff] %vm644, 0.0
          %648 = vst.msk [vmem:[#allocation4 + $0x8] sm:$0xff] %vm644, 0.0
          %649 = vst [vmem:[#allocation5] sm:$0xff] 0.0
          %650 = vst [vmem:[#allocation5 + $0x8] sm:$0xff] 0.0
        $region175: #{multi_head_attention.4} parent=158 // pred_fallthru
          _
        %v651 = vld [vmem:[%s518] sm:$0xf]
        %v652 = vld [vmem:[%s518 + $0x4] sm:$0xf]
        %v653 = vunpack.c.l.bf16 %v651
        %v654 = vunpack.c.l.bf16 %v652
        %v655 = vld [vmem:[%s602] sm:$0xff]
        %v656 = vld [vmem:[%s602 + $0x8] sm:$0xff]
        %v657 = vmul.f32 %v653, %v655
        %v658 = vmul.f32 %v654, %v656
        %659 = vrot.lane.b32.xlu0 %v653, 64
        %v660 = vpop.permute.xlu0 %659
        %661 = vrot.lane.b32.xlu0 %v654, 64
        %v662 = vpop.permute.xlu0 %661
        %v663 = vld [vmem:[%s608] sm:$0xff]
        %v664 = vld [vmem:[%s608 + $0x8] sm:$0xff]
        %v665 = vmul.f32 %v660, %v663
        %v666 = vmul.f32 %v662, %v664
        %v667 = vadd.f32 %v657, %v665
        %v668 = vadd.f32 %v658, %v666
        %v669 = vld [vmem:[#allocation2] sm:$0xf]
        %v670 = vld [vmem:[#allocation2 + $0x4] sm:$0xf]
        %v671 = vpack.c.bf16 %v668, %v667
        %v674 = vunpack.c.l.b16 %v669
        %v675 = vunpack.c.l.b16 %v670
        %v676 = vpack.c.b16 %v675, %v674
        %678 = vmatprep.subr.bf16.mxu0 0
        %679 = vmatpush1.bf16.xpose.msra.mxu0 0
        %680 = vmatprep.subr.bf16.mxu0 0
        %681 = vmatpush1.bf16.xpose.msra.mxu0 0
        %682 = vmatprep.subr.bf16.mxu0 0
        %683 = vmatpush1.bf16.xpose.msra.mxu0 0
        %684 = vmatprep.subr.bf16.mxu0 0
        %685 = vmatpush1.bf16.xpose.msra.mxu0 0
        %686 = vmatprep.subr.bf16.mxu0 0
        %687 = vmatpush1.bf16.xpose.msra.mxu0 0
        %688 = vmatprep.subr.bf16.mxu0 0
        %689 = vmatpush1.bf16.xpose.msra.mxu0 0
        %690 = vmatprep.subr.bf16.mxu0 0
        %691 = vmatpush1.bf16.xpose.msra.mxu0 0
        %692 = vmatprep.subr.bf16.mxu0 0
        %693 = vmatpush1.bf16.xpose.msra.mxu0 %v671
        %694 = vmatprep.subr.bf16.mxu0 0
        %695 = vmatpush2.bf16.xpose.msra.mxu0 0
        %696 = vmatprep.subr.bf16.mxu0 0
        %697 = vmatpush2.bf16.xpose.msra.mxu0 0
        %698 = vmatprep.subr.bf16.mxu0 0
        %699 = vmatpush2.bf16.xpose.msra.mxu0 0
        %700 = vmatprep.subr.bf16.mxu0 0
        %701 = vmatpush2.bf16.xpose.msra.mxu0 0
        %702 = vmatprep.subr.bf16.mxu0 0
        %703 = vmatpush2.bf16.xpose.msra.mxu0 0
        %704 = vmatprep.subr.bf16.mxu0 0
        %705 = vmatpush2.bf16.xpose.msra.mxu0 0
        %706 = vmatprep.subr.bf16.mxu0 0
        %707 = vmatpush2.bf16.xpose.msra.mxu0 0
        %708 = vmatprep.subr.bf16.mxu0 0
        %709 = vmatpush2.bf16.xpose.msra.mxu0 0
        %710 = vmatprep.mubr.bf16.mxu0 0
        %711 = vmatmul.mubr.bf16.gmra.mxu0 %v676
        %v712 = vpop.f32.mrf.mxu0
        %v713 = vadd.f32 0.0, %v712
        %v714 = vpop.f32.mrf.mxu0
        %v715 = vpop.f32.mrf.mxu0
        %v716 = vadd.f32 0.0, %v715
        %v717 = vpop.f32.mrf.mxu0
        %718 = vdwg.mxu0
        %v719 = vld [vmem:[#allocation3] sm:$0xff]
        %v720 = vld [vmem:[#allocation3 + $0x8] sm:$0xff]
        %vm721 = vcmask 130048
        %v722 = vsel %vm721, %v713, -inf
        %723 = vmax.xlane.f32.xlu0 %v722
        %v724 = vpop.xlane.xlu0 %723
        %v725 = vsel %vm721, %v716, -inf
        %726 = vmax.xlane.f32.xlu0 %v725
        %v727 = vpop.xlane.xlu0 %726
        %v728 = vmax.f32 %v719, %v724
        %v729 = vmax.f32 %v720, %v727
        %v730 = vsub.f32 %v719, %v728
        %v731 = vsub.f32 %v720, %v729
        %v732 = vmul.f32 %v730, 1.442695
        %v733 = vpow.pop %v732
        %v734 = vmul.f32 %v731, 1.442695
        %v735 = vpow.pop %v734
        %737 = vset.pattern.permute.xlu0 0
        %738 = vperm.xlu0 %737, %v728
        %v739 = vpop.permute.xlu0 %738
        %742 = vset.pattern.permute.xlu0 0
        %743 = vperm.xlu0 %742, %v729
        %v744 = vpop.permute.xlu0 %743
        %v746 = vsub.f32 %v713, %v739
        %v747 = vsub.f32 %v716, %v744
        %v748 = vmul.f32 %v746, 1.442695
        %v749 = vpow.pop %v748
        %v750 = vmul.f32 %v747, 1.442695
        %v751 = vpow.pop %v750
        %v752 = vld [vmem:[#allocation4] sm:$0xff]
        %v753 = vld [vmem:[#allocation4 + $0x8] sm:$0xff]
        %v754 = vmul.f32 %v733, %v752
        %v755 = vmul.f32 %v735, %v753
        %v756 = vsel %vm721, %v749, 0.0
        %757 = vadd.xlane.f32.xlu0 %v756
        %v758 = vpop.xlane.xlu0 %757
        %v759 = vsel %vm721, %v751, 0.0
        %760 = vadd.xlane.f32.xlu0 %v759
        %v761 = vpop.xlane.xlu0 %760
        %v762 = vadd.f32 %v754, %v758
        %v763 = vadd.f32 %v755, %v761
        %vm764 = vcmask 7168
        %765 = vst.msk [vmem:[#allocation4] sm:$0xff] %vm764, %v762
        %766 = vst.msk [vmem:[#allocation4 + $0x8] sm:$0xff] %vm764, %v763
        %v767 = vld [vmem:[#allocation5] sm:$0xff]
        %v768 = vld [vmem:[#allocation5 + $0x8] sm:$0xff]
        %770 = vset.pattern.permute.xlu0 0
        %771 = vperm.xlu0 %770, %v733
        %v772 = vpop.permute.xlu0 %771
        %775 = vset.pattern.permute.xlu0 0
        %776 = vperm.xlu0 %775, %v735
        %v777 = vpop.permute.xlu0 %776
        %v779 = vmul.f32 %v772, %v767
        %v780 = vmul.f32 %v777, %v768
        %v781 = vpack.c.bf16 %v751, %v749
        %v782 = vld [vmem:[%s525] sm:$0xf]
        %v783 = vld [vmem:[%s525 + $0x4] sm:$0xf]
        %v786 = vunpack.c.l.b16 %v782
        %v787 = vunpack.c.l.b16 %v783
        %v788 = vpack.c.b16 %v787, %v786
        %v791 = vsel %vm721, %v781, 0
        %793 = vmatprep.subr.bf16.mxu0 0
        %794 = vmatpush1.bf16.msra.mxu0 0
        %795 = vmatprep.subr.bf16.mxu0 0
        %796 = vmatpush1.bf16.msra.mxu0 0
        %797 = vmatprep.subr.bf16.mxu0 0
        %798 = vmatpush1.bf16.msra.mxu0 0
        %799 = vmatprep.subr.bf16.mxu0 0
        %800 = vmatpush1.bf16.msra.mxu0 0
        %801 = vmatprep.subr.bf16.mxu0 0
        %802 = vmatpush1.bf16.msra.mxu0 0
        %803 = vmatprep.subr.bf16.mxu0 0
        %804 = vmatpush1.bf16.msra.mxu0 0
        %805 = vmatprep.subr.bf16.mxu0 0
        %806 = vmatpush1.bf16.msra.mxu0 0
        %807 = vmatprep.subr.bf16.mxu0 0
        %808 = vmatpush1.bf16.msra.mxu0 %v788
        %809 = vmatprep.subr.bf16.mxu0 0
        %810 = vmatpush2.bf16.msra.mxu0 0
        %811 = vmatprep.subr.bf16.mxu0 0
        %812 = vmatpush2.bf16.msra.mxu0 0
        %813 = vmatprep.subr.bf16.mxu0 0
        %814 = vmatpush2.bf16.msra.mxu0 0
        %815 = vmatprep.subr.bf16.mxu0 0
        %816 = vmatpush2.bf16.msra.mxu0 0
        %817 = vmatprep.subr.bf16.mxu0 0
        %818 = vmatpush2.bf16.msra.mxu0 0
        %819 = vmatprep.subr.bf16.mxu0 0
        %820 = vmatpush2.bf16.msra.mxu0 0
        %821 = vmatprep.subr.bf16.mxu0 0
        %822 = vmatpush2.bf16.msra.mxu0 0
        %823 = vmatprep.subr.bf16.mxu0 0
        %824 = vmatpush2.bf16.msra.mxu0 0
        %825 = vmatprep.mubr.bf16.mxu0 0
        %826 = vmatmul.mubr.bf16.gmra.mxu0 %v791
        %v827 = vpop.f32.mrf.mxu0
        %v828 = vadd.f32 0.0, %v827
        %v829 = vpop.f32.mrf.mxu0
        %v830 = vpop.f32.mrf.mxu0
        %v831 = vadd.f32 0.0, %v830
        %v832 = vpop.f32.mrf.mxu0
        %833 = vdwg.mxu0
        %v834 = vadd.f32 %v779, %v828
        %v835 = vadd.f32 %v780, %v831
        %836 = vst [vmem:[#allocation5] sm:$0xff] %v834
        %837 = vst [vmem:[#allocation5 + $0x8] sm:$0xff] %v835
        %838 = vst.msk [vmem:[#allocation3] sm:$0xff] %vm764, %v728
        %839 = vst.msk [vmem:[#allocation3 + $0x8] sm:$0xff] %vm764, %v729
        // Predicated region
        $region176: #{multi_head_attention.4} parent=158 // pred_check
          %p840 = pneg %p612
        $region177: #{multi_head_attention.4} parent=158 // pred_check_branch
          %842 = sbr.rel (%p840) target = $region179
        $region178: #{multi_head_attention.4} parent=158 // pred_region
          %v843 = vld [vmem:[#allocation5] sm:$0xff]
          %v844 = vld [vmem:[#allocation5 + $0x8] sm:$0xff]
          %v845 = vld [vmem:[#allocation4] sm:$0xff]
          %v846 = vld [vmem:[#allocation4 + $0x8] sm:$0xff]
          %v847 = vrcp.pop %v845
          %v848 = vrcp.pop %v846
          %850 = vset.pattern.permute.xlu0 0
          %851 = vperm.xlu0 %850, %v847
          %v852 = vpop.permute.xlu0 %851
          %855 = vset.pattern.permute.xlu0 0
          %856 = vperm.xlu0 %855, %v848
          %v857 = vpop.permute.xlu0 %856
          %v859 = vmul.f32 %v843, %v852
          %v860 = vmul.f32 %v844, %v857
          %v861 = vpack.c.bf16 %v860, %v859
          %v863 = vunpack.c.l.b16 %v861
          %v864 = vunpack.c.h.b16 %v861
          %v865 = vpack.c.b16 %v863, %v863
          %v866 = vpack.c.b16 %v864, %v864
          %869 = vst [vmem:[%s580] sm:$0xf] %v865
          %870 = vst [vmem:[%s580 + $0x4] sm:$0xf] %v866
        $region179: #{multi_head_attention.4} parent=158 // pred_fallthru
          _
        %s871 = sand.u32 %s254, 1
        %s872 = sand.u32 %s254, 1
        %s873 = smul.addr %s872, 8
        %s874 = scalar_lea.vmem [#allocation9], %s873
        // Predicated region
        $region180: #{multi_head_attention.4} parent=158 // pred_check
          %p875 = pneg %p264
        $region181: #{multi_head_attention.4} parent=158 // pred_check_branch
          %877 = sbr.rel (%p875) target = $region183
        $region182: #{multi_head_attention.4} parent=158 // pred_region
          %s878 = smul.u32 2, %s26
          %s879 = smul.addr %s878, 4
          %s880 = sadd.s32 %s25, %s879
          %s881 = smul.addr %s24, 8
          %s882 = sadd.s32 %s880, %s881
          %s883 = smul.addr %s882, 4
          %s884 = scalar_lea.vmem %s7, %s883
          // Predicated region
          $region184: #{multi_head_attention.4} parent=182 // pred_check
            _
          $region185: #{multi_head_attention.4} parent=182 // pred_check_branch
            %886 = sbr.rel (0) target = $region187
          $region186: #{multi_head_attention.4} parent=182 // pred_region
            // Predicated region
            $region188: #{multi_head_attention.4} parent=186 // pred_check
              _
            $region189: #{multi_head_attention.4} parent=186 // pred_check_branch
              %888 = sbr.rel target = $region191
            $region190: #{multi_head_attention.4} parent=186 // pred_region
              // Predicated region
              $region203: #{multi_head_attention.4} parent=190 // pred_check
                _
              $region204: #{multi_head_attention.4} parent=190 // pred_check_branch
                %906 = sbr.rel (0) target = $region206
              $region205: #{multi_head_attention.4} parent=190 // pred_region
                loop: start=0, step=1, limit=1
                $region207: #{multi_head_attention.4} parent=205 // loop_pre_header
                  _
                $region208: #{multi_head_attention.4} parent=205 // loop_header
                  %s908 = sphi 0, %s912
                  %p909 = scmp.ge.s32.totalorder %s908, 1
                  %s913 = sphi %s874, %s874
                  %s914 = sphi %s884, %s884
                $region209: #{multi_head_attention.4} parent=205 // loop_header_branch
                  %911 = sbr.rel (%p909) target = $region213
                $region210: #{multi_head_attention.4} parent=205 // loop_body
                  _
                $region211: #{multi_head_attention.4} parent=205 // loop_footer
                  %s912 = sadd.s32 1, %s908
                $region212: #{multi_head_attention.4} parent=205 // loop_footer_branch
                  %907 = sbr.rel target = $region208
                $region213: #{multi_head_attention.4} parent=205 // loop_exit
                  _
                %s916 = ssub.s32 16, 1
                loop: start=0, step=1, limit=1
                $region214: #{multi_head_attention.4} parent=205 // loop_pre_header
                  _
                $region215: #{multi_head_attention.4} parent=205 // loop_header
                  %s918 = sphi 0, %s922
                  %p919 = scmp.ge.s32.totalorder %s918, 1
                  %s923 = sphi %s874, %s874
                  %s924 = sphi %s884, %s884
                $region216: #{multi_head_attention.4} parent=205 // loop_header_branch
                  %921 = sbr.rel (%p919) target = $region220
                $region217: #{multi_head_attention.4} parent=205 // loop_body
                  %v925 = vld [vmem:[%s923] sm:%s916]
                  %926 = vst [vmem:[%s924] sm:%s916] %v925
                  %v927 = vld [vmem:[%s923 + $0x4] sm:%s916]
                  %928 = vst [vmem:[%s924 + $0x10] sm:%s916] %v927
                $region218: #{multi_head_attention.4} parent=205 // loop_footer
                  %s922 = sadd.s32 1, %s918
                $region219: #{multi_head_attention.4} parent=205 // loop_footer_branch
                  %917 = sbr.rel target = $region215
                $region220: #{multi_head_attention.4} parent=205 // loop_exit
                  _
              $region206: #{multi_head_attention.4} parent=190 // pred_fallthru
                _
            $region191: #{multi_head_attention.4} parent=186 // pred_fallthru
              _
            // Predicated region
            $region192: #{multi_head_attention.4} parent=186 // pred_check
              _
            $region193: #{multi_head_attention.4} parent=186 // pred_check_branch
              %890 = sbr.rel (0) target = $region195
            $region194: #{multi_head_attention.4} parent=186 // pred_region
              %s892 = ssub.s32 16, 1
              loop: start=0, step=1, limit=1
              $region196: #{multi_head_attention.4} parent=194 // loop_pre_header
                _
              $region197: #{multi_head_attention.4} parent=194 // loop_header
                %s894 = sphi 0, %s898
                %p895 = scmp.ge.s32.totalorder %s894, 1
                %s899 = sphi %s874, %s874
                %s900 = sphi %s884, %s884
              $region198: #{multi_head_attention.4} parent=194 // loop_header_branch
                %897 = sbr.rel (%p895) target = $region202
              $region199: #{multi_head_attention.4} parent=194 // loop_body
                %v901 = vld [vmem:[%s899] sm:%s892]
                %902 = vst [vmem:[%s900] sm:%s892] %v901
                %v903 = vld [vmem:[%s899 + $0x4] sm:%s892]
                %904 = vst [vmem:[%s900 + $0x10] sm:%s892] %v903
              $region200: #{multi_head_attention.4} parent=194 // loop_footer
                %s898 = sadd.s32 1, %s894
              $region201: #{multi_head_attention.4} parent=194 // loop_footer_branch
                %893 = sbr.rel target = $region197
              $region202: #{multi_head_attention.4} parent=194 // loop_exit
                _
            $region195: #{multi_head_attention.4} parent=186 // pred_fallthru
              _
          $region187: #{multi_head_attention.4} parent=182 // pred_fallthru
            _
          %929 = vnop
        $region183: #{multi_head_attention.4} parent=158 // pred_fallthru
          _
      $region159: #{multi_head_attention.4} parent=5 // pred_fallthru
        _
      %p930 = scmp.le.s32.totalorder 2, %s13
      // Predicated region
      $region221: #{multi_head_attention.4} parent=5 // pred_check
        %p931 = pneg %p930
      $region222: #{multi_head_attention.4} parent=5 // pred_check_branch
        %933 = sbr.rel (%p931) target = $region224
      $region223: #{multi_head_attention.4} parent=5 // pred_region
        %s934 = ssub.s32 %s13, 2
        // Predicated region
        $region225: #{multi_head_attention.4} parent=223 // pred_check
          %p935 = pneg %p270
        $region226: #{multi_head_attention.4} parent=223 // pred_check_branch
          %937 = sbr.rel (%p935) target = $region228
        $region227: #{multi_head_attention.4} parent=223 // pred_region
          %s938 = sand.u32 %s255, 1
          %s939 = sand.u32 %s255, 1
          %s940 = smul.addr %s939, 8
          %s941 = scalar_lea.vmem [#allocation9], %s940
        $region228: #{multi_head_attention.4} parent=223 // pred_fallthru
          _
      $region224: #{multi_head_attention.4} parent=5 // pred_fallthru
        _
    $region6: #{multi_head_attention.4} parent=1 // loop_footer
      %s17 = sadd.s32 1, %s13
    $region7: #{multi_head_attention.4} parent=1 // loop_footer_branch
      %12 = sbr.rel target = $region3
    $region8: #{multi_head_attention.4} parent=1 // loop_exit
      _

// kernel: multi_head_attention.3
$region0: #{multi_head_attention.3}
  #allocation0 [shape = 'u32[]', space=smem, size = 0x4, offset = 0x4, fixed_abs, tag = 'smem constant byte address 0x4 - core index']
  #allocation1 [shape = 'u32[144,128]{1,0:T(1,128)}', space=vmem, size = 0x12000, scoped, tag = 'internal scratch']
  #allocation2 [shape = 'f32[32,512]{1,0:T(8,128)}', space=vmem, size = 0x10000, scoped, tag = 'scratch operand']
  %s0 = inlined_call_operand.vmem [shape: bf16[32,512], index: 0, kind: input, shape index: {}]
  %s1 = inlined_call_operand.hbm [shape: bf16[512,1536], index: 1, kind: input, shape index: {}]
  %s2 = inlined_call_operand.vmem [shape: bf16[32,1536], index: 2, kind: output, shape index: {}]
  %s3 = sld [smem:[#allocation0]]
  $region72: #{multi_head_attention.3} parent=0
    _
  %s5 = ssub.s32 1, %s3
  %s6 = scalar_select 0, %s5, %s3
  $region1: #{multi_head_attention.3} parent=0
    #allocation3 [shape = 'u8[1048576]{0}', space=vmem, size = 0x100000, scoped, tag = 'input window, operand 1']
    #allocation4 [shape = 's32[2]{0}', space=sflag, size = 0x8, scoped, tag = 'scoped memory for multi_head_attention.3']
    #allocation5 [shape = 'u8[65536]{0}', space=vmem, size = 0x10000, scoped, tag = 'output window, operand 0']
    %7 = vsyncpa [#allocation4], 0
    %s8 = scalar_lea.sflag [#allocation4], 1
    %9 = vsyncpa %s8, 0
    loop: start=0, step=1, limit=5
    $region2: #{multi_head_attention.3} parent=1 // loop_pre_header
      _
    $region3: #{multi_head_attention.3} parent=1 // loop_header
      %s11 = sphi 0, %s15
      %p12 = scmp.ge.s32.totalorder %s11, 5
      %s18 = sphi 0, %s37
      %s19 = sphi 0, %s33
      %s20 = sphi 0, %s29
      %s21 = sphi 0, %s18
      %s22 = sphi 0, %s19
      %s23 = sphi 0, %s20
      %s24 = sphi 0, %s21
      %s25 = sphi 0, %s22
      %s26 = sphi 0, %s23
      %s42 = sphi 0, %s44
      %s45 = sphi 0, %s42
      %s46 = sphi 0, %s45
      %s62 = sphi 0, %s46
      %s70 = sphi 0, %s72
      %s73 = sphi 0, %s70
      %s74 = sphi 0, %s73
      %s90 = sphi 0, %s74
      %s98 = sphi 0, %s100
      %s101 = sphi 0, %s98
      %s102 = sphi 0, %s101
      %s118 = sphi 0, %s102
    $region4: #{multi_head_attention.3} parent=1 // loop_header_branch
      %14 = sbr.rel (%p12) target = $region8
    $region5: #{multi_head_attention.3} parent=1 // loop_body
      %s16 = ssub.s32 %s11, 1
      %s17 = ssub.s32 %s11, 2
      %s27 = sadd.s32 1, %s20
      %p28 = scmp.ge.s32.totalorder %s27, 1
      %s29 = scalar_select %p28, 0, %s27
      %s30 = sadd.s32 1, %s19
      %s31 = scalar_select %p28, %s30, %s19
      %p32 = scmp.ge.s32.totalorder %s31, 3
      %s33 = scalar_select %p32, 0, %s31
      %s34 = sadd.s32 1, %s18
      %s35 = scalar_select %p32, %s34, %s18
      %p36 = scmp.ge.s32.totalorder %s35, 1
      %s37 = scalar_select %p36, 0, %s35
      %s38 = ssub.s32 %s18, %s37
      %s39 = ssub.s32 %s20, %s29
      %s40 = sor.u32 %s38, %s39
      %p41 = scmp.eq.s32.totalorder %s40, 0
      %s43 = sadd.s32 %s42, 1
      %s44 = scalar_select %p41, %s42, %s43
      %p47 = pneg %p41
      %p48 = scmp.eq.s32.totalorder %s11, 2
      %p49 = por %p47, %p48
      %p50 = scmp.ne.s32.totalorder %s42, %s45
      %p51 = scmp.eq.s32.totalorder %s11, 0
      %p52 = por %p50, %p51
      %p53 = scmp.ne.s32.totalorder %s42, %s45
      %p54 = scmp.eq.s32.totalorder %s16, 2
      %p55 = por %p53, %p54
      %p56 = scmp.ne.s32.totalorder %s45, %s46
      %p57 = scmp.eq.s32.totalorder %s16, 0
      %p58 = por %p56, %p57
      %p59 = scmp.ne.s32.totalorder %s45, %s46
      %p60 = scmp.eq.s32.totalorder %s17, 2
      %p61 = por %p59, %p60
      %p63 = scmp.ne.s32.totalorder %s46, %s62
      %p64 = scmp.eq.s32.totalorder %s17, 0
      %p65 = por %p63, %p64
      %s66 = ssub.s32 %s20, %s29
      %s67 = ssub.s32 %s19, %s33
      %s68 = sor.u32 %s66, %s67
      %p69 = scmp.eq.s32.totalorder %s68, 0
      %s71 = sadd.s32 %s70, 1
      %s72 = scalar_select %p69, %s70, %s71
      %p75 = pneg %p69
      %p76 = scmp.eq.s32.totalorder %s11, 2
      %p77 = por %p75, %p76
      %p78 = scmp.ne.s32.totalorder %s70, %s73
      %p79 = scmp.eq.s32.totalorder %s11, 0
      %p80 = por %p78, %p79
      %p81 = scmp.ne.s32.totalorder %s70, %s73
      %p82 = scmp.eq.s32.totalorder %s16, 2
      %p83 = por %p81, %p82
      %p84 = scmp.ne.s32.totalorder %s73, %s74
      %p85 = scmp.eq.s32.totalorder %s16, 0
      %p86 = por %p84, %p85
      %p87 = scmp.ne.s32.totalorder %s73, %s74
      %p88 = scmp.eq.s32.totalorder %s17, 2
      %p89 = por %p87, %p88
      %p91 = scmp.ne.s32.totalorder %s74, %s90
      %p92 = scmp.eq.s32.totalorder %s17, 0
      %p93 = por %p91, %p92
      %s94 = ssub.s32 %s18, %s37
      %s95 = ssub.s32 %s19, %s33
      %s96 = sor.u32 %s94, %s95
      %p97 = scmp.eq.s32.totalorder %s96, 0
      %s99 = sadd.s32 %s98, 1
      %s100 = scalar_select %p97, %s98, %s99
      %p103 = pneg %p97
      %p104 = scmp.eq.s32.totalorder %s11, 2
      %p105 = por %p103, %p104
      %p106 = scmp.ne.s32.totalorder %s98, %s101
      %p107 = scmp.eq.s32.totalorder %s11, 0
      %p108 = por %p106, %p107
      %p109 = scmp.ne.s32.totalorder %s98, %s101
      %p110 = scmp.eq.s32.totalorder %s16, 2
      %p111 = por %p109, %p110
      %p112 = scmp.ne.s32.totalorder %s101, %s102
      %p113 = scmp.eq.s32.totalorder %s16, 0
      %p114 = por %p112, %p113
      %p115 = scmp.ne.s32.totalorder %s101, %s102
      %p116 = scmp.eq.s32.totalorder %s17, 2
      %p117 = por %p115, %p116
      %p119 = scmp.ne.s32.totalorder %s102, %s118
      %p120 = scmp.eq.s32.totalorder %s17, 0
      %p121 = por %p119, %p120
      %p122 = scmp.le.s32.totalorder 1, %s11
      %p123 = scmp.lt.s32.totalorder %s11, 4
      %p124 = pnand %p122, %p123
      %p125 = pneg %p124
      // Predicated region
      $region9: #{multi_head_attention.3} parent=5 // pred_check
        _
      $region10: #{multi_head_attention.3} parent=5 // pred_check_branch
        %127 = sbr.rel (%p124) target = $region12
      $region11: #{multi_head_attention.3} parent=5 // pred_region
        %s128 = ssub.s32 %s11, 1
        // Predicated region
        $region13: #{multi_head_attention.3} parent=11 // pred_check
          %p129 = pneg %p58
        $region14: #{multi_head_attention.3} parent=11 // pred_check_branch
          %131 = sbr.rel (%p129) target = $region16
        $region15: #{multi_head_attention.3} parent=11 // pred_region
          %s132 = smul.u32 4, %s21
          %s133 = smul.u32 4, %s23
          %p134 = scmp.lt.s32.totalorder %s132, 3
          %s135 = scalar_select %p134, %s132, 3
          %p136 = scmp.lt.s32.totalorder %s133, 3
          %s137 = scalar_select %p136, %s133, 3
          %s138 = smul.addr %s135, 4
          %s139 = sadd.s32 %s137, %s138
          %s140 = smul.addr %s139, 4
          %s141 = scalar_lea.vmem %s0, %s140
          %s142 = smul.u32 4, %s21
          %s143 = smul.u32 4, %s23
        $region16: #{multi_head_attention.3} parent=11 // pred_fallthru
          _
      $region12: #{multi_head_attention.3} parent=5 // pred_fallthru
        _
      %p144 = scmp.lt.s32.totalorder %s11, 3
      // Predicated region
      $region17: #{multi_head_attention.3} parent=5 // pred_check
        %p145 = pneg %p144
      $region18: #{multi_head_attention.3} parent=5 // pred_check_branch
        %147 = sbr.rel (%p145) target = $region20
      $region19: #{multi_head_attention.3} parent=5 // pred_region
        // Predicated region
        $region21: #{multi_head_attention.3} parent=19 // pred_check
          %p148 = pneg %p80
        $region22: #{multi_head_attention.3} parent=19 // pred_check_branch
          %150 = sbr.rel (%p148) target = $region24
        $region23: #{multi_head_attention.3} parent=19 // pred_region
          %s151 = sand.u32 %s70, 1
          %s152 = scalar_lea.sflag [#allocation4], %s151
          %s153 = sand.u32 %s70, 1
          %s154 = smul.addr %s153, 1024
          %s155 = scalar_lea.vmem [#allocation3], %s154
          %s156 = smul.u32 64, %s20
          %s157 = smul.u32 4, %s19
          %s159 = ssub.s32 16384, 16384
          %160 = vsyncadd %s152, %s159
          %s161 = smul.addr %s156, 12
          %s162 = sadd.s32 %s157, %s161
          %s163 = smul.addr %s162, 64
          %s164 = scalar_lea.hbm %s1, %s163
          %s165 = sshll.u32 %s155, 4
          %s166 = int_to_ptr.vmem [resolvable:$true] %s165
          %171 = dma.hbm_to_vmem [thread:$0]  %s164, 16384, %s166, %s152, 768, 256, 16
        $region24: #{multi_head_attention.3} parent=19 // pred_fallthru
          _
      $region20: #{multi_head_attention.3} parent=5 // pred_fallthru
        _
      %p172 = scmp.le.s32.totalorder 1, %s11
      %p173 = scmp.lt.s32.totalorder %s11, 4
      %p174 = pnand %p172, %p173
      %p175 = pneg %p174
      // Predicated region
      $region25: #{multi_head_attention.3} parent=5 // pred_check
        _
      $region26: #{multi_head_attention.3} parent=5 // pred_check_branch
        %177 = sbr.rel (%p174) target = $region28
      $region27: #{multi_head_attention.3} parent=5 // pred_region
        %s178 = ssub.s32 %s11, 1
        %s179 = sand.u32 %s73, 1
        %s180 = scalar_lea.sflag [#allocation4], %s179
        %s181 = sand.u32 %s73, 1
        %s182 = smul.addr %s181, 1024
        %s183 = scalar_lea.vmem [#allocation3], %s182
        // Predicated region
        $region29: #{multi_head_attention.3} parent=27 // pred_check
          %p184 = pneg %p86
        $region30: #{multi_head_attention.3} parent=27 // pred_check_branch
          %186 = sbr.rel (%p184) target = $region32
        $region31: #{multi_head_attention.3} parent=27 // pred_region
          %187 = dma.done %s180, 16384
        $region32: #{multi_head_attention.3} parent=27 // pred_fallthru
          _
        %s188 = smul.u32 4, %s21
        %s189 = smul.u32 4, %s23
        %p190 = scmp.lt.s32.totalorder %s188, 3
        %s191 = scalar_select %p190, %s188, 3
        %p192 = scmp.lt.s32.totalorder %s189, 3
        %s193 = scalar_select %p192, %s189, 3
        %s194 = smul.addr %s191, 4
        %s195 = sadd.s32 %s193, %s194
        %s196 = smul.addr %s195, 4
        %s197 = scalar_lea.vmem %s0, %s196
        %p198 = pneg %p58
        %p199 = pneg %p55
        %s200 = sand.u32 %s73, 1
        %s201 = scalar_lea.sflag [#allocation4], %s200
        %s202 = sand.u32 %s73, 1
        %s203 = smul.addr %s202, 1024
        %s204 = scalar_lea.vmem [#allocation3], %s203
        %p205 = pneg %p86
        %p206 = pneg %p83
        %p207 = pneg %p114
        %p208 = pneg %p111
        %s209 = sand.u32 %s101, 1
        %s210 = sand.u32 %s101, 1
        %s211 = smul.addr %s210, 64
        %s212 = scalar_lea.vmem [#allocation5], %s211
        %s213 = smul.u32 4, %s21
        %s214 = smul.u32 4, %s23
        %p215 = scmp.lt.s32.totalorder %s213, 3
        %s216 = scalar_select %p215, %s213, 3
        %p217 = scmp.lt.s32.totalorder %s214, 3
        %s218 = scalar_select %p217, %s214, 3
        %s219 = smul.addr %s216, 4
        %s220 = sadd.s32 %s218, %s219
        %s221 = smul.addr %s220, 4
        %s222 = scalar_lea.vmem %s0, %s221
        %s223 = smul.u32 4, %s21
        %s224 = smul.u32 4, %s23
        %s225 = smul.u32 64, %s23
        %s226 = smul.u32 4, %s22
        %s227 = smul.u32 4, %s21
        %s228 = smul.u32 4, %s22
        %p229 = scmp.eq.s32.totalorder %s23, 0
        // Predicated region
        $region33: #{multi_head_attention.3} parent=27 // pred_check
          %p230 = pneg %p229
        $region34: #{multi_head_attention.3} parent=27 // pred_check_branch
          %232 = sbr.rel (%p230) target = $region36
        $region35: #{multi_head_attention.3} parent=27 // pred_region
          %233 = vst [vmem:[#allocation2] sm:$0xff] 0.0
          %234 = vst [vmem:[#allocation2 + $0x8] sm:$0xff] 0.0
          %235 = vst [vmem:[#allocation2 + $0x10] sm:$0xff] 0.0
          %236 = vst [vmem:[#allocation2 + $0x18] sm:$0xff] 0.0
          %237 = vst [vmem:[#allocation2 + $0x20] sm:$0xff] 0.0
          %238 = vst [vmem:[#allocation2 + $0x28] sm:$0xff] 0.0
          %239 = vst [vmem:[#allocation2 + $0x30] sm:$0xff] 0.0
          %240 = vst [vmem:[#allocation2 + $0x38] sm:$0xff] 0.0
          %241 = vst [vmem:[#allocation2 + $0x40] sm:$0xff] 0.0
          %242 = vst [vmem:[#allocation2 + $0x48] sm:$0xff] 0.0
          %243 = vst [vmem:[#allocation2 + $0x50] sm:$0xff] 0.0
          %244 = vst [vmem:[#allocation2 + $0x58] sm:$0xff] 0.0
          %245 = vst [vmem:[#allocation2 + $0x60] sm:$0xff] 0.0
          %246 = vst [vmem:[#allocation2 + $0x68] sm:$0xff] 0.0
          %247 = vst [vmem:[#allocation2 + $0x70] sm:$0xff] 0.0
          %248 = vst [vmem:[#allocation2 + $0x78] sm:$0xff] 0.0
        $region36: #{multi_head_attention.3} parent=27 // pred_fallthru
          _
        %v249 = vld [vmem:[%s222] sm:$0xff]
        %v250 = vld [vmem:[%s222 + $0x8] sm:$0xff]
        %v251 = vld [vmem:[%s222 + $0x10] sm:$0xff]
        %v252 = vld [vmem:[%s222 + $0x18] sm:$0xff]
        %v253 = vld [vmem:[%s222 + $0x20] sm:$0xff]
        %v254 = vld [vmem:[%s222 + $0x28] sm:$0xff]
        %v255 = vld [vmem:[%s222 + $0x30] sm:$0xff]
        %v256 = vld [vmem:[%s222 + $0x38] sm:$0xff]
        %v257 = vld [vmem:[#allocation2] sm:$0xff]
        %v258 = vld [vmem:[#allocation2 + $0x8] sm:$0xff]
        %v259 = vld [vmem:[#allocation2 + $0x10] sm:$0xff]
        %v260 = vld [vmem:[#allocation2 + $0x18] sm:$0xff]
        %v261 = vld [vmem:[#allocation2 + $0x20] sm:$0xff]
        %v262 = vld [vmem:[#allocation2 + $0x28] sm:$0xff]
        %v263 = vld [vmem:[#allocation2 + $0x30] sm:$0xff]
        %v264 = vld [vmem:[#allocation2 + $0x38] sm:$0xff]
        %v265 = vld [vmem:[#allocation2 + $0x40] sm:$0xff]
        %v266 = vld [vmem:[#allocation2 + $0x48] sm:$0xff]
        %v267 = vld [vmem:[#allocation2 + $0x50] sm:$0xff]
        %v268 = vld [vmem:[#allocation2 + $0x58] sm:$0xff]
        %v269 = vld [vmem:[#allocation2 + $0x60] sm:$0xff]
        %v270 = vld [vmem:[#allocation2 + $0x68] sm:$0xff]
        %v271 = vld [vmem:[#allocation2 + $0x70] sm:$0xff]
        %v272 = vld [vmem:[#allocation2 + $0x78] sm:$0xff]
        %v273 = vld [vmem:[%s183] sm:$0xff]
        %v274 = vld [vmem:[%s183 + $0x8] sm:$0xff]
        %v275 = vld [vmem:[%s183 + $0x10] sm:$0xff]
        %v276 = vld [vmem:[%s183 + $0x18] sm:$0xff]
        %v277 = vld [vmem:[%s183 + $0x20] sm:$0xff]
        %v278 = vld [vmem:[%s183 + $0x28] sm:$0xff]
        %v279 = vld [vmem:[%s183 + $0x30] sm:$0xff]
        %v280 = vld [vmem:[%s183 + $0x38] sm:$0xff]
        %v281 = vld [vmem:[%s183 + $0x40] sm:$0xff]
        %v282 = vld [vmem:[%s183 + $0x48] sm:$0xff]
        %v283 = vld [vmem:[%s183 + $0x50] sm:$0xff]
        %v284 = vld [vmem:[%s183 + $0x58] sm:$0xff]
        %v285 = vld [vmem:[%s183 + $0x60] sm:$0xff]
        %v286 = vld [vmem:[%s183 + $0x68] sm:$0xff]
        %v287 = vld [vmem:[%s183 + $0x70] sm:$0xff]
        %v288 = vld [vmem:[%s183 + $0x78] sm:$0xff]
        %v289 = vld [vmem:[%s183 + $0x80] sm:$0xff]
        %v290 = vld [vmem:[%s183 + $0x88] sm:$0xff]
        %v291 = vld [vmem:[%s183 + $0x90] sm:$0xff]
        %v292 = vld [vmem:[%s183 + $0x98] sm:$0xff]
        %v293 = vld [vmem:[%s183 + $0xa0] sm:$0xff]
        %v294 = vld [vmem:[%s183 + $0xa8] sm:$0xff]
        %v295 = vld [vmem:[%s183 + $0xb0] sm:$0xff]
        %v296 = vld [vmem:[%s183 + $0xb8] sm:$0xff]
        %v297 = vld [vmem:[%s183 + $0xc0] sm:$0xff]
        %v298 = vld [vmem:[%s183 + $0xc8] sm:$0xff]
        %v299 = vld [vmem:[%s183 + $0xd0] sm:$0xff]
        %v300 = vld [vmem:[%s183 + $0xd8] sm:$0xff]
        %v301 = vld [vmem:[%s183 + $0xe0] sm:$0xff]
        %v302 = vld [vmem:[%s183 + $0xe8] sm:$0xff]
        %v303 = vld [vmem:[%s183 + $0xf0] sm:$0xff]
        %v304 = vld [vmem:[%s183 + $0xf8] sm:$0xff]
        %v305 = vld [vmem:[%s183 + $0x100] sm:$0xff]
        %v306 = vld [vmem:[%s183 + $0x108] sm:$0xff]
        %v307 = vld [vmem:[%s183 + $0x110] sm:$0xff]
        %v308 = vld [vmem:[%s183 + $0x118] sm:$0xff]
        %v309 = vld [vmem:[%s183 + $0x120] sm:$0xff]
        %v310 = vld [vmem:[%s183 + $0x128] sm:$0xff]
        %v311 = vld [vmem:[%s183 + $0x130] sm:$0xff]
        %v312 = vld [vmem:[%s183 + $0x138] sm:$0xff]
        %v313 = vld [vmem:[%s183 + $0x140] sm:$0xff]
        %v314 = vld [vmem:[%s183 + $0x148] sm:$0xff]
        %v315 = vld [vmem:[%s183 + $0x150] sm:$0xff]
        %v316 = vld [vmem:[%s183 + $0x158] sm:$0xff]
        %v317 = vld [vmem:[%s183 + $0x160] sm:$0xff]
        %v318 = vld [vmem:[%s183 + $0x168] sm:$0xff]
        %v319 = vld [vmem:[%s183 + $0x170] sm:$0xff]
        %v320 = vld [vmem:[%s183 + $0x178] sm:$0xff]
        %v321 = vld [vmem:[%s183 + $0x180] sm:$0xff]
        %v322 = vld [vmem:[%s183 + $0x188] sm:$0xff]
        %v323 = vld [vmem:[%s183 + $0x190] sm:$0xff]
        %v324 = vld [vmem:[%s183 + $0x198] sm:$0xff]
        %v325 = vld [vmem:[%s183 + $0x1a0] sm:$0xff]
        %v326 = vld [vmem:[%s183 + $0x1a8] sm:$0xff]
        %v327 = vld [vmem:[%s183 + $0x1b0] sm:$0xff]
        %v328 = vld [vmem:[%s183 + $0x1b8] sm:$0xff]
        %v329 = vld [vmem:[%s183 + $0x1c0] sm:$0xff]
        %v330 = vld [vmem:[%s183 + $0x1c8] sm:$0xff]
        %v331 = vld [vmem:[%s183 + $0x1d0] sm:$0xff]
        %v332 = vld [vmem:[%s183 + $0x1d8] sm:$0xff]
        %v333 = vld [vmem:[%s183 + $0x1e0] sm:$0xff]
        %v334 = vld [vmem:[%s183 + $0x1e8] sm:$0xff]
        %v335 = vld [vmem:[%s183 + $0x1f0] sm:$0xff]
        %v336 = vld [vmem:[%s183 + $0x1f8] sm:$0xff]
        %v337 = vld [vmem:[%s183 + $0x200] sm:$0xff]
        %v338 = vld [vmem:[%s183 + $0x208] sm:$0xff]
        %v339 = vld [vmem:[%s183 + $0x210] sm:$0xff]
        %v340 = vld [vmem:[%s183 + $0x218] sm:$0xff]
        %v341 = vld [vmem:[%s183 + $0x220] sm:$0xff]
        %v342 = vld [vmem:[%s183 + $0x228] sm:$0xff]
        %v343 = vld [vmem:[%s183 + $0x230] sm:$0xff]
        %v344 = vld [vmem:[%s183 + $0x238] sm:$0xff]
        %v345 = vld [vmem:[%s183 + $0x240] sm:$0xff]
        %v346 = vld [vmem:[%s183 + $0x248] sm:$0xff]
        %v347 = vld [vmem:[%s183 + $0x250] sm:$0xff]
        %v348 = vld [vmem:[%s183 + $0x258] sm:$0xff]
        %v349 = vld [vmem:[%s183 + $0x260] sm:$0xff]
        %v350 = vld [vmem:[%s183 + $0x268] sm:$0xff]
        %v351 = vld [vmem:[%s183 + $0x270] sm:$0xff]
        %v352 = vld [vmem:[%s183 + $0x278] sm:$0xff]
        %v353 = vld [vmem:[%s183 + $0x280] sm:$0xff]
        %v354 = vld [vmem:[%s183 + $0x288] sm:$0xff]
        %v355 = vld [vmem:[%s183 + $0x290] sm:$0xff]
        %v356 = vld [vmem:[%s183 + $0x298] sm:$0xff]
        %v357 = vld [vmem:[%s183 + $0x2a0] sm:$0xff]
        %v358 = vld [vmem:[%s183 + $0x2a8] sm:$0xff]
        %v359 = vld [vmem:[%s183 + $0x2b0] sm:$0xff]
        %v360 = vld [vmem:[%s183 + $0x2b8] sm:$0xff]
        %v361 = vld [vmem:[%s183 + $0x2c0] sm:$0xff]
        %v362 = vld [vmem:[%s183 + $0x2c8] sm:$0xff]
        %v363 = vld [vmem:[%s183 + $0x2d0] sm:$0xff]
        %v364 = vld [vmem:[%s183 + $0x2d8] sm:$0xff]
        %v365 = vld [vmem:[%s183 + $0x2e0] sm:$0xff]
        %v366 = vld [vmem:[%s183 + $0x2e8] sm:$0xff]
        %v367 = vld [vmem:[%s183 + $0x2f0] sm:$0xff]
        %v368 = vld [vmem:[%s183 + $0x2f8] sm:$0xff]
        %v369 = vld [vmem:[%s183 + $0x300] sm:$0xff]
        %v370 = vld [vmem:[%s183 + $0x308] sm:$0xff]
        %v371 = vld [vmem:[%s183 + $0x310] sm:$0xff]
        %v372 = vld [vmem:[%s183 + $0x318] sm:$0xff]
        %v373 = vld [vmem:[%s183 + $0x320] sm:$0xff]
        %v374 = vld [vmem:[%s183 + $0x328] sm:$0xff]
        %v375 = vld [vmem:[%s183 + $0x330] sm:$0xff]
        %v376 = vld [vmem:[%s183 + $0x338] sm:$0xff]
        %v377 = vld [vmem:[%s183 + $0x340] sm:$0xff]
        %v378 = vld [vmem:[%s183 + $0x348] sm:$0xff]
        %v379 = vld [vmem:[%s183 + $0x350] sm:$0xff]
        %v380 = vld [vmem:[%s183 + $0x358] sm:$0xff]
        %v381 = vld [vmem:[%s183 + $0x360] sm:$0xff]
        %v382 = vld [vmem:[%s183 + $0x368] sm:$0xff]
        %v383 = vld [vmem:[%s183 + $0x370] sm:$0xff]
        %v384 = vld [vmem:[%s183 + $0x378] sm:$0xff]
        %v385 = vld [vmem:[%s183 + $0x380] sm:$0xff]
        %v386 = vld [vmem:[%s183 + $0x388] sm:$0xff]
        %v387 = vld [vmem:[%s183 + $0x390] sm:$0xff]
        %v388 = vld [vmem:[%s183 + $0x398] sm:$0xff]
        %v389 = vld [vmem:[%s183 + $0x3a0] sm:$0xff]
        %v390 = vld [vmem:[%s183 + $0x3a8] sm:$0xff]
        %v391 = vld [vmem:[%s183 + $0x3b0] sm:$0xff]
        %v392 = vld [vmem:[%s183 + $0x3b8] sm:$0xff]
        %v393 = vld [vmem:[%s183 + $0x3c0] sm:$0xff]
        %v394 = vld [vmem:[%s183 + $0x3c8] sm:$0xff]
        %v395 = vld [vmem:[%s183 + $0x3d0] sm:$0xff]
        %v396 = vld [vmem:[%s183 + $0x3d8] sm:$0xff]
        %v397 = vld [vmem:[%s183 + $0x3e0] sm:$0xff]
        %v398 = vld [vmem:[%s183 + $0x3e8] sm:$0xff]
        %v399 = vld [vmem:[%s183 + $0x3f0] sm:$0xff]
        %v400 = vld [vmem:[%s183 + $0x3f8] sm:$0xff]
        %v409 = vunpack.c.l.b16 %v249
        %v410 = vunpack.c.h.b16 %v249
        %v411 = vunpack.c.l.b16 %v250
        %v412 = vunpack.c.h.b16 %v250
        %v413 = vunpack.c.l.b16 %v251
        %v414 = vunpack.c.h.b16 %v251
        %v415 = vunpack.c.l.b16 %v252
        %v416 = vunpack.c.h.b16 %v252
        %v417 = vunpack.c.l.b16 %v253
        %v418 = vunpack.c.h.b16 %v253
        %v419 = vunpack.c.l.b16 %v254
        %v420 = vunpack.c.h.b16 %v254
        %v421 = vunpack.c.l.b16 %v255
        %v422 = vunpack.c.h.b16 %v255
        %v423 = vunpack.c.l.b16 %v256
        %v424 = vunpack.c.h.b16 %v256
        %v425 = vpack.c.b16 %v413, %v409
        %v426 = vpack.c.b16 %v414, %v410
        %v427 = vpack.c.b16 %v415, %v411
        %v428 = vpack.c.b16 %v416, %v412
        %v429 = vpack.c.b16 %v421, %v417
        %v430 = vpack.c.b16 %v422, %v418
        %v431 = vpack.c.b16 %v423, %v419
        %v432 = vpack.c.b16 %v424, %v420
        %v569 = vunpack.c.l.b16 %v273
        %v570 = vunpack.c.h.b16 %v273
        %v571 = vunpack.c.l.b16 %v274
        %v572 = vunpack.c.h.b16 %v274
        %v573 = vunpack.c.l.b16 %v275
        %v574 = vunpack.c.h.b16 %v275
        %v575 = vunpack.c.l.b16 %v276
        %v576 = vunpack.c.h.b16 %v276
        %v577 = vunpack.c.l.b16 %v277
        %v578 = vunpack.c.h.b16 %v277
        %v579 = vunpack.c.l.b16 %v278
        %v580 = vunpack.c.h.b16 %v278
        %v581 = vunpack.c.l.b16 %v279
        %v582 = vunpack.c.h.b16 %v279
        %v583 = vunpack.c.l.b16 %v280
        %v584 = vunpack.c.h.b16 %v280
        %v585 = vunpack.c.l.b16 %v281
        %v586 = vunpack.c.h.b16 %v281
        %v587 = vunpack.c.l.b16 %v282
        %v588 = vunpack.c.h.b16 %v282
        %v589 = vunpack.c.l.b16 %v283
        %v590 = vunpack.c.h.b16 %v283
        %v591 = vunpack.c.l.b16 %v284
        %v592 = vunpack.c.h.b16 %v284
        %v593 = vunpack.c.l.b16 %v285
        %v594 = vunpack.c.h.b16 %v285
        %v595 = vunpack.c.l.b16 %v286
        %v596 = vunpack.c.h.b16 %v286
        %v597 = vunpack.c.l.b16 %v287
        %v598 = vunpack.c.h.b16 %v287
        %v599 = vunpack.c.l.b16 %v288
        %v600 = vunpack.c.h.b16 %v288
        %v601 = vunpack.c.l.b16 %v289
        %v602 = vunpack.c.h.b16 %v289
        %v603 = vunpack.c.l.b16 %v290
        %v604 = vunpack.c.h.b16 %v290
        %v605 = vunpack.c.l.b16 %v291
        %v606 = vunpack.c.h.b16 %v291
        %v607 = vunpack.c.l.b16 %v292
        %v608 = vunpack.c.h.b16 %v292
        %v609 = vunpack.c.l.b16 %v293
        %v610 = vunpack.c.h.b16 %v293
        %v611 = vunpack.c.l.b16 %v294
        %v612 = vunpack.c.h.b16 %v294
        %v613 = vunpack.c.l.b16 %v295
        %v614 = vunpack.c.h.b16 %v295
        %v615 = vunpack.c.l.b16 %v296
        %v616 = vunpack.c.h.b16 %v296
        %v617 = vunpack.c.l.b16 %v297
        %v618 = vunpack.c.h.b16 %v297
        %v619 = vunpack.c.l.b16 %v298
        %v620 = vunpack.c.h.b16 %v298
        %v621 = vunpack.c.l.b16 %v299
        %v622 = vunpack.c.h.b16 %v299
        %v623 = vunpack.c.l.b16 %v300
        %v624 = vunpack.c.h.b16 %v300
        %v625 = vunpack.c.l.b16 %v301
        %v626 = vunpack.c.h.b16 %v301
        %v627 = vunpack.c.l.b16 %v302
        %v628 = vunpack.c.h.b16 %v302
        %v629 = vunpack.c.l.b16 %v303
        %v630 = vunpack.c.h.b16 %v303
        %v631 = vunpack.c.l.b16 %v304
        %v632 = vunpack.c.h.b16 %v304
        %v633 = vunpack.c.l.b16 %v305
        %v634 = vunpack.c.h.b16 %v305
        %v635 = vunpack.c.l.b16 %v306
        %v636 = vunpack.c.h.b16 %v306
        %v637 = vunpack.c.l.b16 %v307
        %v638 = vunpack.c.h.b16 %v307
        %v639 = vunpack.c.l.b16 %v308
        %v640 = vunpack.c.h.b16 %v308
        %v641 = vunpack.c.l.b16 %v309
        %v642 = vunpack.c.h.b16 %v309
        %v643 = vunpack.c.l.b16 %v310
        %v644 = vunpack.c.h.b16 %v310
        %v645 = vunpack.c.l.b16 %v311
        %v646 = vunpack.c.h.b16 %v311
        %v647 = vunpack.c.l.b16 %v312
        %v648 = vunpack.c.h.b16 %v312
        %v649 = vunpack.c.l.b16 %v313
        %v650 = vunpack.c.h.b16 %v313
        %v651 = vunpack.c.l.b16 %v314
        %v652 = vunpack.c.h.b16 %v314
        %v653 = vunpack.c.l.b16 %v315
        %v654 = vunpack.c.h.b16 %v315
        %v655 = vunpack.c.l.b16 %v316
        %v656 = vunpack.c.h.b16 %v316
        %v657 = vunpack.c.l.b16 %v317
        %v658 = vunpack.c.h.b16 %v317
        %v659 = vunpack.c.l.b16 %v318
        %v660 = vunpack.c.h.b16 %v318
        %v661 = vunpack.c.l.b16 %v319
        %v662 = vunpack.c.h.b16 %v319
        %v663 = vunpack.c.l.b16 %v320
        %v664 = vunpack.c.h.b16 %v320
        %v665 = vunpack.c.l.b16 %v321
        %v666 = vunpack.c.h.b16 %v321
        %v667 = vunpack.c.l.b16 %v322
        %v668 = vunpack.c.h.b16 %v322
        %v669 = vunpack.c.l.b16 %v323
        %v670 = vunpack.c.h.b16 %v323
        %v671 = vunpack.c.l.b16 %v324
        %v672 = vunpack.c.h.b16 %v324
        %v673 = vunpack.c.l.b16 %v325
        %v674 = vunpack.c.h.b16 %v325
        %v675 = vunpack.c.l.b16 %v326
        %v676 = vunpack.c.h.b16 %v326
        %v677 = vunpack.c.l.b16 %v327
        %v678 = vunpack.c.h.b16 %v327
        %v679 = vunpack.c.l.b16 %v328
        %v680 = vunpack.c.h.b16 %v328
        %v681 = vunpack.c.l.b16 %v329
        %v682 = vunpack.c.h.b16 %v329
        %v683 = vunpack.c.l.b16 %v330
        %v684 = vunpack.c.h.b16 %v330
        %v685 = vunpack.c.l.b16 %v331
        %v686 = vunpack.c.h.b16 %v331
        %v687 = vunpack.c.l.b16 %v332
        %v688 = vunpack.c.h.b16 %v332
        %v689 = vunpack.c.l.b16 %v333
        %v690 = vunpack.c.h.b16 %v333
        %v691 = vunpack.c.l.b16 %v334
        %v692 = vunpack.c.h.b16 %v334
        %v693 = vunpack.c.l.b16 %v335
        %v694 = vunpack.c.h.b16 %v335
        %v695 = vunpack.c.l.b16 %v336
        %v696 = vunpack.c.h.b16 %v336
        %v697 = vunpack.c.l.b16 %v337
        %v698 = vunpack.c.h.b16 %v337
        %v699 = vunpack.c.l.b16 %v338
        %v700 = vunpack.c.h.b16 %v338
        %v701 = vunpack.c.l.b16 %v339
        %v702 = vunpack.c.h.b16 %v339
        %v703 = vunpack.c.l.b16 %v340
        %v704 = vunpack.c.h.b16 %v340
        %v705 = vunpack.c.l.b16 %v341
        %v706 = vunpack.c.h.b16 %v341
        %v707 = vunpack.c.l.b16 %v342
        %v708 = vunpack.c.h.b16 %v342
        %v709 = vunpack.c.l.b16 %v343
        %v710 = vunpack.c.h.b16 %v343
        %v711 = vunpack.c.l.b16 %v344
        %v712 = vunpack.c.h.b16 %v344
        %v713 = vunpack.c.l.b16 %v345
        %v714 = vunpack.c.h.b16 %v345
        %v715 = vunpack.c.l.b16 %v346
        %v716 = vunpack.c.h.b16 %v346
        %v717 = vunpack.c.l.b16 %v347
        %v718 = vunpack.c.h.b16 %v347
        %v719 = vunpack.c.l.b16 %v348
        %v720 = vunpack.c.h.b16 %v348
        %v721 = vunpack.c.l.b16 %v349
        %v722 = vunpack.c.h.b16 %v349
        %v723 = vunpack.c.l.b16 %v350
        %v724 = vunpack.c.h.b16 %v350
        %v725 = vunpack.c.l.b16 %v351
        %v726 = vunpack.c.h.b16 %v351
        %v727 = vunpack.c.l.b16 %v352
        %v728 = vunpack.c.h.b16 %v352
        %v729 = vunpack.c.l.b16 %v353
        %v730 = vunpack.c.h.b16 %v353
        %v731 = vunpack.c.l.b16 %v354
        %v732 = vunpack.c.h.b16 %v354
        %v733 = vunpack.c.l.b16 %v355
        %v734 = vunpack.c.h.b16 %v355
        %v735 = vunpack.c.l.b16 %v356
        %v736 = vunpack.c.h.b16 %v356
        %v737 = vunpack.c.l.b16 %v357
        %v738 = vunpack.c.h.b16 %v357
        %v739 = vunpack.c.l.b16 %v358
        %v740 = vunpack.c.h.b16 %v358
        %v741 = vunpack.c.l.b16 %v359
        %v742 = vunpack.c.h.b16 %v359
        %v743 = vunpack.c.l.b16 %v360
        %v744 = vunpack.c.h.b16 %v360
        %v745 = vunpack.c.l.b16 %v361
        %v746 = vunpack.c.h.b16 %v361
        %v747 = vunpack.c.l.b16 %v362
        %v748 = vunpack.c.h.b16 %v362
        %v749 = vunpack.c.l.b16 %v363
        %v750 = vunpack.c.h.b16 %v363
        %v751 = vunpack.c.l.b16 %v364
        %v752 = vunpack.c.h.b16 %v364
        %v753 = vunpack.c.l.b16 %v365
        %v754 = vunpack.c.h.b16 %v365
        %v755 = vunpack.c.l.b16 %v366
        %v756 = vunpack.c.h.b16 %v366
        %v757 = vunpack.c.l.b16 %v367
        %v758 = vunpack.c.h.b16 %v367
        %v759 = vunpack.c.l.b16 %v368
        %v760 = vunpack.c.h.b16 %v368
        %v761 = vunpack.c.l.b16 %v369
        %v762 = vunpack.c.h.b16 %v369
        %v763 = vunpack.c.l.b16 %v370
        %v764 = vunpack.c.h.b16 %v370
        %v765 = vunpack.c.l.b16 %v371
        %v766 = vunpack.c.h.b16 %v371
        %v767 = vunpack.c.l.b16 %v372
        %v768 = vunpack.c.h.b16 %v372
        %v769 = vunpack.c.l.b16 %v373
        %v770 = vunpack.c.h.b16 %v373
        %v771 = vunpack.c.l.b16 %v374
        %v772 = vunpack.c.h.b16 %v374
        %v773 = vunpack.c.l.b16 %v375
        %v774 = vunpack.c.h.b16 %v375
        %v775 = vunpack.c.l.b16 %v376
        %v776 = vunpack.c.h.b16 %v376
        %v777 = vunpack.c.l.b16 %v377
        %v778 = vunpack.c.h.b16 %v377
        %v779 = vunpack.c.l.b16 %v378
        %v780 = vunpack.c.h.b16 %v378
        %v781 = vunpack.c.l.b16 %v379
        %v782 = vunpack.c.h.b16 %v379
        %v783 = vunpack.c.l.b16 %v380
        %v784 = vunpack.c.h.b16 %v380
        %v785 = vunpack.c.l.b16 %v381
        %v786 = vunpack.c.h.b16 %v381
        %v787 = vunpack.c.l.b16 %v382
        %v788 = vunpack.c.h.b16 %v382
        %v789 = vunpack.c.l.b16 %v383
        %v790 = vunpack.c.h.b16 %v383
        %v791 = vunpack.c.l.b16 %v384
        %v792 = vunpack.c.h.b16 %v384
        %v793 = vunpack.c.l.b16 %v385
        %v794 = vunpack.c.h.b16 %v385
        %v795 = vunpack.c.l.b16 %v386
        %v796 = vunpack.c.h.b16 %v386
        %v797 = vunpack.c.l.b16 %v387
        %v798 = vunpack.c.h.b16 %v387
        %v799 = vunpack.c.l.b16 %v388
        %v800 = vunpack.c.h.b16 %v388
        %v801 = vunpack.c.l.b16 %v389
        %v802 = vunpack.c.h.b16 %v389
        %v803 = vunpack.c.l.b16 %v390
        %v804 = vunpack.c.h.b16 %v390
        %v805 = vunpack.c.l.b16 %v391
        %v806 = vunpack.c.h.b16 %v391
        %v807 = vunpack.c.l.b16 %v392
        %v808 = vunpack.c.h.b16 %v392
        %v809 = vunpack.c.l.b16 %v393
        %v810 = vunpack.c.h.b16 %v393
        %v811 = vunpack.c.l.b16 %v394
        %v812 = vunpack.c.h.b16 %v394
        %v813 = vunpack.c.l.b16 %v395
        %v814 = vunpack.c.h.b16 %v395
        %v815 = vunpack.c.l.b16 %v396
        %v816 = vunpack.c.h.b16 %v396
        %v817 = vunpack.c.l.b16 %v397
        %v818 = vunpack.c.h.b16 %v397
        %v819 = vunpack.c.l.b16 %v398
        %v820 = vunpack.c.h.b16 %v398
        %v821 = vunpack.c.l.b16 %v399
        %v822 = vunpack.c.h.b16 %v399
        %v823 = vunpack.c.l.b16 %v400
        %v824 = vunpack.c.h.b16 %v400
        %v825 = vpack.c.b16 %v573, %v569
        %v826 = vpack.c.b16 %v574, %v570
        %v827 = vpack.c.b16 %v575, %v571
        %v828 = vpack.c.b16 %v576, %v572
        %v829 = vpack.c.b16 %v581, %v577
        %v830 = vpack.c.b16 %v582, %v578
        %v831 = vpack.c.b16 %v583, %v579
        %v832 = vpack.c.b16 %v584, %v580
        %v833 = vpack.c.b16 %v589, %v585
        %v834 = vpack.c.b16 %v590, %v586
        %v835 = vpack.c.b16 %v591, %v587
        %v836 = vpack.c.b16 %v592, %v588
        %v837 = vpack.c.b16 %v597, %v593
        %v838 = vpack.c.b16 %v598, %v594
        %v839 = vpack.c.b16 %v599, %v595
        %v840 = vpack.c.b16 %v600, %v596
        %v841 = vpack.c.b16 %v605, %v601
        %v842 = vpack.c.b16 %v606, %v602
        %v843 = vpack.c.b16 %v607, %v603
        %v844 = vpack.c.b16 %v608, %v604
        %v845 = vpack.c.b16 %v613, %v609
        %v846 = vpack.c.b16 %v614, %v610
        %v847 = vpack.c.b16 %v615, %v611
        %v848 = vpack.c.b16 %v616, %v612
        %v849 = vpack.c.b16 %v621, %v617
        %v850 = vpack.c.b16 %v622, %v618
        %v851 = vpack.c.b16 %v623, %v619
        %v852 = vpack.c.b16 %v624, %v620
        %v853 = vpack.c.b16 %v629, %v625
        %v854 = vpack.c.b16 %v630, %v626
        %v855 = vpack.c.b16 %v631, %v627
        %v856 = vpack.c.b16 %v632, %v628
        %v857 = vpack.c.b16 %v637, %v633
        %v858 = vpack.c.b16 %v638, %v634
        %v859 = vpack.c.b16 %v639, %v635
        %v860 = vpack.c.b16 %v640, %v636
        %v861 = vpack.c.b16 %v645, %v641
        %v862 = vpack.c.b16 %v646, %v642
        %v863 = vpack.c.b16 %v647, %v643
        %v864 = vpack.c.b16 %v648, %v644
        %v865 = vpack.c.b16 %v653, %v649
        %v866 = vpack.c.b16 %v654, %v650
        %v867 = vpack.c.b16 %v655, %v651
        %v868 = vpack.c.b16 %v656, %v652
        %v869 = vpack.c.b16 %v661, %v657
        %v870 = vpack.c.b16 %v662, %v658
        %v871 = vpack.c.b16 %v663, %v659
        %v872 = vpack.c.b16 %v664, %v660
        %v873 = vpack.c.b16 %v669, %v665
        %v874 = vpack.c.b16 %v670, %v666
        %v875 = vpack.c.b16 %v671, %v667
        %v876 = vpack.c.b16 %v672, %v668
        %v877 = vpack.c.b16 %v677, %v673
        %v878 = vpack.c.b16 %v678, %v674
        %v879 = vpack.c.b16 %v679, %v675
        %v880 = vpack.c.b16 %v680, %v676
        %v881 = vpack.c.b16 %v685, %v681
        %v882 = vpack.c.b16 %v686, %v682
        %v883 = vpack.c.b16 %v687, %v683
        %v884 = vpack.c.b16 %v688, %v684
        %v885 = vpack.c.b16 %v693, %v689
        %v886 = vpack.c.b16 %v694, %v690
        %v887 = vpack.c.b16 %v695, %v691
        %v888 = vpack.c.b16 %v696, %v692
        %v889 = vpack.c.b16 %v701, %v697
        %v890 = vpack.c.b16 %v702, %v698
        %v891 = vpack.c.b16 %v703, %v699
        %v892 = vpack.c.b16 %v704, %v700
        %v893 = vpack.c.b16 %v709, %v705
        %v894 = vpack.c.b16 %v710, %v706
        %v895 = vpack.c.b16 %v711, %v707
        %v896 = vpack.c.b16 %v712, %v708
        %v897 = vpack.c.b16 %v717, %v713
        %v898 = vpack.c.b16 %v718, %v714
        %v899 = vpack.c.b16 %v719, %v715
        %v900 = vpack.c.b16 %v720, %v716
        %v901 = vpack.c.b16 %v725, %v721
        %v902 = vpack.c.b16 %v726, %v722
        %v903 = vpack.c.b16 %v727, %v723
        %v904 = vpack.c.b16 %v728, %v724
        %v905 = vpack.c.b16 %v733, %v729
        %v906 = vpack.c.b16 %v734, %v730
        %v907 = vpack.c.b16 %v735, %v731
        %v908 = vpack.c.b16 %v736, %v732
        %v909 = vpack.c.b16 %v741, %v737
        %v910 = vpack.c.b16 %v742, %v738
        %v911 = vpack.c.b16 %v743, %v739
        %v912 = vpack.c.b16 %v744, %v740
        %v913 = vpack.c.b16 %v749, %v745
        %v914 = vpack.c.b16 %v750, %v746
        %v915 = vpack.c.b16 %v751, %v747
        %v916 = vpack.c.b16 %v752, %v748
        %v917 = vpack.c.b16 %v757, %v753
        %v918 = vpack.c.b16 %v758, %v754
        %v919 = vpack.c.b16 %v759, %v755
        %v920 = vpack.c.b16 %v760, %v756
        %v921 = vpack.c.b16 %v765, %v761
        %v922 = vpack.c.b16 %v766, %v762
        %v923 = vpack.c.b16 %v767, %v763
        %v924 = vpack.c.b16 %v768, %v764
        %v925 = vpack.c.b16 %v773, %v769
        %v926 = vpack.c.b16 %v774, %v770
        %v927 = vpack.c.b16 %v775, %v771
        %v928 = vpack.c.b16 %v776, %v772
        %v929 = vpack.c.b16 %v781, %v777
        %v930 = vpack.c.b16 %v782, %v778
        %v931 = vpack.c.b16 %v783, %v779
        %v932 = vpack.c.b16 %v784, %v780
        %v933 = vpack.c.b16 %v789, %v785
        %v934 = vpack.c.b16 %v790, %v786
        %v935 = vpack.c.b16 %v791, %v787
        %v936 = vpack.c.b16 %v792, %v788
        %v937 = vpack.c.b16 %v797, %v793
        %v938 = vpack.c.b16 %v798, %v794
        %v939 = vpack.c.b16 %v799, %v795
        %v940 = vpack.c.b16 %v800, %v796
        %v941 = vpack.c.b16 %v805, %v801
        %v942 = vpack.c.b16 %v806, %v802
        %v943 = vpack.c.b16 %v807, %v803
        %v944 = vpack.c.b16 %v808, %v804
        %v945 = vpack.c.b16 %v813, %v809
        %v946 = vpack.c.b16 %v814, %v810
        %v947 = vpack.c.b16 %v815, %v811
        %v948 = vpack.c.b16 %v816, %v812
        %v949 = vpack.c.b16 %v821, %v817
        %v950 = vpack.c.b16 %v822, %v818
        %v951 = vpack.c.b16 %v823, %v819
        %v952 = vpack.c.b16 %v824, %v820
        %1081 = vmatprep.subr.bf16.mxu0 %v854
        %1082 = vmatpush1.bf16.msra.mxu0 %v853
        %1083 = vmatprep.subr.bf16.mxu0 %v850
        %1084 = vmatpush1.bf16.msra.mxu0 %v849
        %1085 = vmatprep.subr.bf16.mxu0 %v846
        %1086 = vmatpush1.bf16.msra.mxu0 %v845
        %1087 = vmatprep.subr.bf16.mxu0 %v842
        %1088 = vmatpush1.bf16.msra.mxu0 %v841
        %1089 = vmatprep.subr.bf16.mxu0 %v838
        %1090 = vmatpush1.bf16.msra.mxu0 %v837
        %1091 = vmatprep.subr.bf16.mxu0 %v834
        %1092 = vmatpush1.bf16.msra.mxu0 %v833
        %1093 = vmatprep.subr.bf16.mxu0 %v830
        %1094 = vmatpush1.bf16.msra.mxu0 %v829
        %1095 = vmatprep.subr.bf16.mxu0 %v826
        %1096 = vmatpush1.bf16.msra.mxu0 %v825
        %1097 = vmatprep.subr.bf16.mxu0 %v886
        %1098 = vmatpush2.bf16.msra.mxu0 %v885
        %1099 = vmatprep.subr.bf16.mxu0 %v882
        %1100 = vmatpush2.bf16.msra.mxu0 %v881
        %1101 = vmatprep.subr.bf16.mxu0 %v878
        %1102 = vmatpush2.bf16.msra.mxu0 %v877
        %1103 = vmatprep.subr.bf16.mxu0 %v874
        %1104 = vmatpush2.bf16.msra.mxu0 %v873
        %1105 = vmatprep.subr.bf16.mxu0 %v870
        %1106 = vmatpush2.bf16.msra.mxu0 %v869
        %1107 = vmatprep.subr.bf16.mxu0 %v866
        %1108 = vmatpush2.bf16.msra.mxu0 %v865
        %1109 = vmatprep.subr.bf16.mxu0 %v862
        %1110 = vmatpush2.bf16.msra.mxu0 %v861
        %1111 = vmatprep.subr.bf16.mxu0 %v858
        %1112 = vmatpush2.bf16.msra.mxu0 %v857
        %1113 = vmatprep.mubr.bf16.mxu0 %v426
        %1114 = vmatmul.mubr.bf16.gmra.mxu0 %v425
        %v1115 = vpop.f32.mrf.mxu0
        %v1116 = vadd.f32 0.0, %v1115
        %v1117 = vpop.f32.mrf.mxu0
        %v1118 = vadd.f32 0.0, %v1117
        %v1119 = vpop.f32.mrf.mxu0
        %v1120 = vadd.f32 0.0, %v1119
        %v1121 = vpop.f32.mrf.mxu0
        %v1122 = vadd.f32 0.0, %v1121
        %1123 = vmatprep.mubr.bf16.mxu0 %v430
        %1124 = vmatmul.mubr.bf16.gmra.mxu0 %v429
        %v1125 = vpop.f32.mrf.mxu0
        %v1126 = vadd.f32 0.0, %v1125
        %v1127 = vpop.f32.mrf.mxu0
        %v1128 = vadd.f32 0.0, %v1127
        %v1129 = vpop.f32.mrf.mxu0
        %v1130 = vadd.f32 0.0, %v1129
        %v1131 = vpop.f32.mrf.mxu0
        %v1132 = vadd.f32 0.0, %v1131
        %1133 = vdwg.mxu0
        %1134 = vmatprep.subr.bf16.mxu0 %v918
        %1135 = vmatpush1.bf16.msra.mxu0 %v917
        %1136 = vmatprep.subr.bf16.mxu0 %v914
        %1137 = vmatpush1.bf16.msra.mxu0 %v913
        %1138 = vmatprep.subr.bf16.mxu0 %v910
        %1139 = vmatpush1.bf16.msra.mxu0 %v909
        %1140 = vmatprep.subr.bf16.mxu0 %v906
        %1141 = vmatpush1.bf16.msra.mxu0 %v905
        %1142 = vmatprep.subr.bf16.mxu0 %v902
        %1143 = vmatpush1.bf16.msra.mxu0 %v901
        %1144 = vmatprep.subr.bf16.mxu0 %v898
        %1145 = vmatpush1.bf16.msra.mxu0 %v897
        %1146 = vmatprep.subr.bf16.mxu0 %v894
        %1147 = vmatpush1.bf16.msra.mxu0 %v893
        %1148 = vmatprep.subr.bf16.mxu0 %v890
        %1149 = vmatpush1.bf16.msra.mxu0 %v889
        %1150 = vmatprep.subr.bf16.mxu0 %v950
        %1151 = vmatpush2.bf16.msra.mxu0 %v949
        %1152 = vmatprep.subr.bf16.mxu0 %v946
        %1153 = vmatpush2.bf16.msra.mxu0 %v945
        %1154 = vmatprep.subr.bf16.mxu0 %v942
        %1155 = vmatpush2.bf16.msra.mxu0 %v941
        %1156 = vmatprep.subr.bf16.mxu0 %v938
        %1157 = vmatpush2.bf16.msra.mxu0 %v937
        %1158 = vmatprep.subr.bf16.mxu0 %v934
        %1159 = vmatpush2.bf16.msra.mxu0 %v933
        %1160 = vmatprep.subr.bf16.mxu0 %v930
        %1161 = vmatpush2.bf16.msra.mxu0 %v929
        %1162 = vmatprep.subr.bf16.mxu0 %v926
        %1163 = vmatpush2.bf16.msra.mxu0 %v925
        %1164 = vmatprep.subr.bf16.mxu0 %v922
        %1165 = vmatpush2.bf16.msra.mxu0 %v921
        %1166 = vmatprep.mubr.bf16.mxu0 %v428
        %1167 = vmatmul.mubr.bf16.gmra.mxu0 %v427
        %v1168 = vpop.f32.mrf.mxu0
        %v1169 = vadd.f32 %v1116, %v1168
        %v1170 = vpop.f32.mrf.mxu0
        %v1171 = vadd.f32 %v1118, %v1170
        %v1172 = vpop.f32.mrf.mxu0
        %v1173 = vadd.f32 %v1120, %v1172
        %v1174 = vpop.f32.mrf.mxu0
        %v1175 = vadd.f32 %v1122, %v1174
        %1176 = vmatprep.mubr.bf16.mxu0 %v432
        %1177 = vmatmul.mubr.bf16.gmra.mxu0 %v431
        %v1178 = vpop.f32.mrf.mxu0
        %v1179 = vadd.f32 %v1126, %v1178
        %v1180 = vpop.f32.mrf.mxu0
        %v1181 = vadd.f32 %v1128, %v1180
        %v1182 = vpop.f32.mrf.mxu0
        %v1183 = vadd.f32 %v1130, %v1182
        %v1184 = vpop.f32.mrf.mxu0
        %v1185 = vadd.f32 %v1132, %v1184
        %1186 = vdwg.mxu0
        %1187 = vmatprep.subr.bf16.mxu0 %v856
        %1188 = vmatpush1.bf16.msra.mxu0 %v855
        %1189 = vmatprep.subr.bf16.mxu0 %v852
        %1190 = vmatpush1.bf16.msra.mxu0 %v851
        %1191 = vmatprep.subr.bf16.mxu0 %v848
        %1192 = vmatpush1.bf16.msra.mxu0 %v847
        %1193 = vmatprep.subr.bf16.mxu0 %v844
        %1194 = vmatpush1.bf16.msra.mxu0 %v843
        %1195 = vmatprep.subr.bf16.mxu0 %v840
        %1196 = vmatpush1.bf16.msra.mxu0 %v839
        %1197 = vmatprep.subr.bf16.mxu0 %v836
        %1198 = vmatpush1.bf16.msra.mxu0 %v835
        %1199 = vmatprep.subr.bf16.mxu0 %v832
        %1200 = vmatpush1.bf16.msra.mxu0 %v831
        %1201 = vmatprep.subr.bf16.mxu0 %v828
        %1202 = vmatpush1.bf16.msra.mxu0 %v827
        %1203 = vmatprep.subr.bf16.mxu0 %v888
        %1204 = vmatpush2.bf16.msra.mxu0 %v887
        %1205 = vmatprep.subr.bf16.mxu0 %v884
        %1206 = vmatpush2.bf16.msra.mxu0 %v883
        %1207 = vmatprep.subr.bf16.mxu0 %v880
        %1208 = vmatpush2.bf16.msra.mxu0 %v879
        %1209 = vmatprep.subr.bf16.mxu0 %v876
        %1210 = vmatpush2.bf16.msra.mxu0 %v875
        %1211 = vmatprep.subr.bf16.mxu0 %v872
        %1212 = vmatpush2.bf16.msra.mxu0 %v871
        %1213 = vmatprep.subr.bf16.mxu0 %v868
        %1214 = vmatpush2.bf16.msra.mxu0 %v867
        %1215 = vmatprep.subr.bf16.mxu0 %v864
        %1216 = vmatpush2.bf16.msra.mxu0 %v863
        %1217 = vmatprep.subr.bf16.mxu0 %v860
        %1218 = vmatpush2.bf16.msra.mxu0 %v859
        %1219 = vmatprep.mubr.bf16.mxu0 %v426
        %1220 = vmatmul.mubr.bf16.gmra.mxu0 %v425
        %v1221 = vpop.f32.mrf.mxu0
        %v1222 = vadd.f32 0.0, %v1221
        %v1223 = vpop.f32.mrf.mxu0
        %v1224 = vadd.f32 0.0, %v1223
        %v1225 = vpop.f32.mrf.mxu0
        %v1226 = vadd.f32 0.0, %v1225
        %v1227 = vpop.f32.mrf.mxu0
        %v1228 = vadd.f32 0.0, %v1227
        %1229 = vmatprep.mubr.bf16.mxu0 %v430
        %1230 = vmatmul.mubr.bf16.gmra.mxu0 %v429
        %v1231 = vpop.f32.mrf.mxu0
        %v1232 = vadd.f32 0.0, %v1231
        %v1233 = vpop.f32.mrf.mxu0
        %v1234 = vadd.f32 0.0, %v1233
        %v1235 = vpop.f32.mrf.mxu0
        %v1236 = vadd.f32 0.0, %v1235
        %v1237 = vpop.f32.mrf.mxu0
        %v1238 = vadd.f32 0.0, %v1237
        %1239 = vdwg.mxu0
        %1240 = vmatprep.subr.bf16.mxu0 %v920
        %1241 = vmatpush1.bf16.msra.mxu0 %v919
        %1242 = vmatprep.subr.bf16.mxu0 %v916
        %1243 = vmatpush1.bf16.msra.mxu0 %v915
        %1244 = vmatprep.subr.bf16.mxu0 %v912
        %1245 = vmatpush1.bf16.msra.mxu0 %v911
        %1246 = vmatprep.subr.bf16.mxu0 %v908
        %1247 = vmatpush1.bf16.msra.mxu0 %v907
        %1248 = vmatprep.subr.bf16.mxu0 %v904
        %1249 = vmatpush1.bf16.msra.mxu0 %v903
        %1250 = vmatprep.subr.bf16.mxu0 %v900
        %1251 = vmatpush1.bf16.msra.mxu0 %v899
        %1252 = vmatprep.subr.bf16.mxu0 %v896
        %1253 = vmatpush1.bf16.msra.mxu0 %v895
        %1254 = vmatprep.subr.bf16.mxu0 %v892
        %1255 = vmatpush1.bf16.msra.mxu0 %v891
        %1256 = vmatprep.subr.bf16.mxu0 %v952
        %1257 = vmatpush2.bf16.msra.mxu0 %v951
        %1258 = vmatprep.subr.bf16.mxu0 %v948
        %1259 = vmatpush2.bf16.msra.mxu0 %v947
        %1260 = vmatprep.subr.bf16.mxu0 %v944
        %1261 = vmatpush2.bf16.msra.mxu0 %v943
        %1262 = vmatprep.subr.bf16.mxu0 %v940
        %1263 = vmatpush2.bf16.msra.mxu0 %v939
        %1264 = vmatprep.subr.bf16.mxu0 %v936
        %1265 = vmatpush2.bf16.msra.mxu0 %v935
        %1266 = vmatprep.subr.bf16.mxu0 %v932
        %1267 = vmatpush2.bf16.msra.mxu0 %v931
        %1268 = vmatprep.subr.bf16.mxu0 %v928
        %1269 = vmatpush2.bf16.msra.mxu0 %v927
        %1270 = vmatprep.subr.bf16.mxu0 %v924
        %1271 = vmatpush2.bf16.msra.mxu0 %v923
        %1272 = vmatprep.mubr.bf16.mxu0 %v428
        %1273 = vmatmul.mubr.bf16.gmra.mxu0 %v427
        %v1274 = vpop.f32.mrf.mxu0
        %v1275 = vadd.f32 %v1222, %v1274
        %v1276 = vpop.f32.mrf.mxu0
        %v1277 = vadd.f32 %v1224, %v1276
        %v1278 = vpop.f32.mrf.mxu0
        %v1279 = vadd.f32 %v1226, %v1278
        %v1280 = vpop.f32.mrf.mxu0
        %v1281 = vadd.f32 %v1228, %v1280
        %1282 = vmatprep.mubr.bf16.mxu0 %v432
        %1283 = vmatmul.mubr.bf16.gmra.mxu0 %v431
        %v1284 = vpop.f32.mrf.mxu0
        %v1285 = vadd.f32 %v1232, %v1284
        %v1286 = vpop.f32.mrf.mxu0
        %v1287 = vadd.f32 %v1234, %v1286
        %v1288 = vpop.f32.mrf.mxu0
        %v1289 = vadd.f32 %v1236, %v1288
        %v1290 = vpop.f32.mrf.mxu0
        %v1291 = vadd.f32 %v1238, %v1290
        %1292 = vdwg.mxu0
        %v1293 = vadd.f32 %v257, %v1169
        %v1294 = vadd.f32 %v258, %v1171
        %v1295 = vadd.f32 %v259, %v1275
        %v1296 = vadd.f32 %v260, %v1277
        %v1297 = vadd.f32 %v261, %v1173
        %v1298 = vadd.f32 %v262, %v1175
        %v1299 = vadd.f32 %v263, %v1279
        %v1300 = vadd.f32 %v264, %v1281
        %v1301 = vadd.f32 %v265, %v1179
        %v1302 = vadd.f32 %v266, %v1181
        %v1303 = vadd.f32 %v267, %v1285
        %v1304 = vadd.f32 %v268, %v1287
        %v1305 = vadd.f32 %v269, %v1183
        %v1306 = vadd.f32 %v270, %v1185
        %v1307 = vadd.f32 %v271, %v1289
        %v1308 = vadd.f32 %v272, %v1291
        %1309 = vst [vmem:[#allocation2] sm:$0xff] %v1293
        %1310 = vst [vmem:[#allocation2 + $0x8] sm:$0xff] %v1294
        %1311 = vst [vmem:[#allocation2 + $0x10] sm:$0xff] %v1295
        %1312 = vst [vmem:[#allocation2 + $0x18] sm:$0xff] %v1296
        %1313 = vst [vmem:[#allocation2 + $0x20] sm:$0xff] %v1297
        %1314 = vst [vmem:[#allocation2 + $0x28] sm:$0xff] %v1298
        %1315 = vst [vmem:[#allocation2 + $0x30] sm:$0xff] %v1299
        %1316 = vst [vmem:[#allocation2 + $0x38] sm:$0xff] %v1300
        %1317 = vst [vmem:[#allocation2 + $0x40] sm:$0xff] %v1301
        %1318 = vst [vmem:[#allocation2 + $0x48] sm:$0xff] %v1302
        %1319 = vst [vmem:[#allocation2 + $0x50] sm:$0xff] %v1303
        %1320 = vst [vmem:[#allocation2 + $0x58] sm:$0xff] %v1304
        %1321 = vst [vmem:[#allocation2 + $0x60] sm:$0xff] %v1305
        %1322 = vst [vmem:[#allocation2 + $0x68] sm:$0xff] %v1306
        %1323 = vst [vmem:[#allocation2 + $0x70] sm:$0xff] %v1307
        %1324 = vst [vmem:[#allocation2 + $0x78] sm:$0xff] %v1308
        // Predicated region
        $region37: #{multi_head_attention.3} parent=27 // pred_check
          %p1325 = pneg %p229
        $region38: #{multi_head_attention.3} parent=27 // pred_check_branch
          %1327 = sbr.rel (%p1325) target = $region40
        $region39: #{multi_head_attention.3} parent=27 // pred_region
          %v1328 = vld [vmem:[#allocation2] sm:$0xff]
          %v1329 = vld [vmem:[#allocation2 + $0x8] sm:$0xff]
          %v1330 = vld [vmem:[#allocation2 + $0x10] sm:$0xff]
          %v1331 = vld [vmem:[#allocation2 + $0x18] sm:$0xff]
          %v1332 = vld [vmem:[#allocation2 + $0x20] sm:$0xff]
          %v1333 = vld [vmem:[#allocation2 + $0x28] sm:$0xff]
          %v1334 = vld [vmem:[#allocation2 + $0x30] sm:$0xff]
          %v1335 = vld [vmem:[#allocation2 + $0x38] sm:$0xff]
          %v1336 = vld [vmem:[#allocation2 + $0x40] sm:$0xff]
          %v1337 = vld [vmem:[#allocation2 + $0x48] sm:$0xff]
          %v1338 = vld [vmem:[#allocation2 + $0x50] sm:$0xff]
          %v1339 = vld [vmem:[#allocation2 + $0x58] sm:$0xff]
          %v1340 = vld [vmem:[#allocation2 + $0x60] sm:$0xff]
          %v1341 = vld [vmem:[#allocation2 + $0x68] sm:$0xff]
          %v1342 = vld [vmem:[#allocation2 + $0x70] sm:$0xff]
          %v1343 = vld [vmem:[#allocation2 + $0x78] sm:$0xff]
          %v1344 = vpack.c.bf16 %v1332, %v1328
          %v1345 = vpack.c.bf16 %v1333, %v1329
          %v1346 = vpack.c.bf16 %v1334, %v1330
          %v1347 = vpack.c.bf16 %v1335, %v1331
          %v1348 = vpack.c.bf16 %v1340, %v1336
          %v1349 = vpack.c.bf16 %v1341, %v1337
          %v1350 = vpack.c.bf16 %v1342, %v1338
          %v1351 = vpack.c.bf16 %v1343, %v1339
          %v1360 = vunpack.c.l.b16 %v1344
          %v1361 = vunpack.c.l.b16 %v1345
          %v1362 = vunpack.c.l.b16 %v1346
          %v1363 = vunpack.c.l.b16 %v1347
          %v1364 = vunpack.c.h.b16 %v1344
          %v1365 = vunpack.c.h.b16 %v1345
          %v1366 = vunpack.c.h.b16 %v1346
          %v1367 = vunpack.c.h.b16 %v1347
          %v1368 = vunpack.c.l.b16 %v1348
          %v1369 = vunpack.c.l.b16 %v1349
          %v1370 = vunpack.c.l.b16 %v1350
          %v1371 = vunpack.c.l.b16 %v1351
          %v1372 = vunpack.c.h.b16 %v1348
          %v1373 = vunpack.c.h.b16 %v1349
          %v1374 = vunpack.c.h.b16 %v1350
          %v1375 = vunpack.c.h.b16 %v1351
          %v1376 = vpack.c.b16 %v1361, %v1360
          %v1377 = vpack.c.b16 %v1363, %v1362
          %v1378 = vpack.c.b16 %v1365, %v1364
          %v1379 = vpack.c.b16 %v1367, %v1366
          %v1380 = vpack.c.b16 %v1369, %v1368
          %v1381 = vpack.c.b16 %v1371, %v1370
          %v1382 = vpack.c.b16 %v1373, %v1372
          %v1383 = vpack.c.b16 %v1375, %v1374
          %1392 = vst [vmem:[%s212] sm:$0xff] %v1376
          %1393 = vst [vmem:[%s212 + $0x8] sm:$0xff] %v1377
          %1394 = vst [vmem:[%s212 + $0x10] sm:$0xff] %v1378
          %1395 = vst [vmem:[%s212 + $0x18] sm:$0xff] %v1379
          %1396 = vst [vmem:[%s212 + $0x20] sm:$0xff] %v1380
          %1397 = vst [vmem:[%s212 + $0x28] sm:$0xff] %v1381
          %1398 = vst [vmem:[%s212 + $0x30] sm:$0xff] %v1382
          %1399 = vst [vmem:[%s212 + $0x38] sm:$0xff] %v1383
        $region40: #{multi_head_attention.3} parent=27 // pred_fallthru
          _
        %s1400 = sand.u32 %s101, 1
        %s1401 = sand.u32 %s101, 1
        %s1402 = smul.addr %s1401, 64
        %s1403 = scalar_lea.vmem [#allocation5], %s1402
        // Predicated region
        $region41: #{multi_head_attention.3} parent=27 // pred_check
          %p1404 = pneg %p111
        $region42: #{multi_head_attention.3} parent=27 // pred_check_branch
          %1406 = sbr.rel (%p1404) target = $region44
        $region43: #{multi_head_attention.3} parent=27 // pred_region
          %s1407 = smul.u32 4, %s21
          %s1408 = smul.u32 4, %s22
          %s1409 = smul.addr %s1407, 12
          %s1410 = sadd.s32 %s1408, %s1409
          %s1411 = smul.addr %s1410, 4
          %s1412 = scalar_lea.vmem %s2, %s1411
          // Predicated region
          $region45: #{multi_head_attention.3} parent=43 // pred_check
            _
          $region46: #{multi_head_attention.3} parent=43 // pred_check_branch
            %1414 = sbr.rel (0) target = $region48
          $region47: #{multi_head_attention.3} parent=43 // pred_region
            // Predicated region
            $region49: #{multi_head_attention.3} parent=47 // pred_check
              _
            $region50: #{multi_head_attention.3} parent=47 // pred_check_branch
              %1416 = sbr.rel (0) target = $region52
            $region51: #{multi_head_attention.3} parent=47 // pred_region
              loop: start=0, step=1, limit=1
              $region53: #{multi_head_attention.3} parent=51 // loop_pre_header
                _
              $region54: #{multi_head_attention.3} parent=51 // loop_header
                %s1418 = sphi 0, %s1422
                %p1419 = scmp.ge.s32.totalorder %s1418, 1
                %s1423 = sphi %s1403, %s1403
                %s1424 = sphi %s1412, %s1412
              $region55: #{multi_head_attention.3} parent=51 // loop_header_branch
                %1421 = sbr.rel (%p1419) target = $region59
              $region56: #{multi_head_attention.3} parent=51 // loop_body
                %v1425 = vld [vmem:[%s1423] sm:$0xff]
                %1426 = vst [vmem:[%s1424] sm:$0xff] %v1425
                %v1427 = vld [vmem:[%s1423 + $0x8] sm:$0xff]
                %1428 = vst [vmem:[%s1424 + $0x8] sm:$0xff] %v1427
                %v1429 = vld [vmem:[%s1423 + $0x10] sm:$0xff]
                %1430 = vst [vmem:[%s1424 + $0x30] sm:$0xff] %v1429
                %v1431 = vld [vmem:[%s1423 + $0x18] sm:$0xff]
                %1432 = vst [vmem:[%s1424 + $0x38] sm:$0xff] %v1431
                %v1433 = vld [vmem:[%s1423 + $0x20] sm:$0xff]
                %1434 = vst [vmem:[%s1424 + $0x60] sm:$0xff] %v1433
                %v1435 = vld [vmem:[%s1423 + $0x28] sm:$0xff]
                %1436 = vst [vmem:[%s1424 + $0x68] sm:$0xff] %v1435
                %v1437 = vld [vmem:[%s1423 + $0x30] sm:$0xff]
                %1438 = vst [vmem:[%s1424 + $0x90] sm:$0xff] %v1437
                %v1439 = vld [vmem:[%s1423 + $0x38] sm:$0xff]
                %1440 = vst [vmem:[%s1424 + $0x98] sm:$0xff] %v1439
              $region57: #{multi_head_attention.3} parent=51 // loop_footer
                %s1422 = sadd.s32 1, %s1418
              $region58: #{multi_head_attention.3} parent=51 // loop_footer_branch
                %1417 = sbr.rel target = $region54
              $region59: #{multi_head_attention.3} parent=51 // loop_exit
                _
            $region52: #{multi_head_attention.3} parent=47 // pred_fallthru
              _
            // Predicated region
            $region60: #{multi_head_attention.3} parent=47 // pred_check
              _
            $region61: #{multi_head_attention.3} parent=47 // pred_check_branch
              %1442 = sbr.rel target = $region63
            $region62: #{multi_head_attention.3} parent=47 // pred_region
              _
            $region63: #{multi_head_attention.3} parent=47 // pred_fallthru
              _
          $region48: #{multi_head_attention.3} parent=43 // pred_fallthru
            _
          %1443 = vnop
        $region44: #{multi_head_attention.3} parent=27 // pred_fallthru
          _
      $region28: #{multi_head_attention.3} parent=5 // pred_fallthru
        _
      %p1444 = scmp.le.s32.totalorder 2, %s11
      // Predicated region
      $region64: #{multi_head_attention.3} parent=5 // pred_check
        %p1445 = pneg %p1444
      $region65: #{multi_head_attention.3} parent=5 // pred_check_branch
        %1447 = sbr.rel (%p1445) target = $region67
      $region66: #{multi_head_attention.3} parent=5 // pred_region
        %s1448 = ssub.s32 %s11, 2
        // Predicated region
        $region68: #{multi_head_attention.3} parent=66 // pred_check
          %p1449 = pneg %p117
        $region69: #{multi_head_attention.3} parent=66 // pred_check_branch
          %1451 = sbr.rel (%p1449) target = $region71
        $region70: #{multi_head_attention.3} parent=66 // pred_region
          %s1452 = sand.u32 %s102, 1
          %s1453 = sand.u32 %s102, 1
          %s1454 = smul.addr %s1453, 64
          %s1455 = scalar_lea.vmem [#allocation5], %s1454
        $region71: #{multi_head_attention.3} parent=66 // pred_fallthru
          _
      $region67: #{multi_head_attention.3} parent=5 // pred_fallthru
        _
    $region6: #{multi_head_attention.3} parent=1 // loop_footer
      %s15 = sadd.s32 1, %s11
    $region7: #{multi_head_attention.3} parent=1 // loop_footer_branch
      %10 = sbr.rel target = $region3
    $region8: #{multi_head_attention.3} parent=1 // loop_exit
      _
    %1456 = vsyncpa [#allocation4], 1
    %s1457 = scalar_lea.sflag [#allocation4], 1
    %1458 = vsyncpa %s1457, 1

// kernel: multi_head_attention.5
$region0: #{multi_head_attention.5}
  #allocation0 [shape = 'u32[]', space=smem, size = 0x4, offset = 0x4, fixed_abs, tag = 'smem constant byte address 0x4 - core index']
  #allocation1 [shape = 'u32[144,128]{1,0:T(1,128)}', space=vmem, size = 0x12000, scoped, tag = 'internal scratch']
  #allocation2 [shape = 'f32[32,512]{1,0:T(8,128)}', space=vmem, size = 0x10000, scoped, tag = 'scratch operand']
  %s0 = inlined_call_operand.vmem [shape: bf16[32,512], index: 0, kind: input, shape index: {}]
  %s1 = inlined_call_operand.vmem [shape: bf16[512,512], index: 1, kind: input, shape index: {}]
  %s2 = inlined_call_operand.hbm [shape: f32[32,512], index: 2, kind: output, shape index: {}]
  %s3 = sld [smem:[#allocation0]]
  $region26: #{multi_head_attention.5} parent=0
    _
  %s5 = ssub.s32 1, %s3
  %s6 = scalar_select 0, %s5, %s3
  $region1: #{multi_head_attention.5} parent=0
    #allocation3 [shape = 'u8[65536]{0}', space=vmem, size = 0x10000, scoped, tag = 'output window, operand 0, single buffered']
    #allocation4 [shape = 's32[1]{0}', space=sflag, size = 0x4, scoped, tag = 'scoped memory for multi_head_attention.5']
    %7 = vsyncpa [#allocation4], 0
    // Predicated region
    $region2: #{multi_head_attention.5} parent=1 // pred_check
      _
    $region3: #{multi_head_attention.5} parent=1 // pred_check_branch
      %9 = sbr.rel (0) target = $region5
    $region4: #{multi_head_attention.5} parent=1 // pred_region
      _
    $region5: #{multi_head_attention.5} parent=1 // pred_fallthru
      _
    // Predicated region
    $region6: #{multi_head_attention.5} parent=1 // pred_check
      _
    $region7: #{multi_head_attention.5} parent=1 // pred_check_branch
      %11 = sbr.rel (0) target = $region9
    $region8: #{multi_head_attention.5} parent=1 // pred_region
      _
    $region9: #{multi_head_attention.5} parent=1 // pred_fallthru
      _
    %p12 = scmp.eq.s32.totalorder 0, 0
    // Predicated region
    $region10: #{multi_head_attention.5} parent=1 // pred_check
      %p13 = pneg %p12
    $region11: #{multi_head_attention.5} parent=1 // pred_check_branch
      %15 = sbr.rel (%p13) target = $region13
    $region12: #{multi_head_attention.5} parent=1 // pred_region
      %16 = vst [vmem:[#allocation2] sm:$0xff] 0.0
      %17 = vst [vmem:[#allocation2 + $0x8] sm:$0xff] 0.0
      %18 = vst [vmem:[#allocation2 + $0x10] sm:$0xff] 0.0
      %19 = vst [vmem:[#allocation2 + $0x18] sm:$0xff] 0.0
      %20 = vst [vmem:[#allocation2 + $0x20] sm:$0xff] 0.0
      %21 = vst [vmem:[#allocation2 + $0x28] sm:$0xff] 0.0
      %22 = vst [vmem:[#allocation2 + $0x30] sm:$0xff] 0.0
      %23 = vst [vmem:[#allocation2 + $0x38] sm:$0xff] 0.0
      %24 = vst [vmem:[#allocation2 + $0x40] sm:$0xff] 0.0
      %25 = vst [vmem:[#allocation2 + $0x48] sm:$0xff] 0.0
      %26 = vst [vmem:[#allocation2 + $0x50] sm:$0xff] 0.0
      %27 = vst [vmem:[#allocation2 + $0x58] sm:$0xff] 0.0
      %28 = vst [vmem:[#allocation2 + $0x60] sm:$0xff] 0.0
      %29 = vst [vmem:[#allocation2 + $0x68] sm:$0xff] 0.0
      %30 = vst [vmem:[#allocation2 + $0x70] sm:$0xff] 0.0
      %31 = vst [vmem:[#allocation2 + $0x78] sm:$0xff] 0.0
    $region13: #{multi_head_attention.5} parent=1 // pred_fallthru
      _
    %v32 = vld [vmem:[%s0] sm:$0xff]
    %v33 = vld [vmem:[%s0 + $0x8] sm:$0xff]
    %v34 = vld [vmem:[%s0 + $0x10] sm:$0xff]
    %v35 = vld [vmem:[%s0 + $0x18] sm:$0xff]
    %v36 = vld [vmem:[%s0 + $0x20] sm:$0xff]
    %v37 = vld [vmem:[%s0 + $0x28] sm:$0xff]
    %v38 = vld [vmem:[%s0 + $0x30] sm:$0xff]
    %v39 = vld [vmem:[%s0 + $0x38] sm:$0xff]
    %v40 = vld [vmem:[#allocation2] sm:$0xff]
    %v41 = vld [vmem:[#allocation2 + $0x8] sm:$0xff]
    %v42 = vld [vmem:[#allocation2 + $0x10] sm:$0xff]
    %v43 = vld [vmem:[#allocation2 + $0x18] sm:$0xff]
    %v44 = vld [vmem:[#allocation2 + $0x20] sm:$0xff]
    %v45 = vld [vmem:[#allocation2 + $0x28] sm:$0xff]
    %v46 = vld [vmem:[#allocation2 + $0x30] sm:$0xff]
    %v47 = vld [vmem:[#allocation2 + $0x38] sm:$0xff]
    %v48 = vld [vmem:[#allocation2 + $0x40] sm:$0xff]
    %v49 = vld [vmem:[#allocation2 + $0x48] sm:$0xff]
    %v50 = vld [vmem:[#allocation2 + $0x50] sm:$0xff]
    %v51 = vld [vmem:[#allocation2 + $0x58] sm:$0xff]
    %v52 = vld [vmem:[#allocation2 + $0x60] sm:$0xff]
    %v53 = vld [vmem:[#allocation2 + $0x68] sm:$0xff]
    %v54 = vld [vmem:[#allocation2 + $0x70] sm:$0xff]
    %v55 = vld [vmem:[#allocation2 + $0x78] sm:$0xff]
    %v56 = vld [vmem:[%s1] sm:$0xff]
    %v57 = vld [vmem:[%s1 + $0x8] sm:$0xff]
    %v58 = vld [vmem:[%s1 + $0x10] sm:$0xff]
    %v59 = vld [vmem:[%s1 + $0x18] sm:$0xff]
    %v60 = vld [vmem:[%s1 + $0x20] sm:$0xff]
    %v61 = vld [vmem:[%s1 + $0x28] sm:$0xff]
    %v62 = vld [vmem:[%s1 + $0x30] sm:$0xff]
    %v63 = vld [vmem:[%s1 + $0x38] sm:$0xff]
    %v64 = vld [vmem:[%s1 + $0x40] sm:$0xff]
    %v65 = vld [vmem:[%s1 + $0x48] sm:$0xff]
    %v66 = vld [vmem:[%s1 + $0x50] sm:$0xff]
    %v67 = vld [vmem:[%s1 + $0x58] sm:$0xff]
    %v68 = vld [vmem:[%s1 + $0x60] sm:$0xff]
    %v69 = vld [vmem:[%s1 + $0x68] sm:$0xff]
    %v70 = vld [vmem:[%s1 + $0x70] sm:$0xff]
    %v71 = vld [vmem:[%s1 + $0x78] sm:$0xff]
    %v72 = vld [vmem:[%s1 + $0x80] sm:$0xff]
    %v73 = vld [vmem:[%s1 + $0x88] sm:$0xff]
    %v74 = vld [vmem:[%s1 + $0x90] sm:$0xff]
    %v75 = vld [vmem:[%s1 + $0x98] sm:$0xff]
    %v76 = vld [vmem:[%s1 + $0xa0] sm:$0xff]
    %v77 = vld [vmem:[%s1 + $0xa8] sm:$0xff]
    %v78 = vld [vmem:[%s1 + $0xb0] sm:$0xff]
    %v79 = vld [vmem:[%s1 + $0xb8] sm:$0xff]
    %v80 = vld [vmem:[%s1 + $0xc0] sm:$0xff]
    %v81 = vld [vmem:[%s1 + $0xc8] sm:$0xff]
    %v82 = vld [vmem:[%s1 + $0xd0] sm:$0xff]
    %v83 = vld [vmem:[%s1 + $0xd8] sm:$0xff]
    %v84 = vld [vmem:[%s1 + $0xe0] sm:$0xff]
    %v85 = vld [vmem:[%s1 + $0xe8] sm:$0xff]
    %v86 = vld [vmem:[%s1 + $0xf0] sm:$0xff]
    %v87 = vld [vmem:[%s1 + $0xf8] sm:$0xff]
    %v88 = vld [vmem:[%s1 + $0x100] sm:$0xff]
    %v89 = vld [vmem:[%s1 + $0x108] sm:$0xff]
    %v90 = vld [vmem:[%s1 + $0x110] sm:$0xff]
    %v91 = vld [vmem:[%s1 + $0x118] sm:$0xff]
    %v92 = vld [vmem:[%s1 + $0x120] sm:$0xff]
    %v93 = vld [vmem:[%s1 + $0x128] sm:$0xff]
    %v94 = vld [vmem:[%s1 + $0x130] sm:$0xff]
    %v95 = vld [vmem:[%s1 + $0x138] sm:$0xff]
    %v96 = vld [vmem:[%s1 + $0x140] sm:$0xff]
    %v97 = vld [vmem:[%s1 + $0x148] sm:$0xff]
    %v98 = vld [vmem:[%s1 + $0x150] sm:$0xff]
    %v99 = vld [vmem:[%s1 + $0x158] sm:$0xff]
    %v100 = vld [vmem:[%s1 + $0x160] sm:$0xff]
    %v101 = vld [vmem:[%s1 + $0x168] sm:$0xff]
    %v102 = vld [vmem:[%s1 + $0x170] sm:$0xff]
    %v103 = vld [vmem:[%s1 + $0x178] sm:$0xff]
    %v104 = vld [vmem:[%s1 + $0x180] sm:$0xff]
    %v105 = vld [vmem:[%s1 + $0x188] sm:$0xff]
    %v106 = vld [vmem:[%s1 + $0x190] sm:$0xff]
    %v107 = vld [vmem:[%s1 + $0x198] sm:$0xff]
    %v108 = vld [vmem:[%s1 + $0x1a0] sm:$0xff]
    %v109 = vld [vmem:[%s1 + $0x1a8] sm:$0xff]
    %v110 = vld [vmem:[%s1 + $0x1b0] sm:$0xff]
    %v111 = vld [vmem:[%s1 + $0x1b8] sm:$0xff]
    %v112 = vld [vmem:[%s1 + $0x1c0] sm:$0xff]
    %v113 = vld [vmem:[%s1 + $0x1c8] sm:$0xff]
    %v114 = vld [vmem:[%s1 + $0x1d0] sm:$0xff]
    %v115 = vld [vmem:[%s1 + $0x1d8] sm:$0xff]
    %v116 = vld [vmem:[%s1 + $0x1e0] sm:$0xff]
    %v117 = vld [vmem:[%s1 + $0x1e8] sm:$0xff]
    %v118 = vld [vmem:[%s1 + $0x1f0] sm:$0xff]
    %v119 = vld [vmem:[%s1 + $0x1f8] sm:$0xff]
    %v120 = vld [vmem:[%s1 + $0x200] sm:$0xff]
    %v121 = vld [vmem:[%s1 + $0x208] sm:$0xff]
    %v122 = vld [vmem:[%s1 + $0x210] sm:$0xff]
    %v123 = vld [vmem:[%s1 + $0x218] sm:$0xff]
    %v124 = vld [vmem:[%s1 + $0x220] sm:$0xff]
    %v125 = vld [vmem:[%s1 + $0x228] sm:$0xff]
    %v126 = vld [vmem:[%s1 + $0x230] sm:$0xff]
    %v127 = vld [vmem:[%s1 + $0x238] sm:$0xff]
    %v128 = vld [vmem:[%s1 + $0x240] sm:$0xff]
    %v129 = vld [vmem:[%s1 + $0x248] sm:$0xff]
    %v130 = vld [vmem:[%s1 + $0x250] sm:$0xff]
    %v131 = vld [vmem:[%s1 + $0x258] sm:$0xff]
    %v132 = vld [vmem:[%s1 + $0x260] sm:$0xff]
    %v133 = vld [vmem:[%s1 + $0x268] sm:$0xff]
    %v134 = vld [vmem:[%s1 + $0x270] sm:$0xff]
    %v135 = vld [vmem:[%s1 + $0x278] sm:$0xff]
    %v136 = vld [vmem:[%s1 + $0x280] sm:$0xff]
    %v137 = vld [vmem:[%s1 + $0x288] sm:$0xff]
    %v138 = vld [vmem:[%s1 + $0x290] sm:$0xff]
    %v139 = vld [vmem:[%s1 + $0x298] sm:$0xff]
    %v140 = vld [vmem:[%s1 + $0x2a0] sm:$0xff]
    %v141 = vld [vmem:[%s1 + $0x2a8] sm:$0xff]
    %v142 = vld [vmem:[%s1 + $0x2b0] sm:$0xff]
    %v143 = vld [vmem:[%s1 + $0x2b8] sm:$0xff]
    %v144 = vld [vmem:[%s1 + $0x2c0] sm:$0xff]
    %v145 = vld [vmem:[%s1 + $0x2c8] sm:$0xff]
    %v146 = vld [vmem:[%s1 + $0x2d0] sm:$0xff]
    %v147 = vld [vmem:[%s1 + $0x2d8] sm:$0xff]
    %v148 = vld [vmem:[%s1 + $0x2e0] sm:$0xff]
    %v149 = vld [vmem:[%s1 + $0x2e8] sm:$0xff]
    %v150 = vld [vmem:[%s1 + $0x2f0] sm:$0xff]
    %v151 = vld [vmem:[%s1 + $0x2f8] sm:$0xff]
    %v152 = vld [vmem:[%s1 + $0x300] sm:$0xff]
    %v153 = vld [vmem:[%s1 + $0x308] sm:$0xff]
    %v154 = vld [vmem:[%s1 + $0x310] sm:$0xff]
    %v155 = vld [vmem:[%s1 + $0x318] sm:$0xff]
    %v156 = vld [vmem:[%s1 + $0x320] sm:$0xff]
    %v157 = vld [vmem:[%s1 + $0x328] sm:$0xff]
    %v158 = vld [vmem:[%s1 + $0x330] sm:$0xff]
    %v159 = vld [vmem:[%s1 + $0x338] sm:$0xff]
    %v160 = vld [vmem:[%s1 + $0x340] sm:$0xff]
    %v161 = vld [vmem:[%s1 + $0x348] sm:$0xff]
    %v162 = vld [vmem:[%s1 + $0x350] sm:$0xff]
    %v163 = vld [vmem:[%s1 + $0x358] sm:$0xff]
    %v164 = vld [vmem:[%s1 + $0x360] sm:$0xff]
    %v165 = vld [vmem:[%s1 + $0x368] sm:$0xff]
    %v166 = vld [vmem:[%s1 + $0x370] sm:$0xff]
    %v167 = vld [vmem:[%s1 + $0x378] sm:$0xff]
    %v168 = vld [vmem:[%s1 + $0x380] sm:$0xff]
    %v169 = vld [vmem:[%s1 + $0x388] sm:$0xff]
    %v170 = vld [vmem:[%s1 + $0x390] sm:$0xff]
    %v171 = vld [vmem:[%s1 + $0x398] sm:$0xff]
    %v172 = vld [vmem:[%s1 + $0x3a0] sm:$0xff]
    %v173 = vld [vmem:[%s1 + $0x3a8] sm:$0xff]
    %v174 = vld [vmem:[%s1 + $0x3b0] sm:$0xff]
    %v175 = vld [vmem:[%s1 + $0x3b8] sm:$0xff]
    %v176 = vld [vmem:[%s1 + $0x3c0] sm:$0xff]
    %v177 = vld [vmem:[%s1 + $0x3c8] sm:$0xff]
    %v178 = vld [vmem:[%s1 + $0x3d0] sm:$0xff]
    %v179 = vld [vmem:[%s1 + $0x3d8] sm:$0xff]
    %v180 = vld [vmem:[%s1 + $0x3e0] sm:$0xff]
    %v181 = vld [vmem:[%s1 + $0x3e8] sm:$0xff]
    %v182 = vld [vmem:[%s1 + $0x3f0] sm:$0xff]
    %v183 = vld [vmem:[%s1 + $0x3f8] sm:$0xff]
    %v192 = vunpack.c.l.b16 %v32
    %v193 = vunpack.c.h.b16 %v32
    %v194 = vunpack.c.l.b16 %v33
    %v195 = vunpack.c.h.b16 %v33
    %v196 = vunpack.c.l.b16 %v34
    %v197 = vunpack.c.h.b16 %v34
    %v198 = vunpack.c.l.b16 %v35
    %v199 = vunpack.c.h.b16 %v35
    %v200 = vunpack.c.l.b16 %v36
    %v201 = vunpack.c.h.b16 %v36
    %v202 = vunpack.c.l.b16 %v37
    %v203 = vunpack.c.h.b16 %v37
    %v204 = vunpack.c.l.b16 %v38
    %v205 = vunpack.c.h.b16 %v38
    %v206 = vunpack.c.l.b16 %v39
    %v207 = vunpack.c.h.b16 %v39
    %v208 = vpack.c.b16 %v196, %v192
    %v209 = vpack.c.b16 %v197, %v193
    %v210 = vpack.c.b16 %v198, %v194
    %v211 = vpack.c.b16 %v199, %v195
    %v212 = vpack.c.b16 %v204, %v200
    %v213 = vpack.c.b16 %v205, %v201
    %v214 = vpack.c.b16 %v206, %v202
    %v215 = vpack.c.b16 %v207, %v203
    %v352 = vunpack.c.l.b16 %v56
    %v353 = vunpack.c.h.b16 %v56
    %v354 = vunpack.c.l.b16 %v57
    %v355 = vunpack.c.h.b16 %v57
    %v356 = vunpack.c.l.b16 %v58
    %v357 = vunpack.c.h.b16 %v58
    %v358 = vunpack.c.l.b16 %v59
    %v359 = vunpack.c.h.b16 %v59
    %v360 = vunpack.c.l.b16 %v60
    %v361 = vunpack.c.h.b16 %v60
    %v362 = vunpack.c.l.b16 %v61
    %v363 = vunpack.c.h.b16 %v61
    %v364 = vunpack.c.l.b16 %v62
    %v365 = vunpack.c.h.b16 %v62
    %v366 = vunpack.c.l.b16 %v63
    %v367 = vunpack.c.h.b16 %v63
    %v368 = vunpack.c.l.b16 %v64
    %v369 = vunpack.c.h.b16 %v64
    %v370 = vunpack.c.l.b16 %v65
    %v371 = vunpack.c.h.b16 %v65
    %v372 = vunpack.c.l.b16 %v66
    %v373 = vunpack.c.h.b16 %v66
    %v374 = vunpack.c.l.b16 %v67
    %v375 = vunpack.c.h.b16 %v67
    %v376 = vunpack.c.l.b16 %v68
    %v377 = vunpack.c.h.b16 %v68
    %v378 = vunpack.c.l.b16 %v69
    %v379 = vunpack.c.h.b16 %v69
    %v380 = vunpack.c.l.b16 %v70
    %v381 = vunpack.c.h.b16 %v70
    %v382 = vunpack.c.l.b16 %v71
    %v383 = vunpack.c.h.b16 %v71
    %v384 = vunpack.c.l.b16 %v72
    %v385 = vunpack.c.h.b16 %v72
    %v386 = vunpack.c.l.b16 %v73
    %v387 = vunpack.c.h.b16 %v73
    %v388 = vunpack.c.l.b16 %v74
    %v389 = vunpack.c.h.b16 %v74
    %v390 = vunpack.c.l.b16 %v75
    %v391 = vunpack.c.h.b16 %v75
    %v392 = vunpack.c.l.b16 %v76
    %v393 = vunpack.c.h.b16 %v76
    %v394 = vunpack.c.l.b16 %v77
    %v395 = vunpack.c.h.b16 %v77
    %v396 = vunpack.c.l.b16 %v78
    %v397 = vunpack.c.h.b16 %v78
    %v398 = vunpack.c.l.b16 %v79
    %v399 = vunpack.c.h.b16 %v79
    %v400 = vunpack.c.l.b16 %v80
    %v401 = vunpack.c.h.b16 %v80
    %v402 = vunpack.c.l.b16 %v81
    %v403 = vunpack.c.h.b16 %v81
    %v404 = vunpack.c.l.b16 %v82
    %v405 = vunpack.c.h.b16 %v82
    %v406 = vunpack.c.l.b16 %v83
    %v407 = vunpack.c.h.b16 %v83
    %v408 = vunpack.c.l.b16 %v84
    %v409 = vunpack.c.h.b16 %v84
    %v410 = vunpack.c.l.b16 %v85
    %v411 = vunpack.c.h.b16 %v85
    %v412 = vunpack.c.l.b16 %v86
    %v413 = vunpack.c.h.b16 %v86
    %v414 = vunpack.c.l.b16 %v87
    %v415 = vunpack.c.h.b16 %v87
    %v416 = vunpack.c.l.b16 %v88
    %v417 = vunpack.c.h.b16 %v88
    %v418 = vunpack.c.l.b16 %v89
    %v419 = vunpack.c.h.b16 %v89
    %v420 = vunpack.c.l.b16 %v90
    %v421 = vunpack.c.h.b16 %v90
    %v422 = vunpack.c.l.b16 %v91
    %v423 = vunpack.c.h.b16 %v91
    %v424 = vunpack.c.l.b16 %v92
    %v425 = vunpack.c.h.b16 %v92
    %v426 = vunpack.c.l.b16 %v93
    %v427 = vunpack.c.h.b16 %v93
    %v428 = vunpack.c.l.b16 %v94
    %v429 = vunpack.c.h.b16 %v94
    %v430 = vunpack.c.l.b16 %v95
    %v431 = vunpack.c.h.b16 %v95
    %v432 = vunpack.c.l.b16 %v96
    %v433 = vunpack.c.h.b16 %v96
    %v434 = vunpack.c.l.b16 %v97
    %v435 = vunpack.c.h.b16 %v97
    %v436 = vunpack.c.l.b16 %v98
    %v437 = vunpack.c.h.b16 %v98
    %v438 = vunpack.c.l.b16 %v99
    %v439 = vunpack.c.h.b16 %v99
    %v440 = vunpack.c.l.b16 %v100
    %v441 = vunpack.c.h.b16 %v100
    %v442 = vunpack.c.l.b16 %v101
    %v443 = vunpack.c.h.b16 %v101
    %v444 = vunpack.c.l.b16 %v102
    %v445 = vunpack.c.h.b16 %v102
    %v446 = vunpack.c.l.b16 %v103
    %v447 = vunpack.c.h.b16 %v103
    %v448 = vunpack.c.l.b16 %v104
    %v449 = vunpack.c.h.b16 %v104
    %v450 = vunpack.c.l.b16 %v105
    %v451 = vunpack.c.h.b16 %v105
    %v452 = vunpack.c.l.b16 %v106
    %v453 = vunpack.c.h.b16 %v106
    %v454 = vunpack.c.l.b16 %v107
    %v455 = vunpack.c.h.b16 %v107
    %v456 = vunpack.c.l.b16 %v108
    %v457 = vunpack.c.h.b16 %v108
    %v458 = vunpack.c.l.b16 %v109
    %v459 = vunpack.c.h.b16 %v109
    %v460 = vunpack.c.l.b16 %v110
    %v461 = vunpack.c.h.b16 %v110
    %v462 = vunpack.c.l.b16 %v111
    %v463 = vunpack.c.h.b16 %v111
    %v464 = vunpack.c.l.b16 %v112
    %v465 = vunpack.c.h.b16 %v112
    %v466 = vunpack.c.l.b16 %v113
    %v467 = vunpack.c.h.b16 %v113
    %v468 = vunpack.c.l.b16 %v114
    %v469 = vunpack.c.h.b16 %v114
    %v470 = vunpack.c.l.b16 %v115
    %v471 = vunpack.c.h.b16 %v115
    %v472 = vunpack.c.l.b16 %v116
    %v473 = vunpack.c.h.b16 %v116
    %v474 = vunpack.c.l.b16 %v117
    %v475 = vunpack.c.h.b16 %v117
    %v476 = vunpack.c.l.b16 %v118
    %v477 = vunpack.c.h.b16 %v118
    %v478 = vunpack.c.l.b16 %v119
    %v479 = vunpack.c.h.b16 %v119
    %v480 = vunpack.c.l.b16 %v120
    %v481 = vunpack.c.h.b16 %v120
    %v482 = vunpack.c.l.b16 %v121
    %v483 = vunpack.c.h.b16 %v121
    %v484 = vunpack.c.l.b16 %v122
    %v485 = vunpack.c.h.b16 %v122
    %v486 = vunpack.c.l.b16 %v123
    %v487 = vunpack.c.h.b16 %v123
    %v488 = vunpack.c.l.b16 %v124
    %v489 = vunpack.c.h.b16 %v124
    %v490 = vunpack.c.l.b16 %v125
    %v491 = vunpack.c.h.b16 %v125
    %v492 = vunpack.c.l.b16 %v126
    %v493 = vunpack.c.h.b16 %v126
    %v494 = vunpack.c.l.b16 %v127
    %v495 = vunpack.c.h.b16 %v127
    %v496 = vunpack.c.l.b16 %v128
    %v497 = vunpack.c.h.b16 %v128
    %v498 = vunpack.c.l.b16 %v129
    %v499 = vunpack.c.h.b16 %v129
    %v500 = vunpack.c.l.b16 %v130
    %v501 = vunpack.c.h.b16 %v130
    %v502 = vunpack.c.l.b16 %v131
    %v503 = vunpack.c.h.b16 %v131
    %v504 = vunpack.c.l.b16 %v132
    %v505 = vunpack.c.h.b16 %v132
    %v506 = vunpack.c.l.b16 %v133
    %v507 = vunpack.c.h.b16 %v133
    %v508 = vunpack.c.l.b16 %v134
    %v509 = vunpack.c.h.b16 %v134
    %v510 = vunpack.c.l.b16 %v135
    %v511 = vunpack.c.h.b16 %v135
    %v512 = vunpack.c.l.b16 %v136
    %v513 = vunpack.c.h.b16 %v136
    %v514 = vunpack.c.l.b16 %v137
    %v515 = vunpack.c.h.b16 %v137
    %v516 = vunpack.c.l.b16 %v138
    %v517 = vunpack.c.h.b16 %v138
    %v518 = vunpack.c.l.b16 %v139
    %v519 = vunpack.c.h.b16 %v139
    %v520 = vunpack.c.l.b16 %v140
    %v521 = vunpack.c.h.b16 %v140
    %v522 = vunpack.c.l.b16 %v141
    %v523 = vunpack.c.h.b16 %v141
    %v524 = vunpack.c.l.b16 %v142
    %v525 = vunpack.c.h.b16 %v142
    %v526 = vunpack.c.l.b16 %v143
    %v527 = vunpack.c.h.b16 %v143
    %v528 = vunpack.c.l.b16 %v144
    %v529 = vunpack.c.h.b16 %v144
    %v530 = vunpack.c.l.b16 %v145
    %v531 = vunpack.c.h.b16 %v145
    %v532 = vunpack.c.l.b16 %v146
    %v533 = vunpack.c.h.b16 %v146
    %v534 = vunpack.c.l.b16 %v147
    %v535 = vunpack.c.h.b16 %v147
    %v536 = vunpack.c.l.b16 %v148
    %v537 = vunpack.c.h.b16 %v148
    %v538 = vunpack.c.l.b16 %v149
    %v539 = vunpack.c.h.b16 %v149
    %v540 = vunpack.c.l.b16 %v150
    %v541 = vunpack.c.h.b16 %v150
    %v542 = vunpack.c.l.b16 %v151
    %v543 = vunpack.c.h.b16 %v151
    %v544 = vunpack.c.l.b16 %v152
    %v545 = vunpack.c.h.b16 %v152
    %v546 = vunpack.c.l.b16 %v153
    %v547 = vunpack.c.h.b16 %v153
    %v548 = vunpack.c.l.b16 %v154
    %v549 = vunpack.c.h.b16 %v154
    %v550 = vunpack.c.l.b16 %v155
    %v551 = vunpack.c.h.b16 %v155
    %v552 = vunpack.c.l.b16 %v156
    %v553 = vunpack.c.h.b16 %v156
    %v554 = vunpack.c.l.b16 %v157
    %v555 = vunpack.c.h.b16 %v157
    %v556 = vunpack.c.l.b16 %v158
    %v557 = vunpack.c.h.b16 %v158
    %v558 = vunpack.c.l.b16 %v159
    %v559 = vunpack.c.h.b16 %v159
    %v560 = vunpack.c.l.b16 %v160
    %v561 = vunpack.c.h.b16 %v160
    %v562 = vunpack.c.l.b16 %v161
    %v563 = vunpack.c.h.b16 %v161
    %v564 = vunpack.c.l.b16 %v162
    %v565 = vunpack.c.h.b16 %v162
    %v566 = vunpack.c.l.b16 %v163
    %v567 = vunpack.c.h.b16 %v163
    %v568 = vunpack.c.l.b16 %v164
    %v569 = vunpack.c.h.b16 %v164
    %v570 = vunpack.c.l.b16 %v165
    %v571 = vunpack.c.h.b16 %v165
    %v572 = vunpack.c.l.b16 %v166
    %v573 = vunpack.c.h.b16 %v166
    %v574 = vunpack.c.l.b16 %v167
    %v575 = vunpack.c.h.b16 %v167
    %v576 = vunpack.c.l.b16 %v168
    %v577 = vunpack.c.h.b16 %v168
    %v578 = vunpack.c.l.b16 %v169
    %v579 = vunpack.c.h.b16 %v169
    %v580 = vunpack.c.l.b16 %v170
    %v581 = vunpack.c.h.b16 %v170
    %v582 = vunpack.c.l.b16 %v171
    %v583 = vunpack.c.h.b16 %v171
    %v584 = vunpack.c.l.b16 %v172
    %v585 = vunpack.c.h.b16 %v172
    %v586 = vunpack.c.l.b16 %v173
    %v587 = vunpack.c.h.b16 %v173
    %v588 = vunpack.c.l.b16 %v174
    %v589 = vunpack.c.h.b16 %v174
    %v590 = vunpack.c.l.b16 %v175
    %v591 = vunpack.c.h.b16 %v175
    %v592 = vunpack.c.l.b16 %v176
    %v593 = vunpack.c.h.b16 %v176
    %v594 = vunpack.c.l.b16 %v177
    %v595 = vunpack.c.h.b16 %v177
    %v596 = vunpack.c.l.b16 %v178
    %v597 = vunpack.c.h.b16 %v178
    %v598 = vunpack.c.l.b16 %v179
    %v599 = vunpack.c.h.b16 %v179
    %v600 = vunpack.c.l.b16 %v180
    %v601 = vunpack.c.h.b16 %v180
    %v602 = vunpack.c.l.b16 %v181
    %v603 = vunpack.c.h.b16 %v181
    %v604 = vunpack.c.l.b16 %v182
    %v605 = vunpack.c.h.b16 %v182
    %v606 = vunpack.c.l.b16 %v183
    %v607 = vunpack.c.h.b16 %v183
    %v608 = vpack.c.b16 %v356, %v352
    %v609 = vpack.c.b16 %v357, %v353
    %v610 = vpack.c.b16 %v358, %v354
    %v611 = vpack.c.b16 %v359, %v355
    %v612 = vpack.c.b16 %v364, %v360
    %v613 = vpack.c.b16 %v365, %v361
    %v614 = vpack.c.b16 %v366, %v362
    %v615 = vpack.c.b16 %v367, %v363
    %v616 = vpack.c.b16 %v372, %v368
    %v617 = vpack.c.b16 %v373, %v369
    %v618 = vpack.c.b16 %v374, %v370
    %v619 = vpack.c.b16 %v375, %v371
    %v620 = vpack.c.b16 %v380, %v376
    %v621 = vpack.c.b16 %v381, %v377
    %v622 = vpack.c.b16 %v382, %v378
    %v623 = vpack.c.b16 %v383, %v379
    %v624 = vpack.c.b16 %v388, %v384
    %v625 = vpack.c.b16 %v389, %v385
    %v626 = vpack.c.b16 %v390, %v386
    %v627 = vpack.c.b16 %v391, %v387
    %v628 = vpack.c.b16 %v396, %v392
    %v629 = vpack.c.b16 %v397, %v393
    %v630 = vpack.c.b16 %v398, %v394
    %v631 = vpack.c.b16 %v399, %v395
    %v632 = vpack.c.b16 %v404, %v400
    %v633 = vpack.c.b16 %v405, %v401
    %v634 = vpack.c.b16 %v406, %v402
    %v635 = vpack.c.b16 %v407, %v403
    %v636 = vpack.c.b16 %v412, %v408
    %v637 = vpack.c.b16 %v413, %v409
    %v638 = vpack.c.b16 %v414, %v410
    %v639 = vpack.c.b16 %v415, %v411
    %v640 = vpack.c.b16 %v420, %v416
    %v641 = vpack.c.b16 %v421, %v417
    %v642 = vpack.c.b16 %v422, %v418
    %v643 = vpack.c.b16 %v423, %v419
    %v644 = vpack.c.b16 %v428, %v424
    %v645 = vpack.c.b16 %v429, %v425
    %v646 = vpack.c.b16 %v430, %v426
    %v647 = vpack.c.b16 %v431, %v427
    %v648 = vpack.c.b16 %v436, %v432
    %v649 = vpack.c.b16 %v437, %v433
    %v650 = vpack.c.b16 %v438, %v434
    %v651 = vpack.c.b16 %v439, %v435
    %v652 = vpack.c.b16 %v444, %v440
    %v653 = vpack.c.b16 %v445, %v441
    %v654 = vpack.c.b16 %v446, %v442
    %v655 = vpack.c.b16 %v447, %v443
    %v656 = vpack.c.b16 %v452, %v448
    %v657 = vpack.c.b16 %v453, %v449
    %v658 = vpack.c.b16 %v454, %v450
    %v659 = vpack.c.b16 %v455, %v451
    %v660 = vpack.c.b16 %v460, %v456
    %v661 = vpack.c.b16 %v461, %v457
    %v662 = vpack.c.b16 %v462, %v458
    %v663 = vpack.c.b16 %v463, %v459
    %v664 = vpack.c.b16 %v468, %v464
    %v665 = vpack.c.b16 %v469, %v465
    %v666 = vpack.c.b16 %v470, %v466
    %v667 = vpack.c.b16 %v471, %v467
    %v668 = vpack.c.b16 %v476, %v472
    %v669 = vpack.c.b16 %v477, %v473
    %v670 = vpack.c.b16 %v478, %v474
    %v671 = vpack.c.b16 %v479, %v475
    %v672 = vpack.c.b16 %v484, %v480
    %v673 = vpack.c.b16 %v485, %v481
    %v674 = vpack.c.b16 %v486, %v482
    %v675 = vpack.c.b16 %v487, %v483
    %v676 = vpack.c.b16 %v492, %v488
    %v677 = vpack.c.b16 %v493, %v489
    %v678 = vpack.c.b16 %v494, %v490
    %v679 = vpack.c.b16 %v495, %v491
    %v680 = vpack.c.b16 %v500, %v496
    %v681 = vpack.c.b16 %v501, %v497
    %v682 = vpack.c.b16 %v502, %v498
    %v683 = vpack.c.b16 %v503, %v499
    %v684 = vpack.c.b16 %v508, %v504
    %v685 = vpack.c.b16 %v509, %v505
    %v686 = vpack.c.b16 %v510, %v506
    %v687 = vpack.c.b16 %v511, %v507
    %v688 = vpack.c.b16 %v516, %v512
    %v689 = vpack.c.b16 %v517, %v513
    %v690 = vpack.c.b16 %v518, %v514
    %v691 = vpack.c.b16 %v519, %v515
    %v692 = vpack.c.b16 %v524, %v520
    %v693 = vpack.c.b16 %v525, %v521
    %v694 = vpack.c.b16 %v526, %v522
    %v695 = vpack.c.b16 %v527, %v523
    %v696 = vpack.c.b16 %v532, %v528
    %v697 = vpack.c.b16 %v533, %v529
    %v698 = vpack.c.b16 %v534, %v530
    %v699 = vpack.c.b16 %v535, %v531
    %v700 = vpack.c.b16 %v540, %v536
    %v701 = vpack.c.b16 %v541, %v537
    %v702 = vpack.c.b16 %v542, %v538
    %v703 = vpack.c.b16 %v543, %v539
    %v704 = vpack.c.b16 %v548, %v544
    %v705 = vpack.c.b16 %v549, %v545
    %v706 = vpack.c.b16 %v550, %v546
    %v707 = vpack.c.b16 %v551, %v547
    %v708 = vpack.c.b16 %v556, %v552
    %v709 = vpack.c.b16 %v557, %v553
    %v710 = vpack.c.b16 %v558, %v554
    %v711 = vpack.c.b16 %v559, %v555
    %v712 = vpack.c.b16 %v564, %v560
    %v713 = vpack.c.b16 %v565, %v561
    %v714 = vpack.c.b16 %v566, %v562
    %v715 = vpack.c.b16 %v567, %v563
    %v716 = vpack.c.b16 %v572, %v568
    %v717 = vpack.c.b16 %v573, %v569
    %v718 = vpack.c.b16 %v574, %v570
    %v719 = vpack.c.b16 %v575, %v571
    %v720 = vpack.c.b16 %v580, %v576
    %v721 = vpack.c.b16 %v581, %v577
    %v722 = vpack.c.b16 %v582, %v578
    %v723 = vpack.c.b16 %v583, %v579
    %v724 = vpack.c.b16 %v588, %v584
    %v725 = vpack.c.b16 %v589, %v585
    %v726 = vpack.c.b16 %v590, %v586
    %v727 = vpack.c.b16 %v591, %v587
    %v728 = vpack.c.b16 %v596, %v592
    %v729 = vpack.c.b16 %v597, %v593
    %v730 = vpack.c.b16 %v598, %v594
    %v731 = vpack.c.b16 %v599, %v595
    %v732 = vpack.c.b16 %v604, %v600
    %v733 = vpack.c.b16 %v605, %v601
    %v734 = vpack.c.b16 %v606, %v602
    %v735 = vpack.c.b16 %v607, %v603
    %864 = vmatprep.subr.bf16.mxu0 %v637
    %865 = vmatpush1.bf16.msra.mxu0 %v636
    %866 = vmatprep.subr.bf16.mxu0 %v633
    %867 = vmatpush1.bf16.msra.mxu0 %v632
    %868 = vmatprep.subr.bf16.mxu0 %v629
    %869 = vmatpush1.bf16.msra.mxu0 %v628
    %870 = vmatprep.subr.bf16.mxu0 %v625
    %871 = vmatpush1.bf16.msra.mxu0 %v624
    %872 = vmatprep.subr.bf16.mxu0 %v621
    %873 = vmatpush1.bf16.msra.mxu0 %v620
    %874 = vmatprep.subr.bf16.mxu0 %v617
    %875 = vmatpush1.bf16.msra.mxu0 %v616
    %876 = vmatprep.subr.bf16.mxu0 %v613
    %877 = vmatpush1.bf16.msra.mxu0 %v612
    %878 = vmatprep.subr.bf16.mxu0 %v609
    %879 = vmatpush1.bf16.msra.mxu0 %v608
    %880 = vmatprep.subr.bf16.mxu0 %v669
    %881 = vmatpush2.bf16.msra.mxu0 %v668
    %882 = vmatprep.subr.bf16.mxu0 %v665
    %883 = vmatpush2.bf16.msra.mxu0 %v664
    %884 = vmatprep.subr.bf16.mxu0 %v661
    %885 = vmatpush2.bf16.msra.mxu0 %v660
    %886 = vmatprep.subr.bf16.mxu0 %v657
    %887 = vmatpush2.bf16.msra.mxu0 %v656
    %888 = vmatprep.subr.bf16.mxu0 %v653
    %889 = vmatpush2.bf16.msra.mxu0 %v652
    %890 = vmatprep.subr.bf16.mxu0 %v649
    %891 = vmatpush2.bf16.msra.mxu0 %v648
    %892 = vmatprep.subr.bf16.mxu0 %v645
    %893 = vmatpush2.bf16.msra.mxu0 %v644
    %894 = vmatprep.subr.bf16.mxu0 %v641
    %895 = vmatpush2.bf16.msra.mxu0 %v640
    %896 = vmatprep.mubr.bf16.mxu0 %v209
    %897 = vmatmul.mubr.bf16.gmra.mxu0 %v208
    %v898 = vpop.f32.mrf.mxu0
    %v899 = vadd.f32 0.0, %v898
    %v900 = vpop.f32.mrf.mxu0
    %v901 = vadd.f32 0.0, %v900
    %v902 = vpop.f32.mrf.mxu0
    %v903 = vadd.f32 0.0, %v902
    %v904 = vpop.f32.mrf.mxu0
    %v905 = vadd.f32 0.0, %v904
    %906 = vmatprep.mubr.bf16.mxu0 %v213
    %907 = vmatmul.mubr.bf16.gmra.mxu0 %v212
    %v908 = vpop.f32.mrf.mxu0
    %v909 = vadd.f32 0.0, %v908
    %v910 = vpop.f32.mrf.mxu0
    %v911 = vadd.f32 0.0, %v910
    %v912 = vpop.f32.mrf.mxu0
    %v913 = vadd.f32 0.0, %v912
    %v914 = vpop.f32.mrf.mxu0
    %v915 = vadd.f32 0.0, %v914
    %916 = vdwg.mxu0
    %917 = vmatprep.subr.bf16.mxu0 %v701
    %918 = vmatpush1.bf16.msra.mxu0 %v700
    %919 = vmatprep.subr.bf16.mxu0 %v697
    %920 = vmatpush1.bf16.msra.mxu0 %v696
    %921 = vmatprep.subr.bf16.mxu0 %v693
    %922 = vmatpush1.bf16.msra.mxu0 %v692
    %923 = vmatprep.subr.bf16.mxu0 %v689
    %924 = vmatpush1.bf16.msra.mxu0 %v688
    %925 = vmatprep.subr.bf16.mxu0 %v685
    %926 = vmatpush1.bf16.msra.mxu0 %v684
    %927 = vmatprep.subr.bf16.mxu0 %v681
    %928 = vmatpush1.bf16.msra.mxu0 %v680
    %929 = vmatprep.subr.bf16.mxu0 %v677
    %930 = vmatpush1.bf16.msra.mxu0 %v676
    %931 = vmatprep.subr.bf16.mxu0 %v673
    %932 = vmatpush1.bf16.msra.mxu0 %v672
    %933 = vmatprep.subr.bf16.mxu0 %v733
    %934 = vmatpush2.bf16.msra.mxu0 %v732
    %935 = vmatprep.subr.bf16.mxu0 %v729
    %936 = vmatpush2.bf16.msra.mxu0 %v728
    %937 = vmatprep.subr.bf16.mxu0 %v725
    %938 = vmatpush2.bf16.msra.mxu0 %v724
    %939 = vmatprep.subr.bf16.mxu0 %v721
    %940 = vmatpush2.bf16.msra.mxu0 %v720
    %941 = vmatprep.subr.bf16.mxu0 %v717
    %942 = vmatpush2.bf16.msra.mxu0 %v716
    %943 = vmatprep.subr.bf16.mxu0 %v713
    %944 = vmatpush2.bf16.msra.mxu0 %v712
    %945 = vmatprep.subr.bf16.mxu0 %v709
    %946 = vmatpush2.bf16.msra.mxu0 %v708
    %947 = vmatprep.subr.bf16.mxu0 %v705
    %948 = vmatpush2.bf16.msra.mxu0 %v704
    %949 = vmatprep.mubr.bf16.mxu0 %v211
    %950 = vmatmul.mubr.bf16.gmra.mxu0 %v210
    %v951 = vpop.f32.mrf.mxu0
    %v952 = vadd.f32 %v899, %v951
    %v953 = vpop.f32.mrf.mxu0
    %v954 = vadd.f32 %v901, %v953
    %v955 = vpop.f32.mrf.mxu0
    %v956 = vadd.f32 %v903, %v955
    %v957 = vpop.f32.mrf.mxu0
    %v958 = vadd.f32 %v905, %v957
    %959 = vmatprep.mubr.bf16.mxu0 %v215
    %960 = vmatmul.mubr.bf16.gmra.mxu0 %v214
    %v961 = vpop.f32.mrf.mxu0
    %v962 = vadd.f32 %v909, %v961
    %v963 = vpop.f32.mrf.mxu0
    %v964 = vadd.f32 %v911, %v963
    %v965 = vpop.f32.mrf.mxu0
    %v966 = vadd.f32 %v913, %v965
    %v967 = vpop.f32.mrf.mxu0
    %v968 = vadd.f32 %v915, %v967
    %969 = vdwg.mxu0
    %970 = vmatprep.subr.bf16.mxu0 %v639
    %971 = vmatpush1.bf16.msra.mxu0 %v638
    %972 = vmatprep.subr.bf16.mxu0 %v635
    %973 = vmatpush1.bf16.msra.mxu0 %v634
    %974 = vmatprep.subr.bf16.mxu0 %v631
    %975 = vmatpush1.bf16.msra.mxu0 %v630
    %976 = vmatprep.subr.bf16.mxu0 %v627
    %977 = vmatpush1.bf16.msra.mxu0 %v626
    %978 = vmatprep.subr.bf16.mxu0 %v623
    %979 = vmatpush1.bf16.msra.mxu0 %v622
    %980 = vmatprep.subr.bf16.mxu0 %v619
    %981 = vmatpush1.bf16.msra.mxu0 %v618
    %982 = vmatprep.subr.bf16.mxu0 %v615
    %983 = vmatpush1.bf16.msra.mxu0 %v614
    %984 = vmatprep.subr.bf16.mxu0 %v611
    %985 = vmatpush1.bf16.msra.mxu0 %v610
    %986 = vmatprep.subr.bf16.mxu0 %v671
    %987 = vmatpush2.bf16.msra.mxu0 %v670
    %988 = vmatprep.subr.bf16.mxu0 %v667
    %989 = vmatpush2.bf16.msra.mxu0 %v666
    %990 = vmatprep.subr.bf16.mxu0 %v663
    %991 = vmatpush2.bf16.msra.mxu0 %v662
    %992 = vmatprep.subr.bf16.mxu0 %v659
    %993 = vmatpush2.bf16.msra.mxu0 %v658
    %994 = vmatprep.subr.bf16.mxu0 %v655
    %995 = vmatpush2.bf16.msra.mxu0 %v654
    %996 = vmatprep.subr.bf16.mxu0 %v651
    %997 = vmatpush2.bf16.msra.mxu0 %v650
    %998 = vmatprep.subr.bf16.mxu0 %v647
    %999 = vmatpush2.bf16.msra.mxu0 %v646
    %1000 = vmatprep.subr.bf16.mxu0 %v643
    %1001 = vmatpush2.bf16.msra.mxu0 %v642
    %1002 = vmatprep.mubr.bf16.mxu0 %v209
    %1003 = vmatmul.mubr.bf16.gmra.mxu0 %v208
    %v1004 = vpop.f32.mrf.mxu0
    %v1005 = vadd.f32 0.0, %v1004
    %v1006 = vpop.f32.mrf.mxu0
    %v1007 = vadd.f32 0.0, %v1006
    %v1008 = vpop.f32.mrf.mxu0
    %v1009 = vadd.f32 0.0, %v1008
    %v1010 = vpop.f32.mrf.mxu0
    %v1011 = vadd.f32 0.0, %v1010
    %1012 = vmatprep.mubr.bf16.mxu0 %v213
    %1013 = vmatmul.mubr.bf16.gmra.mxu0 %v212
    %v1014 = vpop.f32.mrf.mxu0
    %v1015 = vadd.f32 0.0, %v1014
    %v1016 = vpop.f32.mrf.mxu0
    %v1017 = vadd.f32 0.0, %v1016
    %v1018 = vpop.f32.mrf.mxu0
    %v1019 = vadd.f32 0.0, %v1018
    %v1020 = vpop.f32.mrf.mxu0
    %v1021 = vadd.f32 0.0, %v1020
    %1022 = vdwg.mxu0
    %1023 = vmatprep.subr.bf16.mxu0 %v703
    %1024 = vmatpush1.bf16.msra.mxu0 %v702
    %1025 = vmatprep.subr.bf16.mxu0 %v699
    %1026 = vmatpush1.bf16.msra.mxu0 %v698
    %1027 = vmatprep.subr.bf16.mxu0 %v695
    %1028 = vmatpush1.bf16.msra.mxu0 %v694
    %1029 = vmatprep.subr.bf16.mxu0 %v691
    %1030 = vmatpush1.bf16.msra.mxu0 %v690
    %1031 = vmatprep.subr.bf16.mxu0 %v687
    %1032 = vmatpush1.bf16.msra.mxu0 %v686
    %1033 = vmatprep.subr.bf16.mxu0 %v683
    %1034 = vmatpush1.bf16.msra.mxu0 %v682
    %1035 = vmatprep.subr.bf16.mxu0 %v679
    %1036 = vmatpush1.bf16.msra.mxu0 %v678
    %1037 = vmatprep.subr.bf16.mxu0 %v675
    %1038 = vmatpush1.bf16.msra.mxu0 %v674
    %1039 = vmatprep.subr.bf16.mxu0 %v735
    %1040 = vmatpush2.bf16.msra.mxu0 %v734
    %1041 = vmatprep.subr.bf16.mxu0 %v731
    %1042 = vmatpush2.bf16.msra.mxu0 %v730
    %1043 = vmatprep.subr.bf16.mxu0 %v727
    %1044 = vmatpush2.bf16.msra.mxu0 %v726
    %1045 = vmatprep.subr.bf16.mxu0 %v723
    %1046 = vmatpush2.bf16.msra.mxu0 %v722
    %1047 = vmatprep.subr.bf16.mxu0 %v719
    %1048 = vmatpush2.bf16.msra.mxu0 %v718
    %1049 = vmatprep.subr.bf16.mxu0 %v715
    %1050 = vmatpush2.bf16.msra.mxu0 %v714
    %1051 = vmatprep.subr.bf16.mxu0 %v711
    %1052 = vmatpush2.bf16.msra.mxu0 %v710
    %1053 = vmatprep.subr.bf16.mxu0 %v707
    %1054 = vmatpush2.bf16.msra.mxu0 %v706
    %1055 = vmatprep.mubr.bf16.mxu0 %v211
    %1056 = vmatmul.mubr.bf16.gmra.mxu0 %v210
    %v1057 = vpop.f32.mrf.mxu0
    %v1058 = vadd.f32 %v1005, %v1057
    %v1059 = vpop.f32.mrf.mxu0
    %v1060 = vadd.f32 %v1007, %v1059
    %v1061 = vpop.f32.mrf.mxu0
    %v1062 = vadd.f32 %v1009, %v1061
    %v1063 = vpop.f32.mrf.mxu0
    %v1064 = vadd.f32 %v1011, %v1063
    %1065 = vmatprep.mubr.bf16.mxu0 %v215
    %1066 = vmatmul.mubr.bf16.gmra.mxu0 %v214
    %v1067 = vpop.f32.mrf.mxu0
    %v1068 = vadd.f32 %v1015, %v1067
    %v1069 = vpop.f32.mrf.mxu0
    %v1070 = vadd.f32 %v1017, %v1069
    %v1071 = vpop.f32.mrf.mxu0
    %v1072 = vadd.f32 %v1019, %v1071
    %v1073 = vpop.f32.mrf.mxu0
    %v1074 = vadd.f32 %v1021, %v1073
    %1075 = vdwg.mxu0
    %v1076 = vadd.f32 %v40, %v952
    %v1077 = vadd.f32 %v41, %v954
    %v1078 = vadd.f32 %v42, %v1058
    %v1079 = vadd.f32 %v43, %v1060
    %v1080 = vadd.f32 %v44, %v956
    %v1081 = vadd.f32 %v45, %v958
    %v1082 = vadd.f32 %v46, %v1062
    %v1083 = vadd.f32 %v47, %v1064
    %v1084 = vadd.f32 %v48, %v962
    %v1085 = vadd.f32 %v49, %v964
    %v1086 = vadd.f32 %v50, %v1068
    %v1087 = vadd.f32 %v51, %v1070
    %v1088 = vadd.f32 %v52, %v966
    %v1089 = vadd.f32 %v53, %v968
    %v1090 = vadd.f32 %v54, %v1072
    %v1091 = vadd.f32 %v55, %v1074
    %1092 = vst [vmem:[#allocation2] sm:$0xff] %v1076
    %1093 = vst [vmem:[#allocation2 + $0x8] sm:$0xff] %v1077
    %1094 = vst [vmem:[#allocation2 + $0x10] sm:$0xff] %v1078
    %1095 = vst [vmem:[#allocation2 + $0x18] sm:$0xff] %v1079
    %1096 = vst [vmem:[#allocation2 + $0x20] sm:$0xff] %v1080
    %1097 = vst [vmem:[#allocation2 + $0x28] sm:$0xff] %v1081
    %1098 = vst [vmem:[#allocation2 + $0x30] sm:$0xff] %v1082
    %1099 = vst [vmem:[#allocation2 + $0x38] sm:$0xff] %v1083
    %1100 = vst [vmem:[#allocation2 + $0x40] sm:$0xff] %v1084
    %1101 = vst [vmem:[#allocation2 + $0x48] sm:$0xff] %v1085
    %1102 = vst [vmem:[#allocation2 + $0x50] sm:$0xff] %v1086
    %1103 = vst [vmem:[#allocation2 + $0x58] sm:$0xff] %v1087
    %1104 = vst [vmem:[#allocation2 + $0x60] sm:$0xff] %v1088
    %1105 = vst [vmem:[#allocation2 + $0x68] sm:$0xff] %v1089
    %1106 = vst [vmem:[#allocation2 + $0x70] sm:$0xff] %v1090
    %1107 = vst [vmem:[#allocation2 + $0x78] sm:$0xff] %v1091
    // Predicated region
    $region14: #{multi_head_attention.5} parent=1 // pred_check
      %p1108 = pneg %p12
    $region15: #{multi_head_attention.5} parent=1 // pred_check_branch
      %1110 = sbr.rel (%p1108) target = $region17
    $region16: #{multi_head_attention.5} parent=1 // pred_region
      %v1111 = vld [vmem:[#allocation2] sm:$0xff]
      %v1112 = vld [vmem:[#allocation2 + $0x8] sm:$0xff]
      %v1113 = vld [vmem:[#allocation2 + $0x10] sm:$0xff]
      %v1114 = vld [vmem:[#allocation2 + $0x18] sm:$0xff]
      %v1115 = vld [vmem:[#allocation2 + $0x20] sm:$0xff]
      %v1116 = vld [vmem:[#allocation2 + $0x28] sm:$0xff]
      %v1117 = vld [vmem:[#allocation2 + $0x30] sm:$0xff]
      %v1118 = vld [vmem:[#allocation2 + $0x38] sm:$0xff]
      %v1119 = vld [vmem:[#allocation2 + $0x40] sm:$0xff]
      %v1120 = vld [vmem:[#allocation2 + $0x48] sm:$0xff]
      %v1121 = vld [vmem:[#allocation2 + $0x50] sm:$0xff]
      %v1122 = vld [vmem:[#allocation2 + $0x58] sm:$0xff]
      %v1123 = vld [vmem:[#allocation2 + $0x60] sm:$0xff]
      %v1124 = vld [vmem:[#allocation2 + $0x68] sm:$0xff]
      %v1125 = vld [vmem:[#allocation2 + $0x70] sm:$0xff]
      %v1126 = vld [vmem:[#allocation2 + $0x78] sm:$0xff]
      %1127 = vst [vmem:[#allocation3] sm:$0xff] %v1111
      %1128 = vst [vmem:[#allocation3 + $0x8] sm:$0xff] %v1112
      %1129 = vst [vmem:[#allocation3 + $0x10] sm:$0xff] %v1113
      %1130 = vst [vmem:[#allocation3 + $0x18] sm:$0xff] %v1114
      %1131 = vst [vmem:[#allocation3 + $0x20] sm:$0xff] %v1115
      %1132 = vst [vmem:[#allocation3 + $0x28] sm:$0xff] %v1116
      %1133 = vst [vmem:[#allocation3 + $0x30] sm:$0xff] %v1117
      %1134 = vst [vmem:[#allocation3 + $0x38] sm:$0xff] %v1118
      %1135 = vst [vmem:[#allocation3 + $0x40] sm:$0xff] %v1119
      %1136 = vst [vmem:[#allocation3 + $0x48] sm:$0xff] %v1120
      %1137 = vst [vmem:[#allocation3 + $0x50] sm:$0xff] %v1121
      %1138 = vst [vmem:[#allocation3 + $0x58] sm:$0xff] %v1122
      %1139 = vst [vmem:[#allocation3 + $0x60] sm:$0xff] %v1123
      %1140 = vst [vmem:[#allocation3 + $0x68] sm:$0xff] %v1124
      %1141 = vst [vmem:[#allocation3 + $0x70] sm:$0xff] %v1125
      %1142 = vst [vmem:[#allocation3 + $0x78] sm:$0xff] %v1126
    $region17: #{multi_head_attention.5} parent=1 // pred_fallthru
      _
    // Predicated region
    $region18: #{multi_head_attention.5} parent=1 // pred_check
      _
    $region19: #{multi_head_attention.5} parent=1 // pred_check_branch
      %1144 = sbr.rel (0) target = $region21
    $region20: #{multi_head_attention.5} parent=1 // pred_region
      %s1146 = ssub.s32 2048, 2048
      %1147 = vsyncadd [#allocation4], %s1146
      %s1148 = sshll.u32 [#allocation3], 4
      %s1149 = int_to_ptr.vmem [resolvable:$true] %s1148
      %1154 = dma.vmem_to_hbm [thread:$0]  %s1149, 2048, %s2, [#allocation4], 512, 512, 32
    $region21: #{multi_head_attention.5} parent=1 // pred_fallthru
      _
    // Predicated region
    $region22: #{multi_head_attention.5} parent=1 // pred_check
      _
    $region23: #{multi_head_attention.5} parent=1 // pred_check_branch
      %1156 = sbr.rel (0) target = $region25
    $region24: #{multi_head_attention.5} parent=1 // pred_region
      %1157 = dma.done [#allocation4], 2048
    $region25: #{multi_head_attention.5} parent=1 // pred_fallthru
      _
    %1158 = vsyncpa [#allocation4], 1

</llo_original>
